<compile_context>
chip_gen: v6e
topology: v6e:2x2x1
jax: 0.10.0
libtpu: 0.0.40
codegen_flags: <defaults>
</compile_context>

<pallas_src>
import functools

import jax
import jax.numpy as jnp
from jax import lax
from jax.experimental import pallas as pl
from jax.experimental.pallas import tpu as pltpu

_K_ALIGN = 16          # bf16 MXU contraction (sublane) tile


def _round_up(x, m):
    return (x + m - 1) // m * m


# ------------------------------ fused kernel --------------------------------

def _mv2_fused_kernel(x_ref, w1_ref, s1_ref, b1_ref, wdw_ref, s2_ref, b2_ref,
                      w2_ref, s3_ref, b3_ref, o_ref, *,
                      stride, th_out, w_out, h_in, w_in, use_res):
    """One (batch, row-tile) step of the fused inverted-residual block."""
    t = pl.program_id(1)
    rows_in = (th_out - 1) * stride + 3            # input rows incl. 3x3 halo
    r0 = pl.multiple_of(t * (th_out * stride), th_out * stride)

    wp2 = x_ref.shape[2]                           # padded width (mult. of 8)
    cp = x_ref.shape[3]                            # cin padded to _K_ALIGN
    hidp = w1_ref.shape[1]                         # hidden padded to _K_ALIGN
    cout = w2_ref.shape[1]                         # true output channels

    # ---- stage 1: 1x1 expand (bf16 MXU, f32 accum) + BN + SiLU --------------
    xin = x_ref[0, pl.ds(r0, rows_in)]             # (rows_in, wp2, cp) in VMEM
    hid = jnp.dot(xin.reshape(rows_in * wp2, cp).astype(jnp.bfloat16),
                  w1_ref[...],                     # bf16 weights from HBM
                  preferred_element_type=jnp.float32)
    hid = hid * s1_ref[...] + b1_ref[...]
    hid = hid * jax.nn.sigmoid(hid)                # SiLU (f32; safe on v5e)
    hid = hid.reshape(rows_in, wp2, hidp)

    # In-kernel conv zero padding: the reference zero-pads AFTER expand+BN+SiLU,
    # so the halo ring (and width-alignment columns) that picked up the BN bias
    # must be zeroed.  Mask is (rows_in, wp2, 1) and broadcasts over the
    # channel lanes -- no hid-sized int32 temporaries.
    rows = r0 + lax.broadcasted_iota(jnp.int32, (rows_in, wp2, 1), 0)
    cols = lax.broadcasted_iota(jnp.int32, (rows_in, wp2, 1), 1)
    valid = (rows >= 1) & (rows <= h_in) & (cols >= 1) & (cols <= w_in)
    hid = jnp.where(valid, hid, 0.0)

    # ---- stage 2: 3x3 depthwise + BN + SiLU (VPU, all in VMEM) --------------
    wd = wdw_ref[...]                              # (9, hidp) f32, loaded once
    acc = None
    if stride == 1:
        for kh in range(3):
            hr = hid[kh:kh + th_out]               # row offset: outer-dim addressing
            for kw in range(3):
                term = hr[:, kw:kw + w_out, :] * wd[3 * kh + kw]
                acc = term if acc is None else acc + term
    else:  # stride == 2
        # De-interleave even/odd columns once (single sublane regather) so
        # every tap is a contiguous / outer-dim slice, not a strided slice.
        hsp = hid.reshape(rows_in, wp2 // 2, 2, hidp)
        hev, hod = hsp[:, :, 0, :], hsp[:, :, 1, :]
        for kh in range(3):
            ev = hev[kh:kh + 2 * th_out - 1:2]
            od = hod[kh:kh + 2 * th_out - 1:2]
            for tap, src in ((0, ev[:, 0:w_out, :]),
                             (1, od[:, 0:w_out, :]),
                             (2, ev[:, 1:1 + w_out, :])):
                term = src * wd[3 * kh + tap]
                acc = term if acc is None else acc + term
    y = acc * s2_ref[0] + b2_ref[0]
    y = y * jax.nn.sigmoid(y)

    # ---- stage 3: 1x1 project (bf16 MXU) + BN (+ residual) ------------------
    out = jnp.dot(y.reshape(th_out * w_out, hidp).astype(jnp.bfloat16),
                  w2_ref[...],                     # bf16, true cout columns
                  preferred_element_type=jnp.float32)
    out = out * s3_ref[...] + b3_ref[...]
    if use_res:
        # Residual straight from the VMEM-resident input block (stride==1,
        # so r0 is also the output row start) -- no extra HBM read.
        res = x_ref[0, pl.ds(r0 + 1, th_out)][:, 1:w_in + 1, :cout]
        out = out + res.reshape(th_out * w_out, cout)
    o_ref[0] = out.reshape(th_out, w_out, cout).astype(o_ref.dtype)


# ------------------------------ wrapper --------------------------------------

def _zpad_to(a, axis, size):
    pad = [(0, 0)] * a.ndim
    pad[axis] = (0, size - a.shape[axis])
    return jnp.pad(a, pad)


def _vmem_limit_bytes():
    """Generation-aware VMEM limit: ~96 MiB on v5e/v6e, ~48 MiB on v7x."""
    try:
        cap = int(pltpu.get_tpu_info().vmem_capacity_bytes)
    except Exception:
        cap = 64 * 1024 * 1024                     # conservative (v7x-sized)
    return max(32 * 1024 * 1024, min(cap * 3 // 4, 100 * 1024 * 1024))


def _pick_row_tile(h_out, w_out, wp2, hidp, stride, n_batch, vmem_limit):
    """Largest row tile whose hidden tile + accumulator fit the VMEM budget."""
    budget = vmem_limit // 3
    per_row = (stride * wp2 + w_out) * hidp * 6    # hid + acc + temporaries
    cap = max(1, min(64, budget // per_row, h_out))
    if h_out <= cap:
        th_out = h_out                             # whole map (7x7/14x14 stages)
    else:
        th_out = max(d for d in range(1, cap + 1) if h_out % d == 0)
        if th_out < min(8, cap):
            # No useful divisor (e.g. prime h_out): ceil-div grid; the halo
            # mask + Pallas edge-block clamping handle the ragged last tile.
            th_out = cap
    # Keep both v7x TensorCores busy: >= 2 parallel grid steps overall.
    if n_batch * pl.cdiv(h_out, th_out) < 2 and h_out >= 2:
        th_out = max(d for d in range(1, h_out)
                     if h_out % d == 0 and d <= (h_out + 1) // 2)
    return th_out


@functools.partial(jax.jit, static_argnames=("stride",))
def mv2_block(x_nchw, params, *, stride=1):
    """MV2Block forward.  x_nchw: (N, Cin, H, W) -> (N, Cout, Ho, Wo)."""
    n, cin, h, w = x_nchw.shape
    hidden = params["w1"].shape[1]
    cout = params["w2"].shape[1]

    cp = _round_up(cin, _K_ALIGN)                  # bf16 K-tile, NOT 128 lanes
    hidp = _round_up(hidden, _K_ALIGN)
    wp2 = _round_up(w + 2, 8)                      # 8-aligned width -> free reshapes

    h_out = (h + 2 - 3) // stride + 1
    w_out = (w + 2 - 3) // stride + 1
    use_res = (stride == 1) and (cin == cout)

    vmem_limit = _vmem_limit_bytes()
    th_out = _pick_row_tile(h_out, w_out, wp2, hidp, stride, n, vmem_limit)
    ht = pl.cdiv(h_out, th_out)
    rows_in = (th_out - 1) * stride + 3
    hp = (ht - 1) * th_out * stride + rows_in      # rows the last tile reads

    # NCHW -> NHWC + 3x3 halo + alignment padding in one op on the
    # true-channel tensor.  TODO(synk): an NCHW-native (channel-major) kernel
    # would drop this and the output transpose entirely.
    x = jnp.transpose(x_nchw, (0, 2, 3, 1))
    xp = jnp.pad(x, ((0, 0), (1, hp - h - 1), (1, wp2 - w - 1), (0, cp - cin)))

    f32, bf16 = jnp.float32, jnp.bfloat16
    # Zero-padded weights / folded-BN affines: padded channels stay exactly 0
    # through every stage.  Matmul weights are stored bf16 (halves weight DMA).
    w1 = _zpad_to(_zpad_to(params["w1"], 0, cp), 1, hidp).astype(bf16)
    wdw = _zpad_to(params["w_dw"].reshape(9, hidden), 1, hidp).astype(f32)
    w2 = _zpad_to(params["w2"], 0, hidp).astype(bf16)        # out dim = true cout
    s1 = _zpad_to(params["s1"].reshape(1, -1), 1, hidp).astype(f32)
    b1 = _zpad_to(params["b1"].reshape(1, -1), 1, hidp).astype(f32)
    s2 = _zpad_to(params["s2"].reshape(1, -1), 1, hidp).astype(f32)
    b2 = _zpad_to(params["b2"].reshape(1, -1), 1, hidp).astype(f32)
    s3 = params["s3"].reshape(1, cout).astype(f32)
    b3 = params["b3"].reshape(1, cout).astype(f32)

    kernel = functools.partial(
        _mv2_fused_kernel, stride=stride, th_out=th_out, w_out=w_out,
        h_in=h, w_in=w, use_res=use_res)

    full = lambda b, t: (0, 0)
    # TODO(synk): mark the constant-index weight/BN specs pipeline_mode=
    # pl.Buffered(1) once available here (saves ~2x their VMEM on v7x).
    out_nhwc = pl.pallas_call(
        kernel,
        out_shape=jax.ShapeDtypeStruct((n, h_out, w_out, cout), x_nchw.dtype),
        grid_spec=pltpu.PrefetchScalarGridSpec(
            num_scalar_prefetch=0,
            grid=(n, ht),
            in_specs=[
                pl.BlockSpec((1, hp, wp2, cp), lambda b, t: (b, 0, 0, 0)),
                pl.BlockSpec((cp, hidp), full),
                pl.BlockSpec((1, hidp), full),
                pl.BlockSpec((1, hidp), full),
                pl.BlockSpec((9, hidp), full),
                pl.BlockSpec((1, hidp), full),
                pl.BlockSpec((1, hidp), full),
                pl.BlockSpec((hidp, cout), full),
                pl.BlockSpec((1, cout), full),
                pl.BlockSpec((1, cout), full),
            ],
            out_specs=pl.BlockSpec((1, th_out, w_out, cout),
                                   lambda b, t: (b, t, 0, 0)),
        ),
        compiler_params=pltpu.CompilerParams(
            dimension_semantics=("parallel", "parallel"),
            vmem_limit_bytes=vmem_limit),
    )(xp, w1, s1, b1, wdw, s2, b2, w2, s3, b3)

    return jnp.transpose(out_nhwc, (0, 3, 1, 2))   # NHWC -> NCHW (true cout)


# ------------------------------ parameter setup ------------------------------

def _folded_bn(c, base):
    gamma = 1.0 + 0.05 * (jnp.arange(c, dtype=jnp.float32) + base)
    beta = 0.01 * (jnp.arange(c, dtype=jnp.float32) - base)
    mean = 0.02 * jnp.arange(c, dtype=jnp.float32)
    var = 1.0 + 0.03 * jnp.arange(c, dtype=jnp.float32)
    eps = 1e-5
    scale = gamma * lax.rsqrt(var + eps)
    bias = beta - mean * scale
    return scale, bias


def make_params(inp, oup, expansion, key):
    hidden = int(inp * expansion)
    k1, k2, k3 = jax.random.split(key, 3)
    w1 = jax.random.normal(k1, (inp, hidden), jnp.float32) * 0.2
    w_dw = jax.random.normal(k2, (3, 3, hidden), jnp.float32) * 0.2
    w2 = jax.random.normal(k3, (hidden, oup), jnp.float32) * 0.2
    s1, b1 = _folded_bn(hidden, 0.0)
    s2, b2 = _folded_bn(hidden, 1.0)
    s3, b3 = _folded_bn(oup, 2.0)
    return dict(w1=w1, w_dw=w_dw, w2=w2,
                s1=s1, b1=b1, s2=s2, b2=b2, s3=s3, b3=b3)


# ------------------------------ pure-JAX reference ---------------------------

def mv2_block_ref(x_nchw, params, *, stride=1):
    x = jnp.transpose(x_nchw, (0, 2, 3, 1)).astype(jnp.float32)
    n, h, wdim, cin = x.shape
    cout = params["w2"].shape[1]

    y = jnp.einsum("nhwc,cd->nhwd", x, params["w1"])
    y = y * params["s1"] + params["b1"]
    y = y * jax.nn.sigmoid(y)

    yp = jnp.pad(y, ((0, 0), (1, 1), (1, 1), (0, 0)))
    h_out = (h + 2 - 3) // stride + 1
    w_out = (wdim + 2 - 3) // stride + 1
    acc = jnp.zeros((n, h_out, w_out, y.shape[-1]), jnp.float32)
    for kh in range(3):
        for kw in range(3):
            acc = acc + yp[:, kh:kh + stride * h_out:stride,
                           kw:kw + stride * w_out:stride, :] * params["w_dw"][kh, kw]
    y = acc * params["s2"] + params["b2"]
    y = y * jax.nn.sigmoid(y)

    out = jnp.einsum("nhwc,cd->nhwd", y, params["w2"])
    out = out * params["s3"] + params["b3"]
    if stride == 1 and cin == cout:
        out = out + x
    return jnp.transpose(out, (0, 3, 1, 2))


# ----------------------------------- main ------------------------------------

if __name__ == "__main__":
    key = jax.random.PRNGKey(0)
    kx, kp, kp2 = jax.random.split(key, 3)

    # Tolerance relaxed vs. the f32 reference because the kernel feeds the MXU
    # bf16 operands (per perf feedback) -- intentional precision change.
    RTOL = ATOL = 2e-2

    # Case 1: residual path active (stride=1, inp == oup), expansion=4.
    inp, oup, stride, expansion = 4, 4, 1, 4
    x = jax.random.normal(kx, (2, inp, 16, 16), jnp.float32)
    params = make_params(inp, oup, expansion, kp)
    out = jax.block_until_ready(mv2_block(x, params, stride=stride))
    ref = jax.block_until_ready(mv2_block_ref(x, params, stride=stride))
    assert out.shape == ref.shape
    assert jnp.allclose(out, ref, rtol=RTOL, atol=ATOL), \
        float(jnp.max(jnp.abs(out - ref)))

    # Case 2: no residual (inp != oup), same fused kernel path.
    params2 = make_params(inp, 8, expansion, kp2)
    out2 = jax.block_until_ready(mv2_block(x, params2, stride=1))
    ref2 = jax.block_until_ready(mv2_block_ref(x, params2, stride=1))
    assert out2.shape == ref2.shape
    assert jnp.allclose(out2, ref2, rtol=RTOL, atol=ATOL), \
        float(jnp.max(jnp.abs(out2 - ref2)))

    print("KERNEL_OK")
</pallas_src>

<mosaic_0001>
module attributes {stable_mosaic.version = 11 : i64} {
  func.func @_mv2_fused_kernel(%arg0: i32, %arg1: i32, %arg2: memref<1x18x24x16xf32, #tpu.memory_space<vmem>>, %arg3: memref<16x16xbf16, #tpu.memory_space<vmem>>, %arg4: memref<1x16xf32, #tpu.memory_space<vmem>>, %arg5: memref<1x16xf32, #tpu.memory_space<vmem>>, %arg6: memref<9x16xf32, #tpu.memory_space<vmem>>, %arg7: memref<1x16xf32, #tpu.memory_space<vmem>>, %arg8: memref<1x16xf32, #tpu.memory_space<vmem>>, %arg9: memref<16x4xbf16, #tpu.memory_space<vmem>>, %arg10: memref<1x4xf32, #tpu.memory_space<vmem>>, %arg11: memref<1x4xf32, #tpu.memory_space<vmem>>, %arg12: memref<1x16x16x4xf32, #tpu.memory_space<vmem>>) attributes {dimension_semantics = [#tpu.dimension_semantics<parallel>, #tpu.dimension_semantics<parallel>], iteration_bounds = array<i64: 2, 1>, scalar_prefetch = 0 : i64, scratch_operands = 0 : i64, tpu.core_type = #tpu.core_type<tc>, window_params = [{transform_indices = @transform_0, window_bounds = array<i64: 1, 18, 24, 16>}, {pipeline_mode = #tpu.pipeline_mode<synchronous>, transform_indices = @transform_1, window_bounds = array<i64: 16, 16>}, {pipeline_mode = #tpu.pipeline_mode<synchronous>, transform_indices = @transform_2, window_bounds = array<i64: 1, 16>}, {pipeline_mode = #tpu.pipeline_mode<synchronous>, transform_indices = @transform_3, window_bounds = array<i64: 1, 16>}, {pipeline_mode = #tpu.pipeline_mode<synchronous>, transform_indices = @transform_4, window_bounds = array<i64: 9, 16>}, {pipeline_mode = #tpu.pipeline_mode<synchronous>, transform_indices = @transform_5, window_bounds = array<i64: 1, 16>}, {pipeline_mode = #tpu.pipeline_mode<synchronous>, transform_indices = @transform_6, window_bounds = array<i64: 1, 16>}, {pipeline_mode = #tpu.pipeline_mode<synchronous>, transform_indices = @transform_7, window_bounds = array<i64: 16, 4>}, {pipeline_mode = #tpu.pipeline_mode<synchronous>, transform_indices = @transform_8, window_bounds = array<i64: 1, 4>}, {pipeline_mode = #tpu.pipeline_mode<synchronous>, transform_indices = @transform_9, window_bounds = array<i64: 1, 4>}, {transform_indices = @transform_10, window_bounds = array<i64: 1, 16, 16, 4>}]} {
    %c16_i32 = arith.constant 16 : i32
    %0 = arith.muli %arg1, %c16_i32 : i32
    %1 = tpu.assume_multiple %0, 16 : i32
    %c0 = arith.constant 0 : index
    %2 = arith.index_cast %1 : i32 to index
    %c0_0 = arith.constant 0 : index
    %c0_1 = arith.constant 0 : index
    %3 = vector.load %arg2[%c0, %2, %c0_0, %c0_1] : memref<1x18x24x16xf32, #tpu.memory_space<vmem>>, vector<1x18x24x16xf32>
    %4 = vector.shape_cast %3 : vector<1x18x24x16xf32> to vector<18x24x16xf32>
    %5 = vector.shape_cast %4 : vector<18x24x16xf32> to vector<432x16xf32>
    %6 = arith.truncf %5 : vector<432x16xf32> to vector<432x16xbf16>
    %c0_2 = arith.constant 0 : index
    %c0_3 = arith.constant 0 : index
    %7 = vector.load %arg3[%c0_2, %c0_3] : memref<16x16xbf16, #tpu.memory_space<vmem>>, vector<16x16xbf16>
    %cst = arith.constant dense<0.000000e+00> : vector<432x16xf32>
    %8 = tpu.matmul %6, %7, %cst {dimension_numbers = #tpu.dot_dimension_numbers<[1], [0], [0], [1], [0, 0, 1, 1], [], []>} : vector<432x16xbf16>, vector<16x16xbf16>, vector<432x16xf32> -> vector<432x16xf32>
    %c0_4 = arith.constant 0 : index
    %c0_5 = arith.constant 0 : index
    %9 = vector.load %arg4[%c0_4, %c0_5] : memref<1x16xf32, #tpu.memory_space<vmem>>, vector<1x16xf32>
    %10 = vector.broadcast %9 : vector<1x16xf32> to vector<432x16xf32>
    %11 = arith.mulf %8, %10 : vector<432x16xf32>
    %c0_6 = arith.constant 0 : index
    %c0_7 = arith.constant 0 : index
    %12 = vector.load %arg5[%c0_6, %c0_7] : memref<1x16xf32, #tpu.memory_space<vmem>>, vector<1x16xf32>
    %13 = vector.broadcast %12 : vector<1x16xf32> to vector<432x16xf32>
    %14 = arith.addf %11, %13 : vector<432x16xf32>
    %15 = arith.negf %14 : vector<432x16xf32>
    %16 = math.exp %15 : vector<432x16xf32>
    %cst_8 = arith.constant 1.000000e+00 : f32
    %17 = vector.broadcast %cst_8 : f32 to vector<432x16xf32>
    %18 = arith.addf %17, %16 : vector<432x16xf32>
    %19 = arith.divf %17, %18 : vector<432x16xf32>
    %20 = arith.mulf %14, %19 : vector<432x16xf32>
    %21 = vector.shape_cast %20 : vector<432x16xf32> to vector<18x24x16xf32>
    %22 = tpu.iota {dimensions = array<i32: 0>} : vector<18x24x1xi32>
    %23 = vector.broadcast %1 : i32 to vector<18x24x1xi32>
    %24 = arith.addi %23, %22 : vector<18x24x1xi32>
    %25 = tpu.iota {dimensions = array<i32: 1>} : vector<18x24x1xi32>
    %c1_i32 = arith.constant 1 : i32
    %26 = vector.broadcast %c1_i32 : i32 to vector<18x24x1xi32>
    %27 = arith.cmpi sge, %24, %26 : vector<18x24x1xi32>
    %c16_i32_9 = arith.constant 16 : i32
    %28 = vector.broadcast %c16_i32_9 : i32 to vector<18x24x1xi32>
    %29 = arith.cmpi sle, %24, %28 : vector<18x24x1xi32>
    %30 = arith.andi %27, %29 : vector<18x24x1xi1>
    %c1_i32_10 = arith.constant 1 : i32
    %31 = vector.broadcast %c1_i32_10 : i32 to vector<18x24x1xi32>
    %32 = arith.cmpi sge, %25, %31 : vector<18x24x1xi32>
    %33 = arith.andi %30, %32 : vector<18x24x1xi1>
    %c16_i32_11 = arith.constant 16 : i32
    %34 = vector.broadcast %c16_i32_11 : i32 to vector<18x24x1xi32>
    %35 = arith.cmpi sle, %25, %34 : vector<18x24x1xi32>
    %36 = arith.andi %33, %35 : vector<18x24x1xi1>
    %cst_12 = arith.constant 0.000000e+00 : f32
    %37 = vector.shape_cast %36 : vector<18x24x1xi1> to vector<18x24x1xi1>
    %38 = vector.broadcast %37 : vector<18x24x1xi1> to vector<18x24x16xi1>
    %39 = vector.broadcast %cst_12 : f32 to vector<18x24x16xf32>
    %40 = arith.select %38, %21, %39 : vector<18x24x16xi1>, vector<18x24x16xf32>
    %c0_13 = arith.constant 0 : index
    %c0_14 = arith.constant 0 : index
    %41 = vector.load %arg6[%c0_13, %c0_14] : memref<9x16xf32, #tpu.memory_space<vmem>>, vector<9x16xf32>
    %42 = vector.extract_strided_slice %40 {offsets = [0, 0, 0], sizes = [16, 24, 16], strides = [1, 1, 1]} : vector<18x24x16xf32> to vector<16x24x16xf32>
    %43 = vector.extract_strided_slice %42 {offsets = [0, 0, 0], sizes = [16, 16, 16], strides = [1, 1, 1]} : vector<16x24x16xf32> to vector<16x16x16xf32>
    %44 = vector.extract_strided_slice %41 {offsets = [0, 0], sizes = [1, 16], strides = [1, 1]} : vector<9x16xf32> to vector<1x16xf32>
    %45 = vector.shape_cast %44 : vector<1x16xf32> to vector<16xf32>
    %46 = vector.shape_cast %45 : vector<16xf32> to vector<1x1x16xf32>
    %47 = vector.broadcast %46 : vector<1x1x16xf32> to vector<16x16x16xf32>
    %48 = arith.mulf %43, %47 : vector<16x16x16xf32>
    %49 = vector.extract_strided_slice %42 {offsets = [0, 1, 0], sizes = [16, 16, 16], strides = [1, 1, 1]} : vector<16x24x16xf32> to vector<16x16x16xf32>
    %50 = vector.extract_strided_slice %41 {offsets = [1, 0], sizes = [1, 16], strides = [1, 1]} : vector<9x16xf32> to vector<1x16xf32>
    %51 = vector.shape_cast %50 : vector<1x16xf32> to vector<16xf32>
    %52 = vector.shape_cast %51 : vector<16xf32> to vector<1x1x16xf32>
    %53 = vector.broadcast %52 : vector<1x1x16xf32> to vector<16x16x16xf32>
    %54 = arith.mulf %49, %53 : vector<16x16x16xf32>
    %55 = arith.addf %48, %54 : vector<16x16x16xf32>
    %56 = vector.extract_strided_slice %42 {offsets = [0, 2, 0], sizes = [16, 16, 16], strides = [1, 1, 1]} : vector<16x24x16xf32> to vector<16x16x16xf32>
    %57 = vector.extract_strided_slice %41 {offsets = [2, 0], sizes = [1, 16], strides = [1, 1]} : vector<9x16xf32> to vector<1x16xf32>
    %58 = vector.shape_cast %57 : vector<1x16xf32> to vector<16xf32>
    %59 = vector.shape_cast %58 : vector<16xf32> to vector<1x1x16xf32>
    %60 = vector.broadcast %59 : vector<1x1x16xf32> to vector<16x16x16xf32>
    %61 = arith.mulf %56, %60 : vector<16x16x16xf32>
    %62 = arith.addf %55, %61 : vector<16x16x16xf32>
    %63 = vector.extract_strided_slice %40 {offsets = [1, 0, 0], sizes = [16, 24, 16], strides = [1, 1, 1]} : vector<18x24x16xf32> to vector<16x24x16xf32>
    %64 = vector.extract_strided_slice %63 {offsets = [0, 0, 0], sizes = [16, 16, 16], strides = [1, 1, 1]} : vector<16x24x16xf32> to vector<16x16x16xf32>
    %65 = vector.extract_strided_slice %41 {offsets = [3, 0], sizes = [1, 16], strides = [1, 1]} : vector<9x16xf32> to vector<1x16xf32>
    %66 = vector.shape_cast %65 : vector<1x16xf32> to vector<16xf32>
    %67 = vector.shape_cast %66 : vector<16xf32> to vector<1x1x16xf32>
    %68 = vector.broadcast %67 : vector<1x1x16xf32> to vector<16x16x16xf32>
    %69 = arith.mulf %64, %68 : vector<16x16x16xf32>
    %70 = arith.addf %62, %69 : vector<16x16x16xf32>
    %71 = vector.extract_strided_slice %63 {offsets = [0, 1, 0], sizes = [16, 16, 16], strides = [1, 1, 1]} : vector<16x24x16xf32> to vector<16x16x16xf32>
    %72 = vector.extract_strided_slice %41 {offsets = [4, 0], sizes = [1, 16], strides = [1, 1]} : vector<9x16xf32> to vector<1x16xf32>
    %73 = vector.shape_cast %72 : vector<1x16xf32> to vector<16xf32>
    %74 = vector.shape_cast %73 : vector<16xf32> to vector<1x1x16xf32>
    %75 = vector.broadcast %74 : vector<1x1x16xf32> to vector<16x16x16xf32>
    %76 = arith.mulf %71, %75 : vector<16x16x16xf32>
    %77 = arith.addf %70, %76 : vector<16x16x16xf32>
    %78 = vector.extract_strided_slice %63 {offsets = [0, 2, 0], sizes = [16, 16, 16], strides = [1, 1, 1]} : vector<16x24x16xf32> to vector<16x16x16xf32>
    %79 = vector.extract_strided_slice %41 {offsets = [5, 0], sizes = [1, 16], strides = [1, 1]} : vector<9x16xf32> to vector<1x16xf32>
    %80 = vector.shape_cast %79 : vector<1x16xf32> to vector<16xf32>
    %81 = vector.shape_cast %80 : vector<16xf32> to vector<1x1x16xf32>
    %82 = vector.broadcast %81 : vector<1x1x16xf32> to vector<16x16x16xf32>
    %83 = arith.mulf %78, %82 : vector<16x16x16xf32>
    %84 = arith.addf %77, %83 : vector<16x16x16xf32>
    %85 = vector.extract_strided_slice %40 {offsets = [2, 0, 0], sizes = [16, 24, 16], strides = [1, 1, 1]} : vector<18x24x16xf32> to vector<16x24x16xf32>
    %86 = vector.extract_strided_slice %85 {offsets = [0, 0, 0], sizes = [16, 16, 16], strides = [1, 1, 1]} : vector<16x24x16xf32> to vector<16x16x16xf32>
    %87 = vector.extract_strided_slice %41 {offsets = [6, 0], sizes = [1, 16], strides = [1, 1]} : vector<9x16xf32> to vector<1x16xf32>
    %88 = vector.shape_cast %87 : vector<1x16xf32> to vector<16xf32>
    %89 = vector.shape_cast %88 : vector<16xf32> to vector<1x1x16xf32>
    %90 = vector.broadcast %89 : vector<1x1x16xf32> to vector<16x16x16xf32>
    %91 = arith.mulf %86, %90 : vector<16x16x16xf32>
    %92 = arith.addf %84, %91 : vector<16x16x16xf32>
    %93 = vector.extract_strided_slice %85 {offsets = [0, 1, 0], sizes = [16, 16, 16], strides = [1, 1, 1]} : vector<16x24x16xf32> to vector<16x16x16xf32>
    %94 = vector.extract_strided_slice %41 {offsets = [7, 0], sizes = [1, 16], strides = [1, 1]} : vector<9x16xf32> to vector<1x16xf32>
    %95 = vector.shape_cast %94 : vector<1x16xf32> to vector<16xf32>
    %96 = vector.shape_cast %95 : vector<16xf32> to vector<1x1x16xf32>
    %97 = vector.broadcast %96 : vector<1x1x16xf32> to vector<16x16x16xf32>
    %98 = arith.mulf %93, %97 : vector<16x16x16xf32>
    %99 = arith.addf %92, %98 : vector<16x16x16xf32>
    %100 = vector.extract_strided_slice %85 {offsets = [0, 2, 0], sizes = [16, 16, 16], strides = [1, 1, 1]} : vector<16x24x16xf32> to vector<16x16x16xf32>
    %101 = vector.extract_strided_slice %41 {offsets = [8, 0], sizes = [1, 16], strides = [1, 1]} : vector<9x16xf32> to vector<1x16xf32>
    %102 = vector.shape_cast %101 : vector<1x16xf32> to vector<16xf32>
    %103 = vector.shape_cast %102 : vector<16xf32> to vector<1x1x16xf32>
    %104 = vector.broadcast %103 : vector<1x1x16xf32> to vector<16x16x16xf32>
    %105 = arith.mulf %100, %104 : vector<16x16x16xf32>
    %106 = arith.addf %99, %105 : vector<16x16x16xf32>
    %c0_15 = arith.constant 0 : index
    %c0_16 = arith.constant 0 : index
    %107 = vector.load %arg7[%c0_15, %c0_16] : memref<1x16xf32, #tpu.memory_space<vmem>>, vector<1x16xf32>
    %108 = vector.shape_cast %107 : vector<1x16xf32> to vector<16xf32>
    %109 = vector.shape_cast %108 : vector<16xf32> to vector<1x1x16xf32>
    %110 = vector.broadcast %109 : vector<1x1x16xf32> to vector<16x16x16xf32>
    %111 = arith.mulf %106, %110 : vector<16x16x16xf32>
    %c0_17 = arith.constant 0 : index
    %c0_18 = arith.constant 0 : index
    %112 = vector.load %arg8[%c0_17, %c0_18] : memref<1x16xf32, #tpu.memory_space<vmem>>, vector<1x16xf32>
    %113 = vector.shape_cast %112 : vector<1x16xf32> to vector<16xf32>
    %114 = vector.shape_cast %113 : vector<16xf32> to vector<1x1x16xf32>
    %115 = vector.broadcast %114 : vector<1x1x16xf32> to vector<16x16x16xf32>
    %116 = arith.addf %111, %115 : vector<16x16x16xf32>
    %117 = arith.negf %116 : vector<16x16x16xf32>
    %118 = math.exp %117 : vector<16x16x16xf32>
    %cst_19 = arith.constant 1.000000e+00 : f32
    %119 = vector.broadcast %cst_19 : f32 to vector<16x16x16xf32>
    %120 = arith.addf %119, %118 : vector<16x16x16xf32>
    %121 = arith.divf %119, %120 : vector<16x16x16xf32>
    %122 = arith.mulf %116, %121 : vector<16x16x16xf32>
    %123 = vector.shape_cast %122 : vector<16x16x16xf32> to vector<256x16xf32>
    %124 = arith.truncf %123 : vector<256x16xf32> to vector<256x16xbf16>
    %c0_20 = arith.constant 0 : index
    %c0_21 = arith.constant 0 : index
    %125 = vector.load %arg9[%c0_20, %c0_21] : memref<16x4xbf16, #tpu.memory_space<vmem>>, vector<16x4xbf16>
    %cst_22 = arith.constant dense<0.000000e+00> : vector<256x4xf32>
    %126 = tpu.matmul %124, %125, %cst_22 {dimension_numbers = #tpu.dot_dimension_numbers<[1], [0], [0], [1], [0, 0, 1, 1], [], []>} : vector<256x16xbf16>, vector<16x4xbf16>, vector<256x4xf32> -> vector<256x4xf32>
    %c0_23 = arith.constant 0 : index
    %c0_24 = arith.constant 0 : index
    %127 = vector.load %arg10[%c0_23, %c0_24] : memref<1x4xf32, #tpu.memory_space<vmem>>, vector<1x4xf32>
    %128 = vector.broadcast %127 : vector<1x4xf32> to vector<256x4xf32>
    %129 = arith.mulf %126, %128 : vector<256x4xf32>
    %c0_25 = arith.constant 0 : index
    %c0_26 = arith.constant 0 : index
    %130 = vector.load %arg11[%c0_25, %c0_26] : memref<1x4xf32, #tpu.memory_space<vmem>>, vector<1x4xf32>
    %131 = vector.broadcast %130 : vector<1x4xf32> to vector<256x4xf32>
    %132 = arith.addf %129, %131 : vector<256x4xf32>
    %c1_i32_27 = arith.constant 1 : i32
    %133 = arith.addi %1, %c1_i32_27 : i32
    %c0_28 = arith.constant 0 : index
    %134 = arith.index_cast %133 : i32 to index
    %c0_29 = arith.constant 0 : index
    %c0_30 = arith.constant 0 : index
    %135 = vector.load %arg2[%c0_28, %134, %c0_29, %c0_30] : memref<1x18x24x16xf32, #tpu.memory_space<vmem>>, vector<1x16x24x16xf32>
    %136 = vector.shape_cast %135 : vector<1x16x24x16xf32> to vector<16x24x16xf32>
    %137 = vector.extract_strided_slice %136 {offsets = [0, 1, 0], sizes = [16, 16, 4], strides = [1, 1, 1]} : vector<16x24x16xf32> to vector<16x16x4xf32>
    %138 = vector.shape_cast %137 : vector<16x16x4xf32> to vector<256x4xf32>
    %139 = arith.addf %132, %138 : vector<256x4xf32>
    %140 = vector.shape_cast %139 : vector<256x4xf32> to vector<16x16x4xf32>
    %c0_31 = arith.constant 0 : index
    %c0_32 = arith.constant 0 : index
    %c0_33 = arith.constant 0 : index
    %c0_34 = arith.constant 0 : index
    %141 = vector.load %arg12[%c0_31, %c0_32, %c0_33, %c0_34] : memref<1x16x16x4xf32, #tpu.memory_space<vmem>>, vector<1x16x16x4xf32>
    %142 = vector.shape_cast %141 : vector<1x16x16x4xf32> to vector<16x16x4xf32>
    %143 = vector.shape_cast %140 : vector<16x16x4xf32> to vector<1x16x16x4xf32>
    tpu.vector_store %arg12[%c0_31, %c0_32, %c0_33, %c0_34], %143 {strides = array<i32>} : memref<1x16x16x4xf32, #tpu.memory_space<vmem>>, vector<1x16x16x4xf32>,
    return
  }
  func.func @transform_0(%arg0: i32, %arg1: i32) -> (i32, i32, i32, i32) {
    %c0_i32 = arith.constant 0 : i32
    %c0_i32_0 = arith.constant 0 : i32
    %c0_i32_1 = arith.constant 0 : i32
    %c0_i32_2 = arith.constant 0 : i32
    return %arg0, %c0_i32, %c0_i32_0, %c0_i32_1 : i32, i32, i32, i32
  }
  func.func @transform_1(%arg0: i32, %arg1: i32) -> (i32, i32) {
    %c0_i32 = arith.constant 0 : i32
    %c0_i32_0 = arith.constant 0 : i32
    %c0_i32_1 = arith.constant 0 : i32
    return %c0_i32, %c0_i32_0 : i32, i32
  }
  func.func @transform_2(%arg0: i32, %arg1: i32) -> (i32, i32) {
    %c0_i32 = arith.constant 0 : i32
    %c0_i32_0 = arith.constant 0 : i32
    %c0_i32_1 = arith.constant 0 : i32
    return %c0_i32, %c0_i32_0 : i32, i32
  }
  func.func @transform_3(%arg0: i32, %arg1: i32) -> (i32, i32) {
    %c0_i32 = arith.constant 0 : i32
    %c0_i32_0 = arith.constant 0 : i32
    %c0_i32_1 = arith.constant 0 : i32
    return %c0_i32, %c0_i32_0 : i32, i32
  }
  func.func @transform_4(%arg0: i32, %arg1: i32) -> (i32, i32) {
    %c0_i32 = arith.constant 0 : i32
    %c0_i32_0 = arith.constant 0 : i32
    %c0_i32_1 = arith.constant 0 : i32
    return %c0_i32, %c0_i32_0 : i32, i32
  }
  func.func @transform_5(%arg0: i32, %arg1: i32) -> (i32, i32) {
    %c0_i32 = arith.constant 0 : i32
    %c0_i32_0 = arith.constant 0 : i32
    %c0_i32_1 = arith.constant 0 : i32
    return %c0_i32, %c0_i32_0 : i32, i32
  }
  func.func @transform_6(%arg0: i32, %arg1: i32) -> (i32, i32) {
    %c0_i32 = arith.constant 0 : i32
    %c0_i32_0 = arith.constant 0 : i32
    %c0_i32_1 = arith.constant 0 : i32
    return %c0_i32, %c0_i32_0 : i32, i32
  }
  func.func @transform_7(%arg0: i32, %arg1: i32) -> (i32, i32) {
    %c0_i32 = arith.constant 0 : i32
    %c0_i32_0 = arith.constant 0 : i32
    %c0_i32_1 = arith.constant 0 : i32
    return %c0_i32, %c0_i32_0 : i32, i32
  }
  func.func @transform_8(%arg0: i32, %arg1: i32) -> (i32, i32) {
    %c0_i32 = arith.constant 0 : i32
    %c0_i32_0 = arith.constant 0 : i32
    %c0_i32_1 = arith.constant 0 : i32
    return %c0_i32, %c0_i32_0 : i32, i32
  }
  func.func @transform_9(%arg0: i32, %arg1: i32) -> (i32, i32) {
    %c0_i32 = arith.constant 0 : i32
    %c0_i32_0 = arith.constant 0 : i32
    %c0_i32_1 = arith.constant 0 : i32
    return %c0_i32, %c0_i32_0 : i32, i32
  }
  func.func @transform_10(%arg0: i32, %arg1: i32) -> (i32, i32, i32, i32) {
    %c0_i32 = arith.constant 0 : i32
    %c0_i32_0 = arith.constant 0 : i32
    %c0_i32_1 = arith.constant 0 : i32
    return %arg0, %arg1, %c0_i32, %c0_i32_0 : i32, i32, i32, i32
  }
}

</mosaic_0001>

<llo_original>
// kernel: mv2_block.1
$region0: #{mv2_block.1}
  #allocation0 [shape = 'u32[]', space=smem, size = 0x4, offset = 0x4, fixed_abs, tag = 'smem constant byte address 0x4 - core index']
  #allocation1 [shape = 'u32[144,128]{1,0:T(1,128)}', space=vmem, size = 0x12000, scoped, tag = 'internal scratch']
  %s0 = inlined_call_operand.vmem [shape: f32[2,18,24,16], index: 0, kind: input, shape index: {}]
  %s1 = inlined_call_operand.vmem [shape: bf16[16,16], index: 1, kind: input, shape index: {}]
  %s2 = inlined_call_operand.vmem [shape: f32[1,16], index: 2, kind: input, shape index: {}]
  %s3 = inlined_call_operand.vmem [shape: f32[1,16], index: 3, kind: input, shape index: {}]
  %s4 = inlined_call_operand.vmem [shape: f32[9,16], index: 4, kind: input, shape index: {}]
  %s5 = inlined_call_operand.vmem [shape: f32[1,16], index: 5, kind: input, shape index: {}]
  %s6 = inlined_call_operand.vmem [shape: f32[1,16], index: 6, kind: input, shape index: {}]
  %s7 = inlined_call_operand.vmem [shape: bf16[16,4], index: 7, kind: input, shape index: {}]
  %s8 = inlined_call_operand.vmem [shape: f32[1,4], index: 8, kind: input, shape index: {}]
  %s9 = inlined_call_operand.vmem [shape: f32[1,4], index: 9, kind: input, shape index: {}]
  %s10 = inlined_call_operand.vmem [shape: f32[2,16,16,4], index: 10, kind: output, shape index: {}]
  %s11 = sld [smem:[#allocation0]]
  $region73: #{mv2_block.1} parent=0
    _
  %s13 = ssub.s32 1, %s11
  %s14 = scalar_select 0, %s13, %s11
  loop: start=0, step=1, limit=4
  $region2: #{mv2_block.1} parent=0 // loop_pre_header
    _
  $region3: #{mv2_block.1} parent=0 // loop_header
    %s16 = sphi 0, %s20
    %p17 = scmp.ge.s32.totalorder %s16, 4
    %s23 = sphi 0, %s35
    %s24 = sphi 0, %s31
    %s25 = sphi 0, %s23
    %s26 = sphi 0, %s24
    %s27 = sphi 0, %s25
    %s28 = sphi 0, %s26
    %s38 = sphi 0, %s40
    %s41 = sphi 0, %s38
    %s42 = sphi 0, %s41
    %s58 = sphi 0, %s42
    %s62 = sphi 0, %s62
    %s64 = sphi 0, %s62
    %s65 = sphi 0, %s64
    %s79 = sphi 0, %s65
    %s83 = sphi 0, %s83
    %s85 = sphi 0, %s83
    %s86 = sphi 0, %s85
    %s100 = sphi 0, %s86
    %s104 = sphi 0, %s104
    %s106 = sphi 0, %s104
    %s107 = sphi 0, %s106
    %s121 = sphi 0, %s107
    %s125 = sphi 0, %s125
    %s127 = sphi 0, %s125
    %s128 = sphi 0, %s127
    %s142 = sphi 0, %s128
    %s146 = sphi 0, %s146
    %s148 = sphi 0, %s146
    %s149 = sphi 0, %s148
    %s163 = sphi 0, %s149
    %s167 = sphi 0, %s167
    %s169 = sphi 0, %s167
    %s170 = sphi 0, %s169
    %s184 = sphi 0, %s170
    %s188 = sphi 0, %s188
    %s190 = sphi 0, %s188
    %s191 = sphi 0, %s190
    %s205 = sphi 0, %s191
    %s209 = sphi 0, %s209
    %s211 = sphi 0, %s209
    %s212 = sphi 0, %s211
    %s226 = sphi 0, %s212
    %s230 = sphi 0, %s230
    %s232 = sphi 0, %s230
    %s233 = sphi 0, %s232
    %s247 = sphi 0, %s233
    %s255 = sphi 0, %s257
    %s258 = sphi 0, %s255
    %s259 = sphi 0, %s258
    %s275 = sphi 0, %s259
  $region4: #{mv2_block.1} parent=0 // loop_header_branch
    %19 = sbr.rel (%p17) target = $region8
  $region5: #{mv2_block.1} parent=0 // loop_body
    %s21 = ssub.s32 %s16, 1
    %s22 = ssub.s32 %s16, 2
    %s29 = sadd.s32 1, %s24
    %p30 = scmp.ge.s32.totalorder %s29, 1
    %s31 = scalar_select %p30, 0, %s29
    %s32 = sadd.s32 1, %s23
    %s33 = scalar_select %p30, %s32, %s23
    %p34 = scmp.ge.s32.totalorder %s33, 2
    %s35 = scalar_select %p34, 0, %s33
    %s36 = ssub.s32 %s23, %s35
    %p37 = scmp.eq.s32.totalorder %s36, 0
    %s39 = sadd.s32 %s38, 1
    %s40 = scalar_select %p37, %s38, %s39
    %p43 = pneg %p37
    %p44 = scmp.eq.s32.totalorder %s16, 1
    %p45 = por %p43, %p44
    %p46 = scmp.ne.s32.totalorder %s38, %s41
    %p47 = scmp.eq.s32.totalorder %s16, 0
    %p48 = por %p46, %p47
    %p49 = scmp.ne.s32.totalorder %s38, %s41
    %p50 = scmp.eq.s32.totalorder %s21, 1
    %p51 = por %p49, %p50
    %p52 = scmp.ne.s32.totalorder %s41, %s42
    %p53 = scmp.eq.s32.totalorder %s21, 0
    %p54 = por %p52, %p53
    %p55 = scmp.ne.s32.totalorder %s41, %s42
    %p56 = scmp.eq.s32.totalorder %s22, 1
    %p57 = por %p55, %p56
    %p59 = scmp.ne.s32.totalorder %s42, %s58
    %p60 = scmp.eq.s32.totalorder %s22, 0
    %p61 = por %p59, %p60
    %s63 = sadd.s32 %s62, 1
    %p66 = scmp.eq.s32.totalorder %s16, 1
    %p67 = scmp.ne.s32.totalorder %s62, %s64
    %p68 = scmp.eq.s32.totalorder %s16, 0
    %p69 = por %p67, %p68
    %p70 = scmp.ne.s32.totalorder %s62, %s64
    %p71 = scmp.eq.s32.totalorder %s21, 1
    %p72 = por %p70, %p71
    %p73 = scmp.ne.s32.totalorder %s64, %s65
    %p74 = scmp.eq.s32.totalorder %s21, 0
    %p75 = por %p73, %p74
    %p76 = scmp.ne.s32.totalorder %s64, %s65
    %p77 = scmp.eq.s32.totalorder %s22, 1
    %p78 = por %p76, %p77
    %p80 = scmp.ne.s32.totalorder %s65, %s79
    %p81 = scmp.eq.s32.totalorder %s22, 0
    %p82 = por %p80, %p81
    %s84 = sadd.s32 %s83, 1
    %p87 = scmp.eq.s32.totalorder %s16, 1
    %p88 = scmp.ne.s32.totalorder %s83, %s85
    %p89 = scmp.eq.s32.totalorder %s16, 0
    %p90 = por %p88, %p89
    %p91 = scmp.ne.s32.totalorder %s83, %s85
    %p92 = scmp.eq.s32.totalorder %s21, 1
    %p93 = por %p91, %p92
    %p94 = scmp.ne.s32.totalorder %s85, %s86
    %p95 = scmp.eq.s32.totalorder %s21, 0
    %p96 = por %p94, %p95
    %p97 = scmp.ne.s32.totalorder %s85, %s86
    %p98 = scmp.eq.s32.totalorder %s22, 1
    %p99 = por %p97, %p98
    %p101 = scmp.ne.s32.totalorder %s86, %s100
    %p102 = scmp.eq.s32.totalorder %s22, 0
    %p103 = por %p101, %p102
    %s105 = sadd.s32 %s104, 1
    %p108 = scmp.eq.s32.totalorder %s16, 1
    %p109 = scmp.ne.s32.totalorder %s104, %s106
    %p110 = scmp.eq.s32.totalorder %s16, 0
    %p111 = por %p109, %p110
    %p112 = scmp.ne.s32.totalorder %s104, %s106
    %p113 = scmp.eq.s32.totalorder %s21, 1
    %p114 = por %p112, %p113
    %p115 = scmp.ne.s32.totalorder %s106, %s107
    %p116 = scmp.eq.s32.totalorder %s21, 0
    %p117 = por %p115, %p116
    %p118 = scmp.ne.s32.totalorder %s106, %s107
    %p119 = scmp.eq.s32.totalorder %s22, 1
    %p120 = por %p118, %p119
    %p122 = scmp.ne.s32.totalorder %s107, %s121
    %p123 = scmp.eq.s32.totalorder %s22, 0
    %p124 = por %p122, %p123
    %s126 = sadd.s32 %s125, 1
    %p129 = scmp.eq.s32.totalorder %s16, 1
    %p130 = scmp.ne.s32.totalorder %s125, %s127
    %p131 = scmp.eq.s32.totalorder %s16, 0
    %p132 = por %p130, %p131
    %p133 = scmp.ne.s32.totalorder %s125, %s127
    %p134 = scmp.eq.s32.totalorder %s21, 1
    %p135 = por %p133, %p134
    %p136 = scmp.ne.s32.totalorder %s127, %s128
    %p137 = scmp.eq.s32.totalorder %s21, 0
    %p138 = por %p136, %p137
    %p139 = scmp.ne.s32.totalorder %s127, %s128
    %p140 = scmp.eq.s32.totalorder %s22, 1
    %p141 = por %p139, %p140
    %p143 = scmp.ne.s32.totalorder %s128, %s142
    %p144 = scmp.eq.s32.totalorder %s22, 0
    %p145 = por %p143, %p144
    %s147 = sadd.s32 %s146, 1
    %p150 = scmp.eq.s32.totalorder %s16, 1
    %p151 = scmp.ne.s32.totalorder %s146, %s148
    %p152 = scmp.eq.s32.totalorder %s16, 0
    %p153 = por %p151, %p152
    %p154 = scmp.ne.s32.totalorder %s146, %s148
    %p155 = scmp.eq.s32.totalorder %s21, 1
    %p156 = por %p154, %p155
    %p157 = scmp.ne.s32.totalorder %s148, %s149
    %p158 = scmp.eq.s32.totalorder %s21, 0
    %p159 = por %p157, %p158
    %p160 = scmp.ne.s32.totalorder %s148, %s149
    %p161 = scmp.eq.s32.totalorder %s22, 1
    %p162 = por %p160, %p161
    %p164 = scmp.ne.s32.totalorder %s149, %s163
    %p165 = scmp.eq.s32.totalorder %s22, 0
    %p166 = por %p164, %p165
    %s168 = sadd.s32 %s167, 1
    %p171 = scmp.eq.s32.totalorder %s16, 1
    %p172 = scmp.ne.s32.totalorder %s167, %s169
    %p173 = scmp.eq.s32.totalorder %s16, 0
    %p174 = por %p172, %p173
    %p175 = scmp.ne.s32.totalorder %s167, %s169
    %p176 = scmp.eq.s32.totalorder %s21, 1
    %p177 = por %p175, %p176
    %p178 = scmp.ne.s32.totalorder %s169, %s170
    %p179 = scmp.eq.s32.totalorder %s21, 0
    %p180 = por %p178, %p179
    %p181 = scmp.ne.s32.totalorder %s169, %s170
    %p182 = scmp.eq.s32.totalorder %s22, 1
    %p183 = por %p181, %p182
    %p185 = scmp.ne.s32.totalorder %s170, %s184
    %p186 = scmp.eq.s32.totalorder %s22, 0
    %p187 = por %p185, %p186
    %s189 = sadd.s32 %s188, 1
    %p192 = scmp.eq.s32.totalorder %s16, 1
    %p193 = scmp.ne.s32.totalorder %s188, %s190
    %p194 = scmp.eq.s32.totalorder %s16, 0
    %p195 = por %p193, %p194
    %p196 = scmp.ne.s32.totalorder %s188, %s190
    %p197 = scmp.eq.s32.totalorder %s21, 1
    %p198 = por %p196, %p197
    %p199 = scmp.ne.s32.totalorder %s190, %s191
    %p200 = scmp.eq.s32.totalorder %s21, 0
    %p201 = por %p199, %p200
    %p202 = scmp.ne.s32.totalorder %s190, %s191
    %p203 = scmp.eq.s32.totalorder %s22, 1
    %p204 = por %p202, %p203
    %p206 = scmp.ne.s32.totalorder %s191, %s205
    %p207 = scmp.eq.s32.totalorder %s22, 0
    %p208 = por %p206, %p207
    %s210 = sadd.s32 %s209, 1
    %p213 = scmp.eq.s32.totalorder %s16, 1
    %p214 = scmp.ne.s32.totalorder %s209, %s211
    %p215 = scmp.eq.s32.totalorder %s16, 0
    %p216 = por %p214, %p215
    %p217 = scmp.ne.s32.totalorder %s209, %s211
    %p218 = scmp.eq.s32.totalorder %s21, 1
    %p219 = por %p217, %p218
    %p220 = scmp.ne.s32.totalorder %s211, %s212
    %p221 = scmp.eq.s32.totalorder %s21, 0
    %p222 = por %p220, %p221
    %p223 = scmp.ne.s32.totalorder %s211, %s212
    %p224 = scmp.eq.s32.totalorder %s22, 1
    %p225 = por %p223, %p224
    %p227 = scmp.ne.s32.totalorder %s212, %s226
    %p228 = scmp.eq.s32.totalorder %s22, 0
    %p229 = por %p227, %p228
    %s231 = sadd.s32 %s230, 1
    %p234 = scmp.eq.s32.totalorder %s16, 1
    %p235 = scmp.ne.s32.totalorder %s230, %s232
    %p236 = scmp.eq.s32.totalorder %s16, 0
    %p237 = por %p235, %p236
    %p238 = scmp.ne.s32.totalorder %s230, %s232
    %p239 = scmp.eq.s32.totalorder %s21, 1
    %p240 = por %p238, %p239
    %p241 = scmp.ne.s32.totalorder %s232, %s233
    %p242 = scmp.eq.s32.totalorder %s21, 0
    %p243 = por %p241, %p242
    %p244 = scmp.ne.s32.totalorder %s232, %s233
    %p245 = scmp.eq.s32.totalorder %s22, 1
    %p246 = por %p244, %p245
    %p248 = scmp.ne.s32.totalorder %s233, %s247
    %p249 = scmp.eq.s32.totalorder %s22, 0
    %p250 = por %p248, %p249
    %s251 = ssub.s32 %s23, %s35
    %s252 = ssub.s32 %s24, %s31
    %s253 = sor.u32 %s251, %s252
    %p254 = scmp.eq.s32.totalorder %s253, 0
    %s256 = sadd.s32 %s255, 1
    %s257 = scalar_select %p254, %s255, %s256
    %p260 = pneg %p254
    %p261 = scmp.eq.s32.totalorder %s16, 1
    %p262 = por %p260, %p261
    %p263 = scmp.ne.s32.totalorder %s255, %s258
    %p264 = scmp.eq.s32.totalorder %s16, 0
    %p265 = por %p263, %p264
    %p266 = scmp.ne.s32.totalorder %s255, %s258
    %p267 = scmp.eq.s32.totalorder %s21, 1
    %p268 = por %p266, %p267
    %p269 = scmp.ne.s32.totalorder %s258, %s259
    %p270 = scmp.eq.s32.totalorder %s21, 0
    %p271 = por %p269, %p270
    %p272 = scmp.ne.s32.totalorder %s258, %s259
    %p273 = scmp.eq.s32.totalorder %s22, 1
    %p274 = por %p272, %p273
    %p276 = scmp.ne.s32.totalorder %s259, %s275
    %p277 = scmp.eq.s32.totalorder %s22, 0
    %p278 = por %p276, %p277
    %p279 = scmp.le.s32.totalorder 1, %s16
    %p280 = scmp.lt.s32.totalorder %s16, 3
    %p281 = pnand %p279, %p280
    %p282 = pneg %p281
    // Predicated region
    $region9: #{mv2_block.1} parent=5 // pred_check
      _
    $region10: #{mv2_block.1} parent=5 // pred_check_branch
      %284 = sbr.rel (%p281) target = $region12
    $region11: #{mv2_block.1} parent=5 // pred_region
      %s285 = ssub.s32 %s16, 1
      // Predicated region
      $region13: #{mv2_block.1} parent=11 // pred_check
        %p286 = pneg %p75
      $region14: #{mv2_block.1} parent=11 // pred_check_branch
        %288 = sbr.rel (%p286) target = $region16
      $region15: #{mv2_block.1} parent=11 // pred_region
        _
      $region16: #{mv2_block.1} parent=11 // pred_fallthru
        _
      // Predicated region
      $region17: #{mv2_block.1} parent=11 // pred_check
        %p289 = pneg %p96
      $region18: #{mv2_block.1} parent=11 // pred_check_branch
        %291 = sbr.rel (%p289) target = $region20
      $region19: #{mv2_block.1} parent=11 // pred_region
        _
      $region20: #{mv2_block.1} parent=11 // pred_fallthru
        _
      // Predicated region
      $region21: #{mv2_block.1} parent=11 // pred_check
        %p292 = pneg %p117
      $region22: #{mv2_block.1} parent=11 // pred_check_branch
        %294 = sbr.rel (%p292) target = $region24
      $region23: #{mv2_block.1} parent=11 // pred_region
        _
      $region24: #{mv2_block.1} parent=11 // pred_fallthru
        _
      // Predicated region
      $region25: #{mv2_block.1} parent=11 // pred_check
        %p295 = pneg %p138
      $region26: #{mv2_block.1} parent=11 // pred_check_branch
        %297 = sbr.rel (%p295) target = $region28
      $region27: #{mv2_block.1} parent=11 // pred_region
        _
      $region28: #{mv2_block.1} parent=11 // pred_fallthru
        _
      // Predicated region
      $region29: #{mv2_block.1} parent=11 // pred_check
        %p298 = pneg %p159
      $region30: #{mv2_block.1} parent=11 // pred_check_branch
        %300 = sbr.rel (%p298) target = $region32
      $region31: #{mv2_block.1} parent=11 // pred_region
        _
      $region32: #{mv2_block.1} parent=11 // pred_fallthru
        _
      // Predicated region
      $region33: #{mv2_block.1} parent=11 // pred_check
        %p301 = pneg %p180
      $region34: #{mv2_block.1} parent=11 // pred_check_branch
        %303 = sbr.rel (%p301) target = $region36
      $region35: #{mv2_block.1} parent=11 // pred_region
        _
      $region36: #{mv2_block.1} parent=11 // pred_fallthru
        _
      // Predicated region
      $region37: #{mv2_block.1} parent=11 // pred_check
        %p304 = pneg %p201
      $region38: #{mv2_block.1} parent=11 // pred_check_branch
        %306 = sbr.rel (%p304) target = $region40
      $region39: #{mv2_block.1} parent=11 // pred_region
        _
      $region40: #{mv2_block.1} parent=11 // pred_fallthru
        _
      // Predicated region
      $region41: #{mv2_block.1} parent=11 // pred_check
        %p307 = pneg %p222
      $region42: #{mv2_block.1} parent=11 // pred_check_branch
        %309 = sbr.rel (%p307) target = $region44
      $region43: #{mv2_block.1} parent=11 // pred_region
        _
      $region44: #{mv2_block.1} parent=11 // pred_fallthru
        _
      // Predicated region
      $region45: #{mv2_block.1} parent=11 // pred_check
        %p310 = pneg %p243
      $region46: #{mv2_block.1} parent=11 // pred_check_branch
        %312 = sbr.rel (%p310) target = $region48
      $region47: #{mv2_block.1} parent=11 // pred_region
        _
      $region48: #{mv2_block.1} parent=11 // pred_fallthru
        _
    $region12: #{mv2_block.1} parent=5 // pred_fallthru
      _
    %p313 = scmp.lt.s32.totalorder %s16, 2
    // Predicated region
    $region49: #{mv2_block.1} parent=5 // pred_check
      %p314 = pneg %p313
    $region50: #{mv2_block.1} parent=5 // pred_check_branch
      %316 = sbr.rel (%p314) target = $region52
    $region51: #{mv2_block.1} parent=5 // pred_region
      // Predicated region
      $region53: #{mv2_block.1} parent=51 // pred_check
        %p317 = pneg %p48
      $region54: #{mv2_block.1} parent=51 // pred_check_branch
        %319 = sbr.rel (%p317) target = $region56
      $region55: #{mv2_block.1} parent=51 // pred_region
        %p320 = scmp.lt.s32.totalorder %s23, 1
        %s321 = scalar_select %p320, %s23, 1
        %s322 = smul.addr %s321, 54
        %s323 = smul.addr %s322, 8
        %s324 = scalar_lea.vmem %s0, %s323
      $region56: #{mv2_block.1} parent=51 // pred_fallthru
        _
    $region52: #{mv2_block.1} parent=5 // pred_fallthru
      _
    %p325 = scmp.le.s32.totalorder 1, %s16
    %p326 = scmp.lt.s32.totalorder %s16, 3
    %p327 = pnand %p325, %p326
    %p328 = pneg %p327
    // Predicated region
    $region57: #{mv2_block.1} parent=5 // pred_check
      _
    $region58: #{mv2_block.1} parent=5 // pred_check_branch
      %330 = sbr.rel (%p327) target = $region60
    $region59: #{mv2_block.1} parent=5 // pred_region
      %s331 = ssub.s32 %s16, 1
      %p332 = scmp.lt.s32.totalorder %s25, 1
      %s333 = scalar_select %p332, %s25, 1
      %s334 = smul.addr %s333, 54
      %s335 = smul.addr %s334, 8
      %s336 = scalar_lea.vmem %s0, %s335
      %p337 = pneg %p54
      %p338 = pneg %p51
      %p339 = pneg %p75
      %p340 = pneg %p72
      %p341 = pneg %p96
      %p342 = pneg %p93
      %p343 = pneg %p117
      %p344 = pneg %p114
      %p345 = pneg %p138
      %p346 = pneg %p135
      %p347 = pneg %p159
      %p348 = pneg %p156
      %p349 = pneg %p180
      %p350 = pneg %p177
      %p351 = pneg %p201
      %p352 = pneg %p198
      %p353 = pneg %p222
      %p354 = pneg %p219
      %p355 = pneg %p243
      %p356 = pneg %p240
      %p357 = pneg %p271
      %p358 = pneg %p268
      %s359 = smul.u32 16, %s26
      %p360 = scmp.lt.s32.totalorder %s25, 1
      %s361 = scalar_select %p360, %s25, 1
      %p362 = scmp.lt.s32.totalorder %s359, 15
      %s363 = scalar_select %p362, %s359, 15
      %s364 = smul.addr %s363, 2
      %s365 = smul.addr %s361, 32
      %s366 = sadd.s32 %s364, %s365
      %s367 = smul.addr %s366, 8
      %s368 = scalar_lea.vmem %s10, %s367
      %p369 = scmp.lt.s32.totalorder %s25, 1
      %s370 = scalar_select %p369, %s25, 1
      %s371 = smul.addr %s370, 54
      %s372 = smul.addr %s371, 8
      %s373 = scalar_lea.vmem %s0, %s372
      %s374 = smul.u32 16, %s26
      %p375 = scmp.lt.s32.totalorder %s25, 1
      %s376 = scalar_select %p375, %s25, 1
      %p377 = scmp.lt.s32.totalorder %s374, 15
      %s378 = scalar_select %p377, %s374, 15
      %s379 = smul.addr %s378, 2
      %s380 = smul.addr %s376, 32
      %s381 = sadd.s32 %s379, %s380
      %s382 = smul.addr %s381, 8
      %s383 = scalar_lea.vmem %s10, %s382
      %s384 = smul.u32 16, %s26
      %s386 = smul.u32 %s26, 16
      %s387 = smul.u32 %s386, 24
      %s388 = scalar_lea.vmem %s373, %s387
      %v389 = vld [vmem:[%s388] sm:$0xff]
      %v390 = vld [vmem:[%s388 + $0x8] sm:$0xff]
      %v391 = vld [vmem:[%s388 + $0x10] sm:$0xff]
      %v392 = vld [vmem:[%s388 + $0x18] sm:$0xff]
      %v393 = vld [vmem:[%s388 + $0x20] sm:$0xff]
      %v394 = vld [vmem:[%s388 + $0x28] sm:$0xff]
      %v395 = vld [vmem:[%s388 + $0x30] sm:$0xff]
      %v396 = vld [vmem:[%s388 + $0x38] sm:$0xff]
      %v397 = vld [vmem:[%s388 + $0x40] sm:$0xff]
      %v398 = vld [vmem:[%s388 + $0x48] sm:$0xff]
      %v399 = vld [vmem:[%s388 + $0x50] sm:$0xff]
      %v400 = vld [vmem:[%s388 + $0x58] sm:$0xff]
      %v401 = vld [vmem:[%s388 + $0x60] sm:$0xff]
      %v402 = vld [vmem:[%s388 + $0x68] sm:$0xff]
      %v403 = vld [vmem:[%s388 + $0x70] sm:$0xff]
      %v404 = vld [vmem:[%s388 + $0x78] sm:$0xff]
      %v405 = vld [vmem:[%s388 + $0x80] sm:$0xff]
      %v406 = vld [vmem:[%s388 + $0x88] sm:$0xff]
      %v407 = vld [vmem:[%s388 + $0x90] sm:$0xff]
      %v408 = vld [vmem:[%s388 + $0x98] sm:$0xff]
      %v409 = vld [vmem:[%s388 + $0xa0] sm:$0xff]
      %v410 = vld [vmem:[%s388 + $0xa8] sm:$0xff]
      %v411 = vld [vmem:[%s388 + $0xb0] sm:$0xff]
      %v412 = vld [vmem:[%s388 + $0xb8] sm:$0xff]
      %v413 = vld [vmem:[%s388 + $0xc0] sm:$0xff]
      %v414 = vld [vmem:[%s388 + $0xc8] sm:$0xff]
      %v415 = vld [vmem:[%s388 + $0xd0] sm:$0xff]
      %v416 = vld [vmem:[%s388 + $0xd8] sm:$0xff]
      %v417 = vld [vmem:[%s388 + $0xe0] sm:$0xff]
      %v418 = vld [vmem:[%s388 + $0xe8] sm:$0xff]
      %v419 = vld [vmem:[%s388 + $0xf0] sm:$0xff]
      %v420 = vld [vmem:[%s388 + $0xf8] sm:$0xff]
      %v421 = vld [vmem:[%s388 + $0x100] sm:$0xff]
      %v422 = vld [vmem:[%s388 + $0x108] sm:$0xff]
      %v423 = vld [vmem:[%s388 + $0x110] sm:$0xff]
      %v424 = vld [vmem:[%s388 + $0x118] sm:$0xff]
      %v425 = vld [vmem:[%s388 + $0x120] sm:$0xff]
      %v426 = vld [vmem:[%s388 + $0x128] sm:$0xff]
      %v427 = vld [vmem:[%s388 + $0x130] sm:$0xff]
      %v428 = vld [vmem:[%s388 + $0x138] sm:$0xff]
      %v429 = vld [vmem:[%s388 + $0x140] sm:$0xff]
      %v430 = vld [vmem:[%s388 + $0x148] sm:$0xff]
      %v431 = vld [vmem:[%s388 + $0x150] sm:$0xff]
      %v432 = vld [vmem:[%s388 + $0x158] sm:$0xff]
      %v433 = vld [vmem:[%s388 + $0x160] sm:$0xff]
      %v434 = vld [vmem:[%s388 + $0x168] sm:$0xff]
      %v435 = vld [vmem:[%s388 + $0x170] sm:$0xff]
      %v436 = vld [vmem:[%s388 + $0x178] sm:$0xff]
      %v437 = vld [vmem:[%s388 + $0x180] sm:$0xff]
      %v438 = vld [vmem:[%s388 + $0x188] sm:$0xff]
      %v439 = vld [vmem:[%s388 + $0x190] sm:$0xff]
      %v440 = vld [vmem:[%s388 + $0x198] sm:$0xff]
      %v441 = vld [vmem:[%s388 + $0x1a0] sm:$0xff]
      %v442 = vld [vmem:[%s388 + $0x1a8] sm:$0xff]
      %v443 = vpack.c.bf16 %v390, %v389
      %v444 = vpack.c.bf16 %v392, %v391
      %v445 = vpack.c.bf16 %v394, %v393
      %v446 = vpack.c.bf16 %v396, %v395
      %v447 = vpack.c.bf16 %v398, %v397
      %v448 = vpack.c.bf16 %v400, %v399
      %v449 = vpack.c.bf16 %v402, %v401
      %v450 = vpack.c.bf16 %v404, %v403
      %v451 = vpack.c.bf16 %v406, %v405
      %v452 = vpack.c.bf16 %v408, %v407
      %v453 = vpack.c.bf16 %v410, %v409
      %v454 = vpack.c.bf16 %v412, %v411
      %v455 = vpack.c.bf16 %v414, %v413
      %v456 = vpack.c.bf16 %v416, %v415
      %v457 = vpack.c.bf16 %v418, %v417
      %v458 = vpack.c.bf16 %v420, %v419
      %v459 = vpack.c.bf16 %v422, %v421
      %v460 = vpack.c.bf16 %v424, %v423
      %v461 = vpack.c.bf16 %v426, %v425
      %v462 = vpack.c.bf16 %v428, %v427
      %v463 = vpack.c.bf16 %v430, %v429
      %v464 = vpack.c.bf16 %v432, %v431
      %v465 = vpack.c.bf16 %v434, %v433
      %v466 = vpack.c.bf16 %v436, %v435
      %v467 = vpack.c.bf16 %v438, %v437
      %v468 = vpack.c.bf16 %v440, %v439
      %v469 = vpack.c.bf16 %v442, %v441
      %v470 = vld [vmem:[%s1] sm:$0xf]
      %v471 = vld [vmem:[%s1 + $0x4] sm:$0xf]
      %v474 = vunpack.c.l.b16 %v470
      %v475 = vunpack.c.l.b16 %v471
      %v476 = vpack.c.b16 %v475, %v474
      %vm478 = vcmask 130048
      %v480 = vsel %vm478, %v443, 0
      %v483 = vsel %vm478, %v444, 0
      %v486 = vsel %vm478, %v445, 0
      %v489 = vsel %vm478, %v446, 0
      %v492 = vsel %vm478, %v447, 0
      %v495 = vsel %vm478, %v448, 0
      %v498 = vsel %vm478, %v449, 0
      %v501 = vsel %vm478, %v450, 0
      %v504 = vsel %vm478, %v451, 0
      %v507 = vsel %vm478, %v452, 0
      %v510 = vsel %vm478, %v453, 0
      %v513 = vsel %vm478, %v454, 0
      %v516 = vsel %vm478, %v455, 0
      %v519 = vsel %vm478, %v456, 0
      %v522 = vsel %vm478, %v457, 0
      %v525 = vsel %vm478, %v458, 0
      %v528 = vsel %vm478, %v459, 0
      %v531 = vsel %vm478, %v460, 0
      %v534 = vsel %vm478, %v461, 0
      %v537 = vsel %vm478, %v462, 0
      %v540 = vsel %vm478, %v463, 0
      %v543 = vsel %vm478, %v464, 0
      %v546 = vsel %vm478, %v465, 0
      %v549 = vsel %vm478, %v466, 0
      %v552 = vsel %vm478, %v467, 0
      %v555 = vsel %vm478, %v468, 0
      %v558 = vsel %vm478, %v469, 0
      %560 = vmatprep.subr.bf16.mxu0 0
      %561 = vmatpush1.bf16.msra.mxu0 0
      %562 = vmatprep.subr.bf16.mxu0 0
      %563 = vmatpush1.bf16.msra.mxu0 0
      %564 = vmatprep.subr.bf16.mxu0 0
      %565 = vmatpush1.bf16.msra.mxu0 0
      %566 = vmatprep.subr.bf16.mxu0 0
      %567 = vmatpush1.bf16.msra.mxu0 0
      %568 = vmatprep.subr.bf16.mxu0 0
      %569 = vmatpush1.bf16.msra.mxu0 0
      %570 = vmatprep.subr.bf16.mxu0 0
      %571 = vmatpush1.bf16.msra.mxu0 0
      %572 = vmatprep.subr.bf16.mxu0 0
      %573 = vmatpush1.bf16.msra.mxu0 0
      %574 = vmatprep.subr.bf16.mxu0 0
      %575 = vmatpush1.bf16.msra.mxu0 %v476
      %576 = vmatprep.subr.bf16.mxu0 0
      %577 = vmatpush2.bf16.msra.mxu0 0
      %578 = vmatprep.subr.bf16.mxu0 0
      %579 = vmatpush2.bf16.msra.mxu0 0
      %580 = vmatprep.subr.bf16.mxu0 0
      %581 = vmatpush2.bf16.msra.mxu0 0
      %582 = vmatprep.subr.bf16.mxu0 0
      %583 = vmatpush2.bf16.msra.mxu0 0
      %584 = vmatprep.subr.bf16.mxu0 0
      %585 = vmatpush2.bf16.msra.mxu0 0
      %586 = vmatprep.subr.bf16.mxu0 0
      %587 = vmatpush2.bf16.msra.mxu0 0
      %588 = vmatprep.subr.bf16.mxu0 0
      %589 = vmatpush2.bf16.msra.mxu0 0
      %590 = vmatprep.subr.bf16.mxu0 0
      %591 = vmatpush2.bf16.msra.mxu0 0
      %592 = vmatprep.mubr.bf16.mxu0 0
      %593 = vmatmul.mubr.bf16.gmra.mxu0 %v480
      %v594 = vpop.f32.mrf.mxu0
      %v595 = vadd.f32 0.0, %v594
      %v596 = vpop.f32.mrf.mxu0
      %v597 = vpop.f32.mrf.mxu0
      %v598 = vadd.f32 0.0, %v597
      %v599 = vpop.f32.mrf.mxu0
      %600 = vmatprep.mubr.bf16.mxu0 0
      %601 = vmatmul.mubr.bf16.gmra.mxu0 %v483
      %v602 = vpop.f32.mrf.mxu0
      %v603 = vadd.f32 0.0, %v602
      %v604 = vpop.f32.mrf.mxu0
      %v605 = vpop.f32.mrf.mxu0
      %v606 = vadd.f32 0.0, %v605
      %v607 = vpop.f32.mrf.mxu0
      %608 = vmatprep.mubr.bf16.mxu0 0
      %609 = vmatmul.mubr.bf16.gmra.mxu0 %v486
      %v610 = vpop.f32.mrf.mxu0
      %v611 = vadd.f32 0.0, %v610
      %v612 = vpop.f32.mrf.mxu0
      %v613 = vpop.f32.mrf.mxu0
      %v614 = vadd.f32 0.0, %v613
      %v615 = vpop.f32.mrf.mxu0
      %616 = vmatprep.mubr.bf16.mxu0 0
      %617 = vmatmul.mubr.bf16.gmra.mxu0 %v489
      %v618 = vpop.f32.mrf.mxu0
      %v619 = vadd.f32 0.0, %v618
      %v620 = vpop.f32.mrf.mxu0
      %v621 = vpop.f32.mrf.mxu0
      %v622 = vadd.f32 0.0, %v621
      %v623 = vpop.f32.mrf.mxu0
      %624 = vmatprep.mubr.bf16.mxu0 0
      %625 = vmatmul.mubr.bf16.gmra.mxu0 %v492
      %v626 = vpop.f32.mrf.mxu0
      %v627 = vadd.f32 0.0, %v626
      %v628 = vpop.f32.mrf.mxu0
      %v629 = vpop.f32.mrf.mxu0
      %v630 = vadd.f32 0.0, %v629
      %v631 = vpop.f32.mrf.mxu0
      %632 = vmatprep.mubr.bf16.mxu0 0
      %633 = vmatmul.mubr.bf16.gmra.mxu0 %v495
      %v634 = vpop.f32.mrf.mxu0
      %v635 = vadd.f32 0.0, %v634
      %v636 = vpop.f32.mrf.mxu0
      %v637 = vpop.f32.mrf.mxu0
      %v638 = vadd.f32 0.0, %v637
      %v639 = vpop.f32.mrf.mxu0
      %640 = vmatprep.mubr.bf16.mxu0 0
      %641 = vmatmul.mubr.bf16.gmra.mxu0 %v498
      %v642 = vpop.f32.mrf.mxu0
      %v643 = vadd.f32 0.0, %v642
      %v644 = vpop.f32.mrf.mxu0
      %v645 = vpop.f32.mrf.mxu0
      %v646 = vadd.f32 0.0, %v645
      %v647 = vpop.f32.mrf.mxu0
      %648 = vmatprep.mubr.bf16.mxu0 0
      %649 = vmatmul.mubr.bf16.gmra.mxu0 %v501
      %v650 = vpop.f32.mrf.mxu0
      %v651 = vadd.f32 0.0, %v650
      %v652 = vpop.f32.mrf.mxu0
      %v653 = vpop.f32.mrf.mxu0
      %v654 = vadd.f32 0.0, %v653
      %v655 = vpop.f32.mrf.mxu0
      %656 = vmatprep.mubr.bf16.mxu0 0
      %657 = vmatmul.mubr.bf16.gmra.mxu0 %v504
      %v658 = vpop.f32.mrf.mxu0
      %v659 = vadd.f32 0.0, %v658
      %v660 = vpop.f32.mrf.mxu0
      %v661 = vpop.f32.mrf.mxu0
      %v662 = vadd.f32 0.0, %v661
      %v663 = vpop.f32.mrf.mxu0
      %664 = vmatprep.mubr.bf16.mxu0 0
      %665 = vmatmul.mubr.bf16.gmra.mxu0 %v507
      %v666 = vpop.f32.mrf.mxu0
      %v667 = vadd.f32 0.0, %v666
      %v668 = vpop.f32.mrf.mxu0
      %v669 = vpop.f32.mrf.mxu0
      %v670 = vadd.f32 0.0, %v669
      %v671 = vpop.f32.mrf.mxu0
      %672 = vmatprep.mubr.bf16.mxu0 0
      %673 = vmatmul.mubr.bf16.gmra.mxu0 %v510
      %v674 = vpop.f32.mrf.mxu0
      %v675 = vadd.f32 0.0, %v674
      %v676 = vpop.f32.mrf.mxu0
      %v677 = vpop.f32.mrf.mxu0
      %v678 = vadd.f32 0.0, %v677
      %v679 = vpop.f32.mrf.mxu0
      %680 = vmatprep.mubr.bf16.mxu0 0
      %681 = vmatmul.mubr.bf16.gmra.mxu0 %v513
      %v682 = vpop.f32.mrf.mxu0
      %v683 = vadd.f32 0.0, %v682
      %v684 = vpop.f32.mrf.mxu0
      %v685 = vpop.f32.mrf.mxu0
      %v686 = vadd.f32 0.0, %v685
      %v687 = vpop.f32.mrf.mxu0
      %688 = vmatprep.mubr.bf16.mxu0 0
      %689 = vmatmul.mubr.bf16.gmra.mxu0 %v516
      %v690 = vpop.f32.mrf.mxu0
      %v691 = vadd.f32 0.0, %v690
      %v692 = vpop.f32.mrf.mxu0
      %v693 = vpop.f32.mrf.mxu0
      %v694 = vadd.f32 0.0, %v693
      %v695 = vpop.f32.mrf.mxu0
      %696 = vmatprep.mubr.bf16.mxu0 0
      %697 = vmatmul.mubr.bf16.gmra.mxu0 %v519
      %v698 = vpop.f32.mrf.mxu0
      %v699 = vadd.f32 0.0, %v698
      %v700 = vpop.f32.mrf.mxu0
      %v701 = vpop.f32.mrf.mxu0
      %v702 = vadd.f32 0.0, %v701
      %v703 = vpop.f32.mrf.mxu0
      %704 = vmatprep.mubr.bf16.mxu0 0
      %705 = vmatmul.mubr.bf16.gmra.mxu0 %v522
      %v706 = vpop.f32.mrf.mxu0
      %v707 = vadd.f32 0.0, %v706
      %v708 = vpop.f32.mrf.mxu0
      %v709 = vpop.f32.mrf.mxu0
      %v710 = vadd.f32 0.0, %v709
      %v711 = vpop.f32.mrf.mxu0
      %712 = vmatprep.mubr.bf16.mxu0 0
      %713 = vmatmul.mubr.bf16.gmra.mxu0 %v525
      %v714 = vpop.f32.mrf.mxu0
      %v715 = vadd.f32 0.0, %v714
      %v716 = vpop.f32.mrf.mxu0
      %v717 = vpop.f32.mrf.mxu0
      %v718 = vadd.f32 0.0, %v717
      %v719 = vpop.f32.mrf.mxu0
      %720 = vmatprep.mubr.bf16.mxu0 0
      %721 = vmatmul.mubr.bf16.gmra.mxu0 %v528
      %v722 = vpop.f32.mrf.mxu0
      %v723 = vadd.f32 0.0, %v722
      %v724 = vpop.f32.mrf.mxu0
      %v725 = vpop.f32.mrf.mxu0
      %v726 = vadd.f32 0.0, %v725
      %v727 = vpop.f32.mrf.mxu0
      %728 = vmatprep.mubr.bf16.mxu0 0
      %729 = vmatmul.mubr.bf16.gmra.mxu0 %v531
      %v730 = vpop.f32.mrf.mxu0
      %v731 = vadd.f32 0.0, %v730
      %v732 = vpop.f32.mrf.mxu0
      %v733 = vpop.f32.mrf.mxu0
      %v734 = vadd.f32 0.0, %v733
      %v735 = vpop.f32.mrf.mxu0
      %736 = vmatprep.mubr.bf16.mxu0 0
      %737 = vmatmul.mubr.bf16.gmra.mxu0 %v534
      %v738 = vpop.f32.mrf.mxu0
      %v739 = vadd.f32 0.0, %v738
      %v740 = vpop.f32.mrf.mxu0
      %v741 = vpop.f32.mrf.mxu0
      %v742 = vadd.f32 0.0, %v741
      %v743 = vpop.f32.mrf.mxu0
      %744 = vmatprep.mubr.bf16.mxu0 0
      %745 = vmatmul.mubr.bf16.gmra.mxu0 %v537
      %v746 = vpop.f32.mrf.mxu0
      %v747 = vadd.f32 0.0, %v746
      %v748 = vpop.f32.mrf.mxu0
      %v749 = vpop.f32.mrf.mxu0
      %v750 = vadd.f32 0.0, %v749
      %v751 = vpop.f32.mrf.mxu0
      %752 = vmatprep.mubr.bf16.mxu0 0
      %753 = vmatmul.mubr.bf16.gmra.mxu0 %v540
      %v754 = vpop.f32.mrf.mxu0
      %v755 = vadd.f32 0.0, %v754
      %v756 = vpop.f32.mrf.mxu0
      %v757 = vpop.f32.mrf.mxu0
      %v758 = vadd.f32 0.0, %v757
      %v759 = vpop.f32.mrf.mxu0
      %760 = vmatprep.mubr.bf16.mxu0 0
      %761 = vmatmul.mubr.bf16.gmra.mxu0 %v543
      %v762 = vpop.f32.mrf.mxu0
      %v763 = vadd.f32 0.0, %v762
      %v764 = vpop.f32.mrf.mxu0
      %v765 = vpop.f32.mrf.mxu0
      %v766 = vadd.f32 0.0, %v765
      %v767 = vpop.f32.mrf.mxu0
      %768 = vmatprep.mubr.bf16.mxu0 0
      %769 = vmatmul.mubr.bf16.gmra.mxu0 %v546
      %v770 = vpop.f32.mrf.mxu0
      %v771 = vadd.f32 0.0, %v770
      %v772 = vpop.f32.mrf.mxu0
      %v773 = vpop.f32.mrf.mxu0
      %v774 = vadd.f32 0.0, %v773
      %v775 = vpop.f32.mrf.mxu0
      %776 = vmatprep.mubr.bf16.mxu0 0
      %777 = vmatmul.mubr.bf16.gmra.mxu0 %v549
      %v778 = vpop.f32.mrf.mxu0
      %v779 = vadd.f32 0.0, %v778
      %v780 = vpop.f32.mrf.mxu0
      %v781 = vpop.f32.mrf.mxu0
      %v782 = vadd.f32 0.0, %v781
      %v783 = vpop.f32.mrf.mxu0
      %784 = vmatprep.mubr.bf16.mxu0 0
      %785 = vmatmul.mubr.bf16.gmra.mxu0 %v552
      %v786 = vpop.f32.mrf.mxu0
      %v787 = vadd.f32 0.0, %v786
      %v788 = vpop.f32.mrf.mxu0
      %v789 = vpop.f32.mrf.mxu0
      %v790 = vadd.f32 0.0, %v789
      %v791 = vpop.f32.mrf.mxu0
      %792 = vmatprep.mubr.bf16.mxu0 0
      %793 = vmatmul.mubr.bf16.gmra.mxu0 %v555
      %v794 = vpop.f32.mrf.mxu0
      %v795 = vadd.f32 0.0, %v794
      %v796 = vpop.f32.mrf.mxu0
      %v797 = vpop.f32.mrf.mxu0
      %v798 = vadd.f32 0.0, %v797
      %v799 = vpop.f32.mrf.mxu0
      %800 = vmatprep.mubr.bf16.mxu0 0
      %801 = vmatmul.mubr.bf16.gmra.mxu0 %v558
      %v802 = vpop.f32.mrf.mxu0
      %v803 = vadd.f32 0.0, %v802
      %v804 = vpop.f32.mrf.mxu0
      %v805 = vpop.f32.mrf.mxu0
      %v806 = vadd.f32 0.0, %v805
      %v807 = vpop.f32.mrf.mxu0
      %808 = vdwg.mxu0
      %v809 = vld [vmem:[%s2] sm:$0x1]
      %v811 = vlaneseq
      %v812 = vshrl.u32 %v811, 7
      %v813 = vsub.s32 0, %v812
      %v814 = vrot.slane %v809, %v813
      %v816 = vmul.f32 %v595, %v814
      %v817 = vmul.f32 %v598, %v814
      %v818 = vmul.f32 %v603, %v814
      %v819 = vmul.f32 %v606, %v814
      %v820 = vmul.f32 %v611, %v814
      %v821 = vmul.f32 %v614, %v814
      %v822 = vmul.f32 %v619, %v814
      %v823 = vmul.f32 %v622, %v814
      %v824 = vmul.f32 %v627, %v814
      %v825 = vmul.f32 %v630, %v814
      %v826 = vmul.f32 %v635, %v814
      %v827 = vmul.f32 %v638, %v814
      %v828 = vmul.f32 %v643, %v814
      %v829 = vmul.f32 %v646, %v814
      %v830 = vmul.f32 %v651, %v814
      %v831 = vmul.f32 %v654, %v814
      %v832 = vmul.f32 %v659, %v814
      %v833 = vmul.f32 %v662, %v814
      %v834 = vmul.f32 %v667, %v814
      %v835 = vmul.f32 %v670, %v814
      %v836 = vmul.f32 %v675, %v814
      %v837 = vmul.f32 %v678, %v814
      %v838 = vmul.f32 %v683, %v814
      %v839 = vmul.f32 %v686, %v814
      %v840 = vmul.f32 %v691, %v814
      %v841 = vmul.f32 %v694, %v814
      %v842 = vmul.f32 %v699, %v814
      %v843 = vmul.f32 %v702, %v814
      %v844 = vmul.f32 %v707, %v814
      %v845 = vmul.f32 %v710, %v814
      %v846 = vmul.f32 %v715, %v814
      %v847 = vmul.f32 %v718, %v814
      %v848 = vmul.f32 %v723, %v814
      %v849 = vmul.f32 %v726, %v814
      %v850 = vmul.f32 %v731, %v814
      %v851 = vmul.f32 %v734, %v814
      %v852 = vmul.f32 %v739, %v814
      %v853 = vmul.f32 %v742, %v814
      %v854 = vmul.f32 %v747, %v814
      %v855 = vmul.f32 %v750, %v814
      %v856 = vmul.f32 %v755, %v814
      %v857 = vmul.f32 %v758, %v814
      %v858 = vmul.f32 %v763, %v814
      %v859 = vmul.f32 %v766, %v814
      %v860 = vmul.f32 %v771, %v814
      %v861 = vmul.f32 %v774, %v814
      %v862 = vmul.f32 %v779, %v814
      %v863 = vmul.f32 %v782, %v814
      %v864 = vmul.f32 %v787, %v814
      %v865 = vmul.f32 %v790, %v814
      %v866 = vmul.f32 %v795, %v814
      %v867 = vmul.f32 %v798, %v814
      %v868 = vmul.f32 %v803, %v814
      %v869 = vmul.f32 %v806, %v814
      %v870 = vld [vmem:[%s3] sm:$0x1]
      %v872 = vlaneseq
      %v873 = vshrl.u32 %v872, 7
      %v874 = vsub.s32 0, %v873
      %v875 = vrot.slane %v870, %v874
      %v877 = vadd.f32 %v816, %v875
      %v878 = vadd.f32 %v817, %v875
      %v879 = vadd.f32 %v818, %v875
      %v880 = vadd.f32 %v819, %v875
      %v881 = vadd.f32 %v820, %v875
      %v882 = vadd.f32 %v821, %v875
      %v883 = vadd.f32 %v822, %v875
      %v884 = vadd.f32 %v823, %v875
      %v885 = vadd.f32 %v824, %v875
      %v886 = vadd.f32 %v825, %v875
      %v887 = vadd.f32 %v826, %v875
      %v888 = vadd.f32 %v827, %v875
      %v889 = vadd.f32 %v828, %v875
      %v890 = vadd.f32 %v829, %v875
      %v891 = vadd.f32 %v830, %v875
      %v892 = vadd.f32 %v831, %v875
      %v893 = vadd.f32 %v832, %v875
      %v894 = vadd.f32 %v833, %v875
      %v895 = vadd.f32 %v834, %v875
      %v896 = vadd.f32 %v835, %v875
      %v897 = vadd.f32 %v836, %v875
      %v898 = vadd.f32 %v837, %v875
      %v899 = vadd.f32 %v838, %v875
      %v900 = vadd.f32 %v839, %v875
      %v901 = vadd.f32 %v840, %v875
      %v902 = vadd.f32 %v841, %v875
      %v903 = vadd.f32 %v842, %v875
      %v904 = vadd.f32 %v843, %v875
      %v905 = vadd.f32 %v844, %v875
      %v906 = vadd.f32 %v845, %v875
      %v907 = vadd.f32 %v846, %v875
      %v908 = vadd.f32 %v847, %v875
      %v909 = vadd.f32 %v848, %v875
      %v910 = vadd.f32 %v849, %v875
      %v911 = vadd.f32 %v850, %v875
      %v912 = vadd.f32 %v851, %v875
      %v913 = vadd.f32 %v852, %v875
      %v914 = vadd.f32 %v853, %v875
      %v915 = vadd.f32 %v854, %v875
      %v916 = vadd.f32 %v855, %v875
      %v917 = vadd.f32 %v856, %v875
      %v918 = vadd.f32 %v857, %v875
      %v919 = vadd.f32 %v858, %v875
      %v920 = vadd.f32 %v859, %v875
      %v921 = vadd.f32 %v860, %v875
      %v922 = vadd.f32 %v861, %v875
      %v923 = vadd.f32 %v862, %v875
      %v924 = vadd.f32 %v863, %v875
      %v925 = vadd.f32 %v864, %v875
      %v926 = vadd.f32 %v865, %v875
      %v927 = vadd.f32 %v866, %v875
      %v928 = vadd.f32 %v867, %v875
      %v929 = vadd.f32 %v868, %v875
      %v930 = vadd.f32 %v869, %v875
      %v931 = vxor.u32 %v877, 2147483648
      %v932 = vxor.u32 %v878, 2147483648
      %v933 = vxor.u32 %v879, 2147483648
      %v934 = vxor.u32 %v880, 2147483648
      %v935 = vxor.u32 %v881, 2147483648
      %v936 = vxor.u32 %v882, 2147483648
      %v937 = vxor.u32 %v883, 2147483648
      %v938 = vxor.u32 %v884, 2147483648
      %v939 = vxor.u32 %v885, 2147483648
      %v940 = vxor.u32 %v886, 2147483648
      %v941 = vxor.u32 %v887, 2147483648
      %v942 = vxor.u32 %v888, 2147483648
      %v943 = vxor.u32 %v889, 2147483648
      %v944 = vxor.u32 %v890, 2147483648
      %v945 = vxor.u32 %v891, 2147483648
      %v946 = vxor.u32 %v892, 2147483648
      %v947 = vxor.u32 %v893, 2147483648
      %v948 = vxor.u32 %v894, 2147483648
      %v949 = vxor.u32 %v895, 2147483648
      %v950 = vxor.u32 %v896, 2147483648
      %v951 = vxor.u32 %v897, 2147483648
      %v952 = vxor.u32 %v898, 2147483648
      %v953 = vxor.u32 %v899, 2147483648
      %v954 = vxor.u32 %v900, 2147483648
      %v955 = vxor.u32 %v901, 2147483648
      %v956 = vxor.u32 %v902, 2147483648
      %v957 = vxor.u32 %v903, 2147483648
      %v958 = vxor.u32 %v904, 2147483648
      %v959 = vxor.u32 %v905, 2147483648
      %v960 = vxor.u32 %v906, 2147483648
      %v961 = vxor.u32 %v907, 2147483648
      %v962 = vxor.u32 %v908, 2147483648
      %v963 = vxor.u32 %v909, 2147483648
      %v964 = vxor.u32 %v910, 2147483648
      %v965 = vxor.u32 %v911, 2147483648
      %v966 = vxor.u32 %v912, 2147483648
      %v967 = vxor.u32 %v913, 2147483648
      %v968 = vxor.u32 %v914, 2147483648
      %v969 = vxor.u32 %v915, 2147483648
      %v970 = vxor.u32 %v916, 2147483648
      %v971 = vxor.u32 %v917, 2147483648
      %v972 = vxor.u32 %v918, 2147483648
      %v973 = vxor.u32 %v919, 2147483648
      %v974 = vxor.u32 %v920, 2147483648
      %v975 = vxor.u32 %v921, 2147483648
      %v976 = vxor.u32 %v922, 2147483648
      %v977 = vxor.u32 %v923, 2147483648
      %v978 = vxor.u32 %v924, 2147483648
      %v979 = vxor.u32 %v925, 2147483648
      %v980 = vxor.u32 %v926, 2147483648
      %v981 = vxor.u32 %v927, 2147483648
      %v982 = vxor.u32 %v928, 2147483648
      %v983 = vxor.u32 %v929, 2147483648
      %v984 = vxor.u32 %v930, 2147483648
      %v985 = vmul.f32 %v931, 1.442695
      %v986 = vpow.pop %v985
      %v987 = vmul.f32 %v932, 1.442695
      %v988 = vpow.pop %v987
      %v989 = vmul.f32 %v933, 1.442695
      %v990 = vpow.pop %v989
      %v991 = vmul.f32 %v934, 1.442695
      %v992 = vpow.pop %v991
      %v993 = vmul.f32 %v935, 1.442695
      %v994 = vpow.pop %v993
      %v995 = vmul.f32 %v936, 1.442695
      %v996 = vpow.pop %v995
      %v997 = vmul.f32 %v937, 1.442695
      %v998 = vpow.pop %v997
      %v999 = vmul.f32 %v938, 1.442695
      %v1000 = vpow.pop %v999
      %v1001 = vmul.f32 %v939, 1.442695
      %v1002 = vpow.pop %v1001
      %v1003 = vmul.f32 %v940, 1.442695
      %v1004 = vpow.pop %v1003
      %v1005 = vmul.f32 %v941, 1.442695
      %v1006 = vpow.pop %v1005
      %v1007 = vmul.f32 %v942, 1.442695
      %v1008 = vpow.pop %v1007
      %v1009 = vmul.f32 %v943, 1.442695
      %v1010 = vpow.pop %v1009
      %v1011 = vmul.f32 %v944, 1.442695
      %v1012 = vpow.pop %v1011
      %v1013 = vmul.f32 %v945, 1.442695
      %v1014 = vpow.pop %v1013
      %v1015 = vmul.f32 %v946, 1.442695
      %v1016 = vpow.pop %v1015
      %v1017 = vmul.f32 %v947, 1.442695
      %v1018 = vpow.pop %v1017
      %v1019 = vmul.f32 %v948, 1.442695
      %v1020 = vpow.pop %v1019
      %v1021 = vmul.f32 %v949, 1.442695
      %v1022 = vpow.pop %v1021
      %v1023 = vmul.f32 %v950, 1.442695
      %v1024 = vpow.pop %v1023
      %v1025 = vmul.f32 %v951, 1.442695
      %v1026 = vpow.pop %v1025
      %v1027 = vmul.f32 %v952, 1.442695
      %v1028 = vpow.pop %v1027
      %v1029 = vmul.f32 %v953, 1.442695
      %v1030 = vpow.pop %v1029
      %v1031 = vmul.f32 %v954, 1.442695
      %v1032 = vpow.pop %v1031
      %v1033 = vmul.f32 %v955, 1.442695
      %v1034 = vpow.pop %v1033
      %v1035 = vmul.f32 %v956, 1.442695
      %v1036 = vpow.pop %v1035
      %v1037 = vmul.f32 %v957, 1.442695
      %v1038 = vpow.pop %v1037
      %v1039 = vmul.f32 %v958, 1.442695
      %v1040 = vpow.pop %v1039
      %v1041 = vmul.f32 %v959, 1.442695
      %v1042 = vpow.pop %v1041
      %v1043 = vmul.f32 %v960, 1.442695
      %v1044 = vpow.pop %v1043
      %v1045 = vmul.f32 %v961, 1.442695
      %v1046 = vpow.pop %v1045
      %v1047 = vmul.f32 %v962, 1.442695
      %v1048 = vpow.pop %v1047
      %v1049 = vmul.f32 %v963, 1.442695
      %v1050 = vpow.pop %v1049
      %v1051 = vmul.f32 %v964, 1.442695
      %v1052 = vpow.pop %v1051
      %v1053 = vmul.f32 %v965, 1.442695
      %v1054 = vpow.pop %v1053
      %v1055 = vmul.f32 %v966, 1.442695
      %v1056 = vpow.pop %v1055
      %v1057 = vmul.f32 %v967, 1.442695
      %v1058 = vpow.pop %v1057
      %v1059 = vmul.f32 %v968, 1.442695
      %v1060 = vpow.pop %v1059
      %v1061 = vmul.f32 %v969, 1.442695
      %v1062 = vpow.pop %v1061
      %v1063 = vmul.f32 %v970, 1.442695
      %v1064 = vpow.pop %v1063
      %v1065 = vmul.f32 %v971, 1.442695
      %v1066 = vpow.pop %v1065
      %v1067 = vmul.f32 %v972, 1.442695
      %v1068 = vpow.pop %v1067
      %v1069 = vmul.f32 %v973, 1.442695
      %v1070 = vpow.pop %v1069
      %v1071 = vmul.f32 %v974, 1.442695
      %v1072 = vpow.pop %v1071
      %v1073 = vmul.f32 %v975, 1.442695
      %v1074 = vpow.pop %v1073
      %v1075 = vmul.f32 %v976, 1.442695
      %v1076 = vpow.pop %v1075
      %v1077 = vmul.f32 %v977, 1.442695
      %v1078 = vpow.pop %v1077
      %v1079 = vmul.f32 %v978, 1.442695
      %v1080 = vpow.pop %v1079
      %v1081 = vmul.f32 %v979, 1.442695
      %v1082 = vpow.pop %v1081
      %v1083 = vmul.f32 %v980, 1.442695
      %v1084 = vpow.pop %v1083
      %v1085 = vmul.f32 %v981, 1.442695
      %v1086 = vpow.pop %v1085
      %v1087 = vmul.f32 %v982, 1.442695
      %v1088 = vpow.pop %v1087
      %v1089 = vmul.f32 %v983, 1.442695
      %v1090 = vpow.pop %v1089
      %v1091 = vmul.f32 %v984, 1.442695
      %v1092 = vpow.pop %v1091
      %v1093 = vadd.f32 %v986, 1.0
      %v1094 = vadd.f32 %v988, 1.0
      %v1095 = vadd.f32 %v990, 1.0
      %v1096 = vadd.f32 %v992, 1.0
      %v1097 = vadd.f32 %v994, 1.0
      %v1098 = vadd.f32 %v996, 1.0
      %v1099 = vadd.f32 %v998, 1.0
      %v1100 = vadd.f32 %v1000, 1.0
      %v1101 = vadd.f32 %v1002, 1.0
      %v1102 = vadd.f32 %v1004, 1.0
      %v1103 = vadd.f32 %v1006, 1.0
      %v1104 = vadd.f32 %v1008, 1.0
      %v1105 = vadd.f32 %v1010, 1.0
      %v1106 = vadd.f32 %v1012, 1.0
      %v1107 = vadd.f32 %v1014, 1.0
      %v1108 = vadd.f32 %v1016, 1.0
      %v1109 = vadd.f32 %v1018, 1.0
      %v1110 = vadd.f32 %v1020, 1.0
      %v1111 = vadd.f32 %v1022, 1.0
      %v1112 = vadd.f32 %v1024, 1.0
      %v1113 = vadd.f32 %v1026, 1.0
      %v1114 = vadd.f32 %v1028, 1.0
      %v1115 = vadd.f32 %v1030, 1.0
      %v1116 = vadd.f32 %v1032, 1.0
      %v1117 = vadd.f32 %v1034, 1.0
      %v1118 = vadd.f32 %v1036, 1.0
      %v1119 = vadd.f32 %v1038, 1.0
      %v1120 = vadd.f32 %v1040, 1.0
      %v1121 = vadd.f32 %v1042, 1.0
      %v1122 = vadd.f32 %v1044, 1.0
      %v1123 = vadd.f32 %v1046, 1.0
      %v1124 = vadd.f32 %v1048, 1.0
      %v1125 = vadd.f32 %v1050, 1.0
      %v1126 = vadd.f32 %v1052, 1.0
      %v1127 = vadd.f32 %v1054, 1.0
      %v1128 = vadd.f32 %v1056, 1.0
      %v1129 = vadd.f32 %v1058, 1.0
      %v1130 = vadd.f32 %v1060, 1.0
      %v1131 = vadd.f32 %v1062, 1.0
      %v1132 = vadd.f32 %v1064, 1.0
      %v1133 = vadd.f32 %v1066, 1.0
      %v1134 = vadd.f32 %v1068, 1.0
      %v1135 = vadd.f32 %v1070, 1.0
      %v1136 = vadd.f32 %v1072, 1.0
      %v1137 = vadd.f32 %v1074, 1.0
      %v1138 = vadd.f32 %v1076, 1.0
      %v1139 = vadd.f32 %v1078, 1.0
      %v1140 = vadd.f32 %v1080, 1.0
      %v1141 = vadd.f32 %v1082, 1.0
      %v1142 = vadd.f32 %v1084, 1.0
      %v1143 = vadd.f32 %v1086, 1.0
      %v1144 = vadd.f32 %v1088, 1.0
      %v1145 = vadd.f32 %v1090, 1.0
      %v1146 = vadd.f32 %v1092, 1.0
      %v1147 = vrcp.pop %v1093
      %v1148 = vmul.f32 1.0, %v1147
      %v1149 = vrcp.pop %v1094
      %v1150 = vmul.f32 1.0, %v1149
      %v1151 = vrcp.pop %v1095
      %v1152 = vmul.f32 1.0, %v1151
      %v1153 = vrcp.pop %v1096
      %v1154 = vmul.f32 1.0, %v1153
      %v1155 = vrcp.pop %v1097
      %v1156 = vmul.f32 1.0, %v1155
      %v1157 = vrcp.pop %v1098
      %v1158 = vmul.f32 1.0, %v1157
      %v1159 = vrcp.pop %v1099
      %v1160 = vmul.f32 1.0, %v1159
      %v1161 = vrcp.pop %v1100
      %v1162 = vmul.f32 1.0, %v1161
      %v1163 = vrcp.pop %v1101
      %v1164 = vmul.f32 1.0, %v1163
      %v1165 = vrcp.pop %v1102
      %v1166 = vmul.f32 1.0, %v1165
      %v1167 = vrcp.pop %v1103
      %v1168 = vmul.f32 1.0, %v1167
      %v1169 = vrcp.pop %v1104
      %v1170 = vmul.f32 1.0, %v1169
      %v1171 = vrcp.pop %v1105
      %v1172 = vmul.f32 1.0, %v1171
      %v1173 = vrcp.pop %v1106
      %v1174 = vmul.f32 1.0, %v1173
      %v1175 = vrcp.pop %v1107
      %v1176 = vmul.f32 1.0, %v1175
      %v1177 = vrcp.pop %v1108
      %v1178 = vmul.f32 1.0, %v1177
      %v1179 = vrcp.pop %v1109
      %v1180 = vmul.f32 1.0, %v1179
      %v1181 = vrcp.pop %v1110
      %v1182 = vmul.f32 1.0, %v1181
      %v1183 = vrcp.pop %v1111
      %v1184 = vmul.f32 1.0, %v1183
      %v1185 = vrcp.pop %v1112
      %v1186 = vmul.f32 1.0, %v1185
      %v1187 = vrcp.pop %v1113
      %v1188 = vmul.f32 1.0, %v1187
      %v1189 = vrcp.pop %v1114
      %v1190 = vmul.f32 1.0, %v1189
      %v1191 = vrcp.pop %v1115
      %v1192 = vmul.f32 1.0, %v1191
      %v1193 = vrcp.pop %v1116
      %v1194 = vmul.f32 1.0, %v1193
      %v1195 = vrcp.pop %v1117
      %v1196 = vmul.f32 1.0, %v1195
      %v1197 = vrcp.pop %v1118
      %v1198 = vmul.f32 1.0, %v1197
      %v1199 = vrcp.pop %v1119
      %v1200 = vmul.f32 1.0, %v1199
      %v1201 = vrcp.pop %v1120
      %v1202 = vmul.f32 1.0, %v1201
      %v1203 = vrcp.pop %v1121
      %v1204 = vmul.f32 1.0, %v1203
      %v1205 = vrcp.pop %v1122
      %v1206 = vmul.f32 1.0, %v1205
      %v1207 = vrcp.pop %v1123
      %v1208 = vmul.f32 1.0, %v1207
      %v1209 = vrcp.pop %v1124
      %v1210 = vmul.f32 1.0, %v1209
      %v1211 = vrcp.pop %v1125
      %v1212 = vmul.f32 1.0, %v1211
      %v1213 = vrcp.pop %v1126
      %v1214 = vmul.f32 1.0, %v1213
      %v1215 = vrcp.pop %v1127
      %v1216 = vmul.f32 1.0, %v1215
      %v1217 = vrcp.pop %v1128
      %v1218 = vmul.f32 1.0, %v1217
      %v1219 = vrcp.pop %v1129
      %v1220 = vmul.f32 1.0, %v1219
      %v1221 = vrcp.pop %v1130
      %v1222 = vmul.f32 1.0, %v1221
      %v1223 = vrcp.pop %v1131
      %v1224 = vmul.f32 1.0, %v1223
      %v1225 = vrcp.pop %v1132
      %v1226 = vmul.f32 1.0, %v1225
      %v1227 = vrcp.pop %v1133
      %v1228 = vmul.f32 1.0, %v1227
      %v1229 = vrcp.pop %v1134
      %v1230 = vmul.f32 1.0, %v1229
      %v1231 = vrcp.pop %v1135
      %v1232 = vmul.f32 1.0, %v1231
      %v1233 = vrcp.pop %v1136
      %v1234 = vmul.f32 1.0, %v1233
      %v1235 = vrcp.pop %v1137
      %v1236 = vmul.f32 1.0, %v1235
      %v1237 = vrcp.pop %v1138
      %v1238 = vmul.f32 1.0, %v1237
      %v1239 = vrcp.pop %v1139
      %v1240 = vmul.f32 1.0, %v1239
      %v1241 = vrcp.pop %v1140
      %v1242 = vmul.f32 1.0, %v1241
      %v1243 = vrcp.pop %v1141
      %v1244 = vmul.f32 1.0, %v1243
      %v1245 = vrcp.pop %v1142
      %v1246 = vmul.f32 1.0, %v1245
      %v1247 = vrcp.pop %v1143
      %v1248 = vmul.f32 1.0, %v1247
      %v1249 = vrcp.pop %v1144
      %v1250 = vmul.f32 1.0, %v1249
      %v1251 = vrcp.pop %v1145
      %v1252 = vmul.f32 1.0, %v1251
      %v1253 = vrcp.pop %v1146
      %v1254 = vmul.f32 1.0, %v1253
      %v1255 = vmul.f32 %v877, %v1148
      %v1256 = vmul.f32 %v878, %v1150
      %v1257 = vmul.f32 %v879, %v1152
      %v1258 = vmul.f32 %v880, %v1154
      %v1259 = vmul.f32 %v881, %v1156
      %v1260 = vmul.f32 %v882, %v1158
      %v1261 = vmul.f32 %v883, %v1160
      %v1262 = vmul.f32 %v884, %v1162
      %v1263 = vmul.f32 %v885, %v1164
      %v1264 = vmul.f32 %v886, %v1166
      %v1265 = vmul.f32 %v887, %v1168
      %v1266 = vmul.f32 %v888, %v1170
      %v1267 = vmul.f32 %v889, %v1172
      %v1268 = vmul.f32 %v890, %v1174
      %v1269 = vmul.f32 %v891, %v1176
      %v1270 = vmul.f32 %v892, %v1178
      %v1271 = vmul.f32 %v893, %v1180
      %v1272 = vmul.f32 %v894, %v1182
      %v1273 = vmul.f32 %v895, %v1184
      %v1274 = vmul.f32 %v896, %v1186
      %v1275 = vmul.f32 %v897, %v1188
      %v1276 = vmul.f32 %v898, %v1190
      %v1277 = vmul.f32 %v899, %v1192
      %v1278 = vmul.f32 %v900, %v1194
      %v1279 = vmul.f32 %v901, %v1196
      %v1280 = vmul.f32 %v902, %v1198
      %v1281 = vmul.f32 %v903, %v1200
      %v1282 = vmul.f32 %v904, %v1202
      %v1283 = vmul.f32 %v905, %v1204
      %v1284 = vmul.f32 %v906, %v1206
      %v1285 = vmul.f32 %v907, %v1208
      %v1286 = vmul.f32 %v908, %v1210
      %v1287 = vmul.f32 %v909, %v1212
      %v1288 = vmul.f32 %v910, %v1214
      %v1289 = vmul.f32 %v911, %v1216
      %v1290 = vmul.f32 %v912, %v1218
      %v1291 = vmul.f32 %v913, %v1220
      %v1292 = vmul.f32 %v914, %v1222
      %v1293 = vmul.f32 %v915, %v1224
      %v1294 = vmul.f32 %v916, %v1226
      %v1295 = vmul.f32 %v917, %v1228
      %v1296 = vmul.f32 %v918, %v1230
      %v1297 = vmul.f32 %v919, %v1232
      %v1298 = vmul.f32 %v920, %v1234
      %v1299 = vmul.f32 %v921, %v1236
      %v1300 = vmul.f32 %v922, %v1238
      %v1301 = vmul.f32 %v923, %v1240
      %v1302 = vmul.f32 %v924, %v1242
      %v1303 = vmul.f32 %v925, %v1244
      %v1304 = vmul.f32 %v926, %v1246
      %v1305 = vmul.f32 %v927, %v1248
      %v1306 = vmul.f32 %v928, %v1250
      %v1307 = vmul.f32 %v929, %v1252
      %v1308 = vmul.f32 %v930, %v1254
      %v1309 = vstv %s386
      %v1310 = vadd.s32 %v1309, 1
      %v1311 = vadd.s32 %v1309, 2
      %v1312 = vadd.s32 %v1309, 3
      %v1313 = vadd.s32 %v1309, 4
      %v1314 = vadd.s32 %v1309, 5
      %v1315 = vadd.s32 %v1309, 6
      %v1316 = vadd.s32 %v1309, 7
      %v1317 = vadd.s32 %v1309, 8
      %v1318 = vadd.s32 %v1309, 9
      %v1319 = vadd.s32 %v1309, 10
      %v1320 = vadd.s32 %v1309, 11
      %v1321 = vadd.s32 %v1309, 12
      %v1322 = vadd.s32 %v1309, 13
      %v1323 = vadd.s32 %v1309, 14
      %v1324 = vadd.s32 %v1309, 15
      %v1325 = vadd.s32 %v1309, 16
      %v1326 = vadd.s32 %v1309, 17
      %v1327 = vlaneseq
      %v1328 = vshrl.u32 %v1327, 7
      %v1329 = vadd.s32 %v1328, 8
      %v1330 = vadd.s32 %v1328, 16
      %vm1331 = vcmp.ge.s32.totalorder %v1309, 1
      %vm1332 = vcmp.ge.s32.totalorder %v1310, 1
      %vm1333 = vcmp.ge.s32.totalorder %v1311, 1
      %vm1334 = vcmp.ge.s32.totalorder %v1312, 1
      %vm1335 = vcmp.ge.s32.totalorder %v1313, 1
      %vm1336 = vcmp.ge.s32.totalorder %v1314, 1
      %vm1337 = vcmp.ge.s32.totalorder %v1315, 1
      %vm1338 = vcmp.ge.s32.totalorder %v1316, 1
      %vm1339 = vcmp.ge.s32.totalorder %v1317, 1
      %vm1340 = vcmp.ge.s32.totalorder %v1318, 1
      %vm1341 = vcmp.ge.s32.totalorder %v1319, 1
      %vm1342 = vcmp.ge.s32.totalorder %v1320, 1
      %vm1343 = vcmp.ge.s32.totalorder %v1321, 1
      %vm1344 = vcmp.ge.s32.totalorder %v1322, 1
      %vm1345 = vcmp.ge.s32.totalorder %v1323, 1
      %vm1346 = vcmp.ge.s32.totalorder %v1324, 1
      %vm1347 = vcmp.ge.s32.totalorder %v1325, 1
      %vm1348 = vcmp.ge.s32.totalorder %v1326, 1
      %vm1349 = vcmp.le.s32.totalorder %v1309, 16
      %vm1350 = vcmp.le.s32.totalorder %v1310, 16
      %vm1351 = vcmp.le.s32.totalorder %v1311, 16
      %vm1352 = vcmp.le.s32.totalorder %v1312, 16
      %vm1353 = vcmp.le.s32.totalorder %v1313, 16
      %vm1354 = vcmp.le.s32.totalorder %v1314, 16
      %vm1355 = vcmp.le.s32.totalorder %v1315, 16
      %vm1356 = vcmp.le.s32.totalorder %v1316, 16
      %vm1357 = vcmp.le.s32.totalorder %v1317, 16
      %vm1358 = vcmp.le.s32.totalorder %v1318, 16
      %vm1359 = vcmp.le.s32.totalorder %v1319, 16
      %vm1360 = vcmp.le.s32.totalorder %v1320, 16
      %vm1361 = vcmp.le.s32.totalorder %v1321, 16
      %vm1362 = vcmp.le.s32.totalorder %v1322, 16
      %vm1363 = vcmp.le.s32.totalorder %v1323, 16
      %vm1364 = vcmp.le.s32.totalorder %v1324, 16
      %vm1365 = vcmp.le.s32.totalorder %v1325, 16
      %vm1366 = vcmp.le.s32.totalorder %v1326, 16
      %vm1367 = vmand %vm1331, %vm1349
      %vm1368 = vmand %vm1332, %vm1350
      %vm1369 = vmand %vm1333, %vm1351
      %vm1370 = vmand %vm1334, %vm1352
      %vm1371 = vmand %vm1335, %vm1353
      %vm1372 = vmand %vm1336, %vm1354
      %vm1373 = vmand %vm1337, %vm1355
      %vm1374 = vmand %vm1338, %vm1356
      %vm1375 = vmand %vm1339, %vm1357
      %vm1376 = vmand %vm1340, %vm1358
      %vm1377 = vmand %vm1341, %vm1359
      %vm1378 = vmand %vm1342, %vm1360
      %vm1379 = vmand %vm1343, %vm1361
      %vm1380 = vmand %vm1344, %vm1362
      %vm1381 = vmand %vm1345, %vm1363
      %vm1382 = vmand %vm1346, %vm1364
      %vm1383 = vmand %vm1347, %vm1365
      %vm1384 = vmand %vm1348, %vm1366
      %vm1385 = vcmp.ge.s32.totalorder %v1328, 1
      %vm1386 = vcmp.ge.s32.totalorder %v1329, 1
      %vm1387 = vcmp.ge.s32.totalorder %v1330, 1
      %vm1388 = vmand %vm1367, %vm1385
      %vm1389 = vmand %vm1367, %vm1386
      %vm1390 = vmand %vm1367, %vm1387
      %vm1391 = vmand %vm1368, %vm1385
      %vm1392 = vmand %vm1368, %vm1386
      %vm1393 = vmand %vm1368, %vm1387
      %vm1394 = vmand %vm1369, %vm1385
      %vm1395 = vmand %vm1369, %vm1386
      %vm1396 = vmand %vm1369, %vm1387
      %vm1397 = vmand %vm1370, %vm1385
      %vm1398 = vmand %vm1370, %vm1386
      %vm1399 = vmand %vm1370, %vm1387
      %vm1400 = vmand %vm1371, %vm1385
      %vm1401 = vmand %vm1371, %vm1386
      %vm1402 = vmand %vm1371, %vm1387
      %vm1403 = vmand %vm1372, %vm1385
      %vm1404 = vmand %vm1372, %vm1386
      %vm1405 = vmand %vm1372, %vm1387
      %vm1406 = vmand %vm1373, %vm1385
      %vm1407 = vmand %vm1373, %vm1386
      %vm1408 = vmand %vm1373, %vm1387
      %vm1409 = vmand %vm1374, %vm1385
      %vm1410 = vmand %vm1374, %vm1386
      %vm1411 = vmand %vm1374, %vm1387
      %vm1412 = vmand %vm1375, %vm1385
      %vm1413 = vmand %vm1375, %vm1386
      %vm1414 = vmand %vm1375, %vm1387
      %vm1415 = vmand %vm1376, %vm1385
      %vm1416 = vmand %vm1376, %vm1386
      %vm1417 = vmand %vm1376, %vm1387
      %vm1418 = vmand %vm1377, %vm1385
      %vm1419 = vmand %vm1377, %vm1386
      %vm1420 = vmand %vm1377, %vm1387
      %vm1421 = vmand %vm1378, %vm1385
      %vm1422 = vmand %vm1378, %vm1386
      %vm1423 = vmand %vm1378, %vm1387
      %vm1424 = vmand %vm1379, %vm1385
      %vm1425 = vmand %vm1379, %vm1386
      %vm1426 = vmand %vm1379, %vm1387
      %vm1427 = vmand %vm1380, %vm1385
      %vm1428 = vmand %vm1380, %vm1386
      %vm1429 = vmand %vm1380, %vm1387
      %vm1430 = vmand %vm1381, %vm1385
      %vm1431 = vmand %vm1381, %vm1386
      %vm1432 = vmand %vm1381, %vm1387
      %vm1433 = vmand %vm1382, %vm1385
      %vm1434 = vmand %vm1382, %vm1386
      %vm1435 = vmand %vm1382, %vm1387
      %vm1436 = vmand %vm1383, %vm1385
      %vm1437 = vmand %vm1383, %vm1386
      %vm1438 = vmand %vm1383, %vm1387
      %vm1439 = vmand %vm1384, %vm1385
      %vm1440 = vmand %vm1384, %vm1386
      %vm1441 = vmand %vm1384, %vm1387
      %vm1442 = vcmp.le.s32.totalorder %v1328, 16
      %vm1443 = vcmp.le.s32.totalorder %v1329, 16
      %vm1444 = vcmp.le.s32.totalorder %v1330, 16
      %vm1445 = vmand %vm1388, %vm1442
      %vm1446 = vmand %vm1389, %vm1443
      %vm1447 = vmand %vm1390, %vm1444
      %vm1448 = vmand %vm1391, %vm1442
      %vm1449 = vmand %vm1392, %vm1443
      %vm1450 = vmand %vm1393, %vm1444
      %vm1451 = vmand %vm1394, %vm1442
      %vm1452 = vmand %vm1395, %vm1443
      %vm1453 = vmand %vm1396, %vm1444
      %vm1454 = vmand %vm1397, %vm1442
      %vm1455 = vmand %vm1398, %vm1443
      %vm1456 = vmand %vm1399, %vm1444
      %vm1457 = vmand %vm1400, %vm1442
      %vm1458 = vmand %vm1401, %vm1443
      %vm1459 = vmand %vm1402, %vm1444
      %vm1460 = vmand %vm1403, %vm1442
      %vm1461 = vmand %vm1404, %vm1443
      %vm1462 = vmand %vm1405, %vm1444
      %vm1463 = vmand %vm1406, %vm1442
      %vm1464 = vmand %vm1407, %vm1443
      %vm1465 = vmand %vm1408, %vm1444
      %vm1466 = vmand %vm1409, %vm1442
      %vm1467 = vmand %vm1410, %vm1443
      %vm1468 = vmand %vm1411, %vm1444
      %vm1469 = vmand %vm1412, %vm1442
      %vm1470 = vmand %vm1413, %vm1443
      %vm1471 = vmand %vm1414, %vm1444
      %vm1472 = vmand %vm1415, %vm1442
      %vm1473 = vmand %vm1416, %vm1443
      %vm1474 = vmand %vm1417, %vm1444
      %vm1475 = vmand %vm1418, %vm1442
      %vm1476 = vmand %vm1419, %vm1443
      %vm1477 = vmand %vm1420, %vm1444
      %vm1478 = vmand %vm1421, %vm1442
      %vm1479 = vmand %vm1422, %vm1443
      %vm1480 = vmand %vm1423, %vm1444
      %vm1481 = vmand %vm1424, %vm1442
      %vm1482 = vmand %vm1425, %vm1443
      %vm1483 = vmand %vm1426, %vm1444
      %vm1484 = vmand %vm1427, %vm1442
      %vm1485 = vmand %vm1428, %vm1443
      %vm1486 = vmand %vm1429, %vm1444
      %vm1487 = vmand %vm1430, %vm1442
      %vm1488 = vmand %vm1431, %vm1443
      %vm1489 = vmand %vm1432, %vm1444
      %vm1490 = vmand %vm1433, %vm1442
      %vm1491 = vmand %vm1434, %vm1443
      %vm1492 = vmand %vm1435, %vm1444
      %vm1493 = vmand %vm1436, %vm1442
      %vm1494 = vmand %vm1437, %vm1443
      %vm1495 = vmand %vm1438, %vm1444
      %vm1496 = vmand %vm1439, %vm1442
      %vm1497 = vmand %vm1440, %vm1443
      %vm1498 = vmand %vm1441, %vm1444
      %v1499 = vsel %vm1445, 1, 0
      %v1500 = vsel %vm1446, 1, 0
      %v1501 = vsel %vm1447, 1, 0
      %v1502 = vsel %vm1448, 1, 0
      %v1503 = vsel %vm1449, 1, 0
      %v1504 = vsel %vm1450, 1, 0
      %v1505 = vsel %vm1451, 1, 0
      %v1506 = vsel %vm1452, 1, 0
      %v1507 = vsel %vm1453, 1, 0
      %v1508 = vsel %vm1454, 1, 0
      %v1509 = vsel %vm1455, 1, 0
      %v1510 = vsel %vm1456, 1, 0
      %v1511 = vsel %vm1457, 1, 0
      %v1512 = vsel %vm1458, 1, 0
      %v1513 = vsel %vm1459, 1, 0
      %v1514 = vsel %vm1460, 1, 0
      %v1515 = vsel %vm1461, 1, 0
      %v1516 = vsel %vm1462, 1, 0
      %v1517 = vsel %vm1463, 1, 0
      %v1518 = vsel %vm1464, 1, 0
      %v1519 = vsel %vm1465, 1, 0
      %v1520 = vsel %vm1466, 1, 0
      %v1521 = vsel %vm1467, 1, 0
      %v1522 = vsel %vm1468, 1, 0
      %v1523 = vsel %vm1469, 1, 0
      %v1524 = vsel %vm1470, 1, 0
      %v1525 = vsel %vm1471, 1, 0
      %v1526 = vsel %vm1472, 1, 0
      %v1527 = vsel %vm1473, 1, 0
      %v1528 = vsel %vm1474, 1, 0
      %v1529 = vsel %vm1475, 1, 0
      %v1530 = vsel %vm1476, 1, 0
      %v1531 = vsel %vm1477, 1, 0
      %v1532 = vsel %vm1478, 1, 0
      %v1533 = vsel %vm1479, 1, 0
      %v1534 = vsel %vm1480, 1, 0
      %v1535 = vsel %vm1481, 1, 0
      %v1536 = vsel %vm1482, 1, 0
      %v1537 = vsel %vm1483, 1, 0
      %v1538 = vsel %vm1484, 1, 0
      %v1539 = vsel %vm1485, 1, 0
      %v1540 = vsel %vm1486, 1, 0
      %v1541 = vsel %vm1487, 1, 0
      %v1542 = vsel %vm1488, 1, 0
      %v1543 = vsel %vm1489, 1, 0
      %v1544 = vsel %vm1490, 1, 0
      %v1545 = vsel %vm1491, 1, 0
      %v1546 = vsel %vm1492, 1, 0
      %v1547 = vsel %vm1493, 1, 0
      %v1548 = vsel %vm1494, 1, 0
      %v1549 = vsel %vm1495, 1, 0
      %v1550 = vsel %vm1496, 1, 0
      %v1551 = vsel %vm1497, 1, 0
      %v1552 = vsel %vm1498, 1, 0
      %vm1553 = vcmp.eq.s32.totalorder %v1499, 1
      %vm1554 = vcmp.eq.s32.totalorder %v1500, 1
      %vm1555 = vcmp.eq.s32.totalorder %v1501, 1
      %vm1556 = vcmp.eq.s32.totalorder %v1502, 1
      %vm1557 = vcmp.eq.s32.totalorder %v1503, 1
      %vm1558 = vcmp.eq.s32.totalorder %v1504, 1
      %vm1559 = vcmp.eq.s32.totalorder %v1505, 1
      %vm1560 = vcmp.eq.s32.totalorder %v1506, 1
      %vm1561 = vcmp.eq.s32.totalorder %v1507, 1
      %vm1562 = vcmp.eq.s32.totalorder %v1508, 1
      %vm1563 = vcmp.eq.s32.totalorder %v1509, 1
      %vm1564 = vcmp.eq.s32.totalorder %v1510, 1
      %vm1565 = vcmp.eq.s32.totalorder %v1511, 1
      %vm1566 = vcmp.eq.s32.totalorder %v1512, 1
      %vm1567 = vcmp.eq.s32.totalorder %v1513, 1
      %vm1568 = vcmp.eq.s32.totalorder %v1514, 1
      %vm1569 = vcmp.eq.s32.totalorder %v1515, 1
      %vm1570 = vcmp.eq.s32.totalorder %v1516, 1
      %vm1571 = vcmp.eq.s32.totalorder %v1517, 1
      %vm1572 = vcmp.eq.s32.totalorder %v1518, 1
      %vm1573 = vcmp.eq.s32.totalorder %v1519, 1
      %vm1574 = vcmp.eq.s32.totalorder %v1520, 1
      %vm1575 = vcmp.eq.s32.totalorder %v1521, 1
      %vm1576 = vcmp.eq.s32.totalorder %v1522, 1
      %vm1577 = vcmp.eq.s32.totalorder %v1523, 1
      %vm1578 = vcmp.eq.s32.totalorder %v1524, 1
      %vm1579 = vcmp.eq.s32.totalorder %v1525, 1
      %vm1580 = vcmp.eq.s32.totalorder %v1526, 1
      %vm1581 = vcmp.eq.s32.totalorder %v1527, 1
      %vm1582 = vcmp.eq.s32.totalorder %v1528, 1
      %vm1583 = vcmp.eq.s32.totalorder %v1529, 1
      %vm1584 = vcmp.eq.s32.totalorder %v1530, 1
      %vm1585 = vcmp.eq.s32.totalorder %v1531, 1
      %vm1586 = vcmp.eq.s32.totalorder %v1532, 1
      %vm1587 = vcmp.eq.s32.totalorder %v1533, 1
      %vm1588 = vcmp.eq.s32.totalorder %v1534, 1
      %vm1589 = vcmp.eq.s32.totalorder %v1535, 1
      %vm1590 = vcmp.eq.s32.totalorder %v1536, 1
      %vm1591 = vcmp.eq.s32.totalorder %v1537, 1
      %vm1592 = vcmp.eq.s32.totalorder %v1538, 1
      %vm1593 = vcmp.eq.s32.totalorder %v1539, 1
      %vm1594 = vcmp.eq.s32.totalorder %v1540, 1
      %vm1595 = vcmp.eq.s32.totalorder %v1541, 1
      %vm1596 = vcmp.eq.s32.totalorder %v1542, 1
      %vm1597 = vcmp.eq.s32.totalorder %v1543, 1
      %vm1598 = vcmp.eq.s32.totalorder %v1544, 1
      %vm1599 = vcmp.eq.s32.totalorder %v1545, 1
      %vm1600 = vcmp.eq.s32.totalorder %v1546, 1
      %vm1601 = vcmp.eq.s32.totalorder %v1547, 1
      %vm1602 = vcmp.eq.s32.totalorder %v1548, 1
      %vm1603 = vcmp.eq.s32.totalorder %v1549, 1
      %vm1604 = vcmp.eq.s32.totalorder %v1550, 1
      %vm1605 = vcmp.eq.s32.totalorder %v1551, 1
      %vm1606 = vcmp.eq.s32.totalorder %v1552, 1
      %v1607 = vsel %vm1553, %v1255, 0.0
      %v1608 = vsel %vm1554, %v1256, 0.0
      %v1609 = vsel %vm1555, %v1257, 0.0
      %v1610 = vsel %vm1556, %v1258, 0.0
      %v1611 = vsel %vm1557, %v1259, 0.0
      %v1612 = vsel %vm1558, %v1260, 0.0
      %v1613 = vsel %vm1559, %v1261, 0.0
      %v1614 = vsel %vm1560, %v1262, 0.0
      %v1615 = vsel %vm1561, %v1263, 0.0
      %v1616 = vsel %vm1562, %v1264, 0.0
      %v1617 = vsel %vm1563, %v1265, 0.0
      %v1618 = vsel %vm1564, %v1266, 0.0
      %v1619 = vsel %vm1565, %v1267, 0.0
      %v1620 = vsel %vm1566, %v1268, 0.0
      %v1621 = vsel %vm1567, %v1269, 0.0
      %v1622 = vsel %vm1568, %v1270, 0.0
      %v1623 = vsel %vm1569, %v1271, 0.0
      %v1624 = vsel %vm1570, %v1272, 0.0
      %v1625 = vsel %vm1571, %v1273, 0.0
      %v1626 = vsel %vm1572, %v1274, 0.0
      %v1627 = vsel %vm1573, %v1275, 0.0
      %v1628 = vsel %vm1574, %v1276, 0.0
      %v1629 = vsel %vm1575, %v1277, 0.0
      %v1630 = vsel %vm1576, %v1278, 0.0
      %v1631 = vsel %vm1577, %v1279, 0.0
      %v1632 = vsel %vm1578, %v1280, 0.0
      %v1633 = vsel %vm1579, %v1281, 0.0
      %v1634 = vsel %vm1580, %v1282, 0.0
      %v1635 = vsel %vm1581, %v1283, 0.0
      %v1636 = vsel %vm1582, %v1284, 0.0
      %v1637 = vsel %vm1583, %v1285, 0.0
      %v1638 = vsel %vm1584, %v1286, 0.0
      %v1639 = vsel %vm1585, %v1287, 0.0
      %v1640 = vsel %vm1586, %v1288, 0.0
      %v1641 = vsel %vm1587, %v1289, 0.0
      %v1642 = vsel %vm1588, %v1290, 0.0
      %v1643 = vsel %vm1589, %v1291, 0.0
      %v1644 = vsel %vm1590, %v1292, 0.0
      %v1645 = vsel %vm1591, %v1293, 0.0
      %v1646 = vsel %vm1592, %v1294, 0.0
      %v1647 = vsel %vm1593, %v1295, 0.0
      %v1648 = vsel %vm1594, %v1296, 0.0
      %v1649 = vsel %vm1595, %v1297, 0.0
      %v1650 = vsel %vm1596, %v1298, 0.0
      %v1651 = vsel %vm1597, %v1299, 0.0
      %v1652 = vsel %vm1598, %v1300, 0.0
      %v1653 = vsel %vm1599, %v1301, 0.0
      %v1654 = vsel %vm1600, %v1302, 0.0
      %v1655 = vsel %vm1601, %v1303, 0.0
      %v1656 = vsel %vm1602, %v1304, 0.0
      %v1657 = vsel %vm1603, %v1305, 0.0
      %v1658 = vsel %vm1604, %v1306, 0.0
      %v1659 = vsel %vm1605, %v1307, 0.0
      %v1660 = vsel %vm1606, %v1308, 0.0
      %v1661 = vld [vmem:[%s4] sm:$0xff]
      %v1662 = vld [vmem:[%s4 + $0x8] sm:$0x1]
      %v1663 = vlaneseq
      %v1664 = vshrl.u32 %v1663, 7
      %v1665 = vsub.s32 0, %v1664
      %v1666 = vrot.slane %v1661, %v1665
      %v1667 = vmul.f32 %v1607, %v1666
      %v1668 = vmul.f32 %v1608, %v1666
      %v1669 = vmul.f32 %v1610, %v1666
      %v1670 = vmul.f32 %v1611, %v1666
      %v1671 = vmul.f32 %v1613, %v1666
      %v1672 = vmul.f32 %v1614, %v1666
      %v1673 = vmul.f32 %v1616, %v1666
      %v1674 = vmul.f32 %v1617, %v1666
      %v1675 = vmul.f32 %v1619, %v1666
      %v1676 = vmul.f32 %v1620, %v1666
      %v1677 = vmul.f32 %v1622, %v1666
      %v1678 = vmul.f32 %v1623, %v1666
      %v1679 = vmul.f32 %v1625, %v1666
      %v1680 = vmul.f32 %v1626, %v1666
      %v1681 = vmul.f32 %v1628, %v1666
      %v1682 = vmul.f32 %v1629, %v1666
      %v1683 = vmul.f32 %v1631, %v1666
      %v1684 = vmul.f32 %v1632, %v1666
      %v1685 = vmul.f32 %v1634, %v1666
      %v1686 = vmul.f32 %v1635, %v1666
      %v1687 = vmul.f32 %v1637, %v1666
      %v1688 = vmul.f32 %v1638, %v1666
      %v1689 = vmul.f32 %v1640, %v1666
      %v1690 = vmul.f32 %v1641, %v1666
      %v1691 = vmul.f32 %v1643, %v1666
      %v1692 = vmul.f32 %v1644, %v1666
      %v1693 = vmul.f32 %v1646, %v1666
      %v1694 = vmul.f32 %v1647, %v1666
      %v1695 = vmul.f32 %v1649, %v1666
      %v1696 = vmul.f32 %v1650, %v1666
      %v1697 = vmul.f32 %v1652, %v1666
      %v1698 = vmul.f32 %v1653, %v1666
      %v1699 = vlaneseq
      %v1700 = vshrl.u32 %v1699, 7
      %v1701 = vsub.s32 1, %v1700
      %v1702 = vrot.slane %v1661, %v1701
      %v1703 = vmul.f32 %v1607, %v1702
      %v1704 = vmul.f32 %v1608, %v1702
      %v1705 = vmul.f32 %v1609, %v1702
      %v1706 = vmul.f32 %v1610, %v1702
      %v1707 = vmul.f32 %v1611, %v1702
      %v1708 = vmul.f32 %v1612, %v1702
      %v1709 = vmul.f32 %v1613, %v1702
      %v1710 = vmul.f32 %v1614, %v1702
      %v1711 = vmul.f32 %v1615, %v1702
      %v1712 = vmul.f32 %v1616, %v1702
      %v1713 = vmul.f32 %v1617, %v1702
      %v1714 = vmul.f32 %v1618, %v1702
      %v1715 = vmul.f32 %v1619, %v1702
      %v1716 = vmul.f32 %v1620, %v1702
      %v1717 = vmul.f32 %v1621, %v1702
      %v1718 = vmul.f32 %v1622, %v1702
      %v1719 = vmul.f32 %v1623, %v1702
      %v1720 = vmul.f32 %v1624, %v1702
      %v1721 = vmul.f32 %v1625, %v1702
      %v1722 = vmul.f32 %v1626, %v1702
      %v1723 = vmul.f32 %v1627, %v1702
      %v1724 = vmul.f32 %v1628, %v1702
      %v1725 = vmul.f32 %v1629, %v1702
      %v1726 = vmul.f32 %v1630, %v1702
      %v1727 = vmul.f32 %v1631, %v1702
      %v1728 = vmul.f32 %v1632, %v1702
      %v1729 = vmul.f32 %v1633, %v1702
      %v1730 = vmul.f32 %v1634, %v1702
      %v1731 = vmul.f32 %v1635, %v1702
      %v1732 = vmul.f32 %v1636, %v1702
      %v1733 = vmul.f32 %v1637, %v1702
      %v1734 = vmul.f32 %v1638, %v1702
      %v1735 = vmul.f32 %v1639, %v1702
      %v1736 = vmul.f32 %v1640, %v1702
      %v1737 = vmul.f32 %v1641, %v1702
      %v1738 = vmul.f32 %v1642, %v1702
      %v1739 = vmul.f32 %v1643, %v1702
      %v1740 = vmul.f32 %v1644, %v1702
      %v1741 = vmul.f32 %v1645, %v1702
      %v1742 = vmul.f32 %v1646, %v1702
      %v1743 = vmul.f32 %v1647, %v1702
      %v1744 = vmul.f32 %v1648, %v1702
      %v1745 = vmul.f32 %v1649, %v1702
      %v1746 = vmul.f32 %v1650, %v1702
      %v1747 = vmul.f32 %v1651, %v1702
      %v1748 = vmul.f32 %v1652, %v1702
      %v1749 = vmul.f32 %v1653, %v1702
      %v1750 = vmul.f32 %v1654, %v1702
      %vm1799 = vcmask 1046528
      %v1800 = vrot.slane %v1703, 1
      %v1801 = vrot.slane %v1704, 1
      %v1802 = vsel %vm1799, %v1800, %v1801
      %v1803 = vrot.slane %v1705, 1
      %v1804 = vsel %vm1799, %v1801, %v1803
      %v1805 = vrot.slane %v1706, 1
      %v1806 = vrot.slane %v1707, 1
      %v1807 = vsel %vm1799, %v1805, %v1806
      %v1808 = vrot.slane %v1708, 1
      %v1809 = vsel %vm1799, %v1806, %v1808
      %v1810 = vrot.slane %v1709, 1
      %v1811 = vrot.slane %v1710, 1
      %v1812 = vsel %vm1799, %v1810, %v1811
      %v1813 = vrot.slane %v1711, 1
      %v1814 = vsel %vm1799, %v1811, %v1813
      %v1815 = vrot.slane %v1712, 1
      %v1816 = vrot.slane %v1713, 1
      %v1817 = vsel %vm1799, %v1815, %v1816
      %v1818 = vrot.slane %v1714, 1
      %v1819 = vsel %vm1799, %v1816, %v1818
      %v1820 = vrot.slane %v1715, 1
      %v1821 = vrot.slane %v1716, 1
      %v1822 = vsel %vm1799, %v1820, %v1821
      %v1823 = vrot.slane %v1717, 1
      %v1824 = vsel %vm1799, %v1821, %v1823
      %v1825 = vrot.slane %v1718, 1
      %v1826 = vrot.slane %v1719, 1
      %v1827 = vsel %vm1799, %v1825, %v1826
      %v1828 = vrot.slane %v1720, 1
      %v1829 = vsel %vm1799, %v1826, %v1828
      %v1830 = vrot.slane %v1721, 1
      %v1831 = vrot.slane %v1722, 1
      %v1832 = vsel %vm1799, %v1830, %v1831
      %v1833 = vrot.slane %v1723, 1
      %v1834 = vsel %vm1799, %v1831, %v1833
      %v1835 = vrot.slane %v1724, 1
      %v1836 = vrot.slane %v1725, 1
      %v1837 = vsel %vm1799, %v1835, %v1836
      %v1838 = vrot.slane %v1726, 1
      %v1839 = vsel %vm1799, %v1836, %v1838
      %v1840 = vrot.slane %v1727, 1
      %v1841 = vrot.slane %v1728, 1
      %v1842 = vsel %vm1799, %v1840, %v1841
      %v1843 = vrot.slane %v1729, 1
      %v1844 = vsel %vm1799, %v1841, %v1843
      %v1845 = vrot.slane %v1730, 1
      %v1846 = vrot.slane %v1731, 1
      %v1847 = vsel %vm1799, %v1845, %v1846
      %v1848 = vrot.slane %v1732, 1
      %v1849 = vsel %vm1799, %v1846, %v1848
      %v1850 = vrot.slane %v1733, 1
      %v1851 = vrot.slane %v1734, 1
      %v1852 = vsel %vm1799, %v1850, %v1851
      %v1853 = vrot.slane %v1735, 1
      %v1854 = vsel %vm1799, %v1851, %v1853
      %v1855 = vrot.slane %v1736, 1
      %v1856 = vrot.slane %v1737, 1
      %v1857 = vsel %vm1799, %v1855, %v1856
      %v1858 = vrot.slane %v1738, 1
      %v1859 = vsel %vm1799, %v1856, %v1858
      %v1860 = vrot.slane %v1739, 1
      %v1861 = vrot.slane %v1740, 1
      %v1862 = vsel %vm1799, %v1860, %v1861
      %v1863 = vrot.slane %v1741, 1
      %v1864 = vsel %vm1799, %v1861, %v1863
      %v1865 = vrot.slane %v1742, 1
      %v1866 = vrot.slane %v1743, 1
      %v1867 = vsel %vm1799, %v1865, %v1866
      %v1868 = vrot.slane %v1744, 1
      %v1869 = vsel %vm1799, %v1866, %v1868
      %v1870 = vrot.slane %v1745, 1
      %v1871 = vrot.slane %v1746, 1
      %v1872 = vsel %vm1799, %v1870, %v1871
      %v1873 = vrot.slane %v1747, 1
      %v1874 = vsel %vm1799, %v1871, %v1873
      %v1875 = vrot.slane %v1748, 1
      %v1876 = vrot.slane %v1749, 1
      %v1877 = vsel %vm1799, %v1875, %v1876
      %v1878 = vrot.slane %v1750, 1
      %v1879 = vsel %vm1799, %v1876, %v1878
      %v1912 = vadd.f32 %v1667, %v1802
      %v1913 = vadd.f32 %v1668, %v1804
      %v1914 = vadd.f32 %v1669, %v1807
      %v1915 = vadd.f32 %v1670, %v1809
      %v1916 = vadd.f32 %v1671, %v1812
      %v1917 = vadd.f32 %v1672, %v1814
      %v1918 = vadd.f32 %v1673, %v1817
      %v1919 = vadd.f32 %v1674, %v1819
      %v1920 = vadd.f32 %v1675, %v1822
      %v1921 = vadd.f32 %v1676, %v1824
      %v1922 = vadd.f32 %v1677, %v1827
      %v1923 = vadd.f32 %v1678, %v1829
      %v1924 = vadd.f32 %v1679, %v1832
      %v1925 = vadd.f32 %v1680, %v1834
      %v1926 = vadd.f32 %v1681, %v1837
      %v1927 = vadd.f32 %v1682, %v1839
      %v1928 = vadd.f32 %v1683, %v1842
      %v1929 = vadd.f32 %v1684, %v1844
      %v1930 = vadd.f32 %v1685, %v1847
      %v1931 = vadd.f32 %v1686, %v1849
      %v1932 = vadd.f32 %v1687, %v1852
      %v1933 = vadd.f32 %v1688, %v1854
      %v1934 = vadd.f32 %v1689, %v1857
      %v1935 = vadd.f32 %v1690, %v1859
      %v1936 = vadd.f32 %v1691, %v1862
      %v1937 = vadd.f32 %v1692, %v1864
      %v1938 = vadd.f32 %v1693, %v1867
      %v1939 = vadd.f32 %v1694, %v1869
      %v1940 = vadd.f32 %v1695, %v1872
      %v1941 = vadd.f32 %v1696, %v1874
      %v1942 = vadd.f32 %v1697, %v1877
      %v1943 = vadd.f32 %v1698, %v1879
      %v1944 = vlaneseq
      %v1945 = vshrl.u32 %v1944, 7
      %v1946 = vsub.s32 2, %v1945
      %v1947 = vrot.slane %v1661, %v1946
      %v1948 = vmul.f32 %v1607, %v1947
      %v1949 = vmul.f32 %v1608, %v1947
      %v1950 = vmul.f32 %v1609, %v1947
      %v1951 = vmul.f32 %v1610, %v1947
      %v1952 = vmul.f32 %v1611, %v1947
      %v1953 = vmul.f32 %v1612, %v1947
      %v1954 = vmul.f32 %v1613, %v1947
      %v1955 = vmul.f32 %v1614, %v1947
      %v1956 = vmul.f32 %v1615, %v1947
      %v1957 = vmul.f32 %v1616, %v1947
      %v1958 = vmul.f32 %v1617, %v1947
      %v1959 = vmul.f32 %v1618, %v1947
      %v1960 = vmul.f32 %v1619, %v1947
      %v1961 = vmul.f32 %v1620, %v1947
      %v1962 = vmul.f32 %v1621, %v1947
      %v1963 = vmul.f32 %v1622, %v1947
      %v1964 = vmul.f32 %v1623, %v1947
      %v1965 = vmul.f32 %v1624, %v1947
      %v1966 = vmul.f32 %v1625, %v1947
      %v1967 = vmul.f32 %v1626, %v1947
      %v1968 = vmul.f32 %v1627, %v1947
      %v1969 = vmul.f32 %v1628, %v1947
      %v1970 = vmul.f32 %v1629, %v1947
      %v1971 = vmul.f32 %v1630, %v1947
      %v1972 = vmul.f32 %v1631, %v1947
      %v1973 = vmul.f32 %v1632, %v1947
      %v1974 = vmul.f32 %v1633, %v1947
      %v1975 = vmul.f32 %v1634, %v1947
      %v1976 = vmul.f32 %v1635, %v1947
      %v1977 = vmul.f32 %v1636, %v1947
      %v1978 = vmul.f32 %v1637, %v1947
      %v1979 = vmul.f32 %v1638, %v1947
      %v1980 = vmul.f32 %v1639, %v1947
      %v1981 = vmul.f32 %v1640, %v1947
      %v1982 = vmul.f32 %v1641, %v1947
      %v1983 = vmul.f32 %v1642, %v1947
      %v1984 = vmul.f32 %v1643, %v1947
      %v1985 = vmul.f32 %v1644, %v1947
      %v1986 = vmul.f32 %v1645, %v1947
      %v1987 = vmul.f32 %v1646, %v1947
      %v1988 = vmul.f32 %v1647, %v1947
      %v1989 = vmul.f32 %v1648, %v1947
      %v1990 = vmul.f32 %v1649, %v1947
      %v1991 = vmul.f32 %v1650, %v1947
      %v1992 = vmul.f32 %v1651, %v1947
      %v1993 = vmul.f32 %v1652, %v1947
      %v1994 = vmul.f32 %v1653, %v1947
      %v1995 = vmul.f32 %v1654, %v1947
      %vm2044 = vcmask 1045504
      %v2045 = vrot.slane %v1948, 2
      %v2046 = vrot.slane %v1949, 2
      %v2047 = vsel %vm2044, %v2045, %v2046
      %v2048 = vrot.slane %v1950, 2
      %v2049 = vsel %vm2044, %v2046, %v2048
      %v2050 = vrot.slane %v1951, 2
      %v2051 = vrot.slane %v1952, 2
      %v2052 = vsel %vm2044, %v2050, %v2051
      %v2053 = vrot.slane %v1953, 2
      %v2054 = vsel %vm2044, %v2051, %v2053
      %v2055 = vrot.slane %v1954, 2
      %v2056 = vrot.slane %v1955, 2
      %v2057 = vsel %vm2044, %v2055, %v2056
      %v2058 = vrot.slane %v1956, 2
      %v2059 = vsel %vm2044, %v2056, %v2058
      %v2060 = vrot.slane %v1957, 2
      %v2061 = vrot.slane %v1958, 2
      %v2062 = vsel %vm2044, %v2060, %v2061
      %v2063 = vrot.slane %v1959, 2
      %v2064 = vsel %vm2044, %v2061, %v2063
      %v2065 = vrot.slane %v1960, 2
      %v2066 = vrot.slane %v1961, 2
      %v2067 = vsel %vm2044, %v2065, %v2066
      %v2068 = vrot.slane %v1962, 2
      %v2069 = vsel %vm2044, %v2066, %v2068
      %v2070 = vrot.slane %v1963, 2
      %v2071 = vrot.slane %v1964, 2
      %v2072 = vsel %vm2044, %v2070, %v2071
      %v2073 = vrot.slane %v1965, 2
      %v2074 = vsel %vm2044, %v2071, %v2073
      %v2075 = vrot.slane %v1966, 2
      %v2076 = vrot.slane %v1967, 2
      %v2077 = vsel %vm2044, %v2075, %v2076
      %v2078 = vrot.slane %v1968, 2
      %v2079 = vsel %vm2044, %v2076, %v2078
      %v2080 = vrot.slane %v1969, 2
      %v2081 = vrot.slane %v1970, 2
      %v2082 = vsel %vm2044, %v2080, %v2081
      %v2083 = vrot.slane %v1971, 2
      %v2084 = vsel %vm2044, %v2081, %v2083
      %v2085 = vrot.slane %v1972, 2
      %v2086 = vrot.slane %v1973, 2
      %v2087 = vsel %vm2044, %v2085, %v2086
      %v2088 = vrot.slane %v1974, 2
      %v2089 = vsel %vm2044, %v2086, %v2088
      %v2090 = vrot.slane %v1975, 2
      %v2091 = vrot.slane %v1976, 2
      %v2092 = vsel %vm2044, %v2090, %v2091
      %v2093 = vrot.slane %v1977, 2
      %v2094 = vsel %vm2044, %v2091, %v2093
      %v2095 = vrot.slane %v1978, 2
      %v2096 = vrot.slane %v1979, 2
      %v2097 = vsel %vm2044, %v2095, %v2096
      %v2098 = vrot.slane %v1980, 2
      %v2099 = vsel %vm2044, %v2096, %v2098
      %v2100 = vrot.slane %v1981, 2
      %v2101 = vrot.slane %v1982, 2
      %v2102 = vsel %vm2044, %v2100, %v2101
      %v2103 = vrot.slane %v1983, 2
      %v2104 = vsel %vm2044, %v2101, %v2103
      %v2105 = vrot.slane %v1984, 2
      %v2106 = vrot.slane %v1985, 2
      %v2107 = vsel %vm2044, %v2105, %v2106
      %v2108 = vrot.slane %v1986, 2
      %v2109 = vsel %vm2044, %v2106, %v2108
      %v2110 = vrot.slane %v1987, 2
      %v2111 = vrot.slane %v1988, 2
      %v2112 = vsel %vm2044, %v2110, %v2111
      %v2113 = vrot.slane %v1989, 2
      %v2114 = vsel %vm2044, %v2111, %v2113
      %v2115 = vrot.slane %v1990, 2
      %v2116 = vrot.slane %v1991, 2
      %v2117 = vsel %vm2044, %v2115, %v2116
      %v2118 = vrot.slane %v1992, 2
      %v2119 = vsel %vm2044, %v2116, %v2118
      %v2120 = vrot.slane %v1993, 2
      %v2121 = vrot.slane %v1994, 2
      %v2122 = vsel %vm2044, %v2120, %v2121
      %v2123 = vrot.slane %v1995, 2
      %v2124 = vsel %vm2044, %v2121, %v2123
      %v2157 = vadd.f32 %v1912, %v2047
      %v2158 = vadd.f32 %v1913, %v2049
      %v2159 = vadd.f32 %v1914, %v2052
      %v2160 = vadd.f32 %v1915, %v2054
      %v2161 = vadd.f32 %v1916, %v2057
      %v2162 = vadd.f32 %v1917, %v2059
      %v2163 = vadd.f32 %v1918, %v2062
      %v2164 = vadd.f32 %v1919, %v2064
      %v2165 = vadd.f32 %v1920, %v2067
      %v2166 = vadd.f32 %v1921, %v2069
      %v2167 = vadd.f32 %v1922, %v2072
      %v2168 = vadd.f32 %v1923, %v2074
      %v2169 = vadd.f32 %v1924, %v2077
      %v2170 = vadd.f32 %v1925, %v2079
      %v2171 = vadd.f32 %v1926, %v2082
      %v2172 = vadd.f32 %v1927, %v2084
      %v2173 = vadd.f32 %v1928, %v2087
      %v2174 = vadd.f32 %v1929, %v2089
      %v2175 = vadd.f32 %v1930, %v2092
      %v2176 = vadd.f32 %v1931, %v2094
      %v2177 = vadd.f32 %v1932, %v2097
      %v2178 = vadd.f32 %v1933, %v2099
      %v2179 = vadd.f32 %v1934, %v2102
      %v2180 = vadd.f32 %v1935, %v2104
      %v2181 = vadd.f32 %v1936, %v2107
      %v2182 = vadd.f32 %v1937, %v2109
      %v2183 = vadd.f32 %v1938, %v2112
      %v2184 = vadd.f32 %v1939, %v2114
      %v2185 = vadd.f32 %v1940, %v2117
      %v2186 = vadd.f32 %v1941, %v2119
      %v2187 = vadd.f32 %v1942, %v2122
      %v2188 = vadd.f32 %v1943, %v2124
      %v2189 = vlaneseq
      %v2190 = vshrl.u32 %v2189, 7
      %v2191 = vsub.s32 3, %v2190
      %v2192 = vrot.slane %v1661, %v2191
      %v2193 = vmul.f32 %v1610, %v2192
      %v2194 = vmul.f32 %v1611, %v2192
      %v2195 = vmul.f32 %v1613, %v2192
      %v2196 = vmul.f32 %v1614, %v2192
      %v2197 = vmul.f32 %v1616, %v2192
      %v2198 = vmul.f32 %v1617, %v2192
      %v2199 = vmul.f32 %v1619, %v2192
      %v2200 = vmul.f32 %v1620, %v2192
      %v2201 = vmul.f32 %v1622, %v2192
      %v2202 = vmul.f32 %v1623, %v2192
      %v2203 = vmul.f32 %v1625, %v2192
      %v2204 = vmul.f32 %v1626, %v2192
      %v2205 = vmul.f32 %v1628, %v2192
      %v2206 = vmul.f32 %v1629, %v2192
      %v2207 = vmul.f32 %v1631, %v2192
      %v2208 = vmul.f32 %v1632, %v2192
      %v2209 = vmul.f32 %v1634, %v2192
      %v2210 = vmul.f32 %v1635, %v2192
      %v2211 = vmul.f32 %v1637, %v2192
      %v2212 = vmul.f32 %v1638, %v2192
      %v2213 = vmul.f32 %v1640, %v2192
      %v2214 = vmul.f32 %v1641, %v2192
      %v2215 = vmul.f32 %v1643, %v2192
      %v2216 = vmul.f32 %v1644, %v2192
      %v2217 = vmul.f32 %v1646, %v2192
      %v2218 = vmul.f32 %v1647, %v2192
      %v2219 = vmul.f32 %v1649, %v2192
      %v2220 = vmul.f32 %v1650, %v2192
      %v2221 = vmul.f32 %v1652, %v2192
      %v2222 = vmul.f32 %v1653, %v2192
      %v2223 = vmul.f32 %v1655, %v2192
      %v2224 = vmul.f32 %v1656, %v2192
      %v2225 = vadd.f32 %v2157, %v2193
      %v2226 = vadd.f32 %v2158, %v2194
      %v2227 = vadd.f32 %v2159, %v2195
      %v2228 = vadd.f32 %v2160, %v2196
      %v2229 = vadd.f32 %v2161, %v2197
      %v2230 = vadd.f32 %v2162, %v2198
      %v2231 = vadd.f32 %v2163, %v2199
      %v2232 = vadd.f32 %v2164, %v2200
      %v2233 = vadd.f32 %v2165, %v2201
      %v2234 = vadd.f32 %v2166, %v2202
      %v2235 = vadd.f32 %v2167, %v2203
      %v2236 = vadd.f32 %v2168, %v2204
      %v2237 = vadd.f32 %v2169, %v2205
      %v2238 = vadd.f32 %v2170, %v2206
      %v2239 = vadd.f32 %v2171, %v2207
      %v2240 = vadd.f32 %v2172, %v2208
      %v2241 = vadd.f32 %v2173, %v2209
      %v2242 = vadd.f32 %v2174, %v2210
      %v2243 = vadd.f32 %v2175, %v2211
      %v2244 = vadd.f32 %v2176, %v2212
      %v2245 = vadd.f32 %v2177, %v2213
      %v2246 = vadd.f32 %v2178, %v2214
      %v2247 = vadd.f32 %v2179, %v2215
      %v2248 = vadd.f32 %v2180, %v2216
      %v2249 = vadd.f32 %v2181, %v2217
      %v2250 = vadd.f32 %v2182, %v2218
      %v2251 = vadd.f32 %v2183, %v2219
      %v2252 = vadd.f32 %v2184, %v2220
      %v2253 = vadd.f32 %v2185, %v2221
      %v2254 = vadd.f32 %v2186, %v2222
      %v2255 = vadd.f32 %v2187, %v2223
      %v2256 = vadd.f32 %v2188, %v2224
      %v2257 = vlaneseq
      %v2258 = vshrl.u32 %v2257, 7
      %v2259 = vsub.s32 4, %v2258
      %v2260 = vrot.slane %v1661, %v2259
      %v2261 = vmul.f32 %v1610, %v2260
      %v2262 = vmul.f32 %v1611, %v2260
      %v2263 = vmul.f32 %v1612, %v2260
      %v2264 = vmul.f32 %v1613, %v2260
      %v2265 = vmul.f32 %v1614, %v2260
      %v2266 = vmul.f32 %v1615, %v2260
      %v2267 = vmul.f32 %v1616, %v2260
      %v2268 = vmul.f32 %v1617, %v2260
      %v2269 = vmul.f32 %v1618, %v2260
      %v2270 = vmul.f32 %v1619, %v2260
      %v2271 = vmul.f32 %v1620, %v2260
      %v2272 = vmul.f32 %v1621, %v2260
      %v2273 = vmul.f32 %v1622, %v2260
      %v2274 = vmul.f32 %v1623, %v2260
      %v2275 = vmul.f32 %v1624, %v2260
      %v2276 = vmul.f32 %v1625, %v2260
      %v2277 = vmul.f32 %v1626, %v2260
      %v2278 = vmul.f32 %v1627, %v2260
      %v2279 = vmul.f32 %v1628, %v2260
      %v2280 = vmul.f32 %v1629, %v2260
      %v2281 = vmul.f32 %v1630, %v2260
      %v2282 = vmul.f32 %v1631, %v2260
      %v2283 = vmul.f32 %v1632, %v2260
      %v2284 = vmul.f32 %v1633, %v2260
      %v2285 = vmul.f32 %v1634, %v2260
      %v2286 = vmul.f32 %v1635, %v2260
      %v2287 = vmul.f32 %v1636, %v2260
      %v2288 = vmul.f32 %v1637, %v2260
      %v2289 = vmul.f32 %v1638, %v2260
      %v2290 = vmul.f32 %v1639, %v2260
      %v2291 = vmul.f32 %v1640, %v2260
      %v2292 = vmul.f32 %v1641, %v2260
      %v2293 = vmul.f32 %v1642, %v2260
      %v2294 = vmul.f32 %v1643, %v2260
      %v2295 = vmul.f32 %v1644, %v2260
      %v2296 = vmul.f32 %v1645, %v2260
      %v2297 = vmul.f32 %v1646, %v2260
      %v2298 = vmul.f32 %v1647, %v2260
      %v2299 = vmul.f32 %v1648, %v2260
      %v2300 = vmul.f32 %v1649, %v2260
      %v2301 = vmul.f32 %v1650, %v2260
      %v2302 = vmul.f32 %v1651, %v2260
      %v2303 = vmul.f32 %v1652, %v2260
      %v2304 = vmul.f32 %v1653, %v2260
      %v2305 = vmul.f32 %v1654, %v2260
      %v2306 = vmul.f32 %v1655, %v2260
      %v2307 = vmul.f32 %v1656, %v2260
      %v2308 = vmul.f32 %v1657, %v2260
      %v2357 = vrot.slane %v2261, 1
      %v2358 = vrot.slane %v2262, 1
      %v2359 = vsel %vm1799, %v2357, %v2358
      %v2360 = vrot.slane %v2263, 1
      %v2361 = vsel %vm1799, %v2358, %v2360
      %v2362 = vrot.slane %v2264, 1
      %v2363 = vrot.slane %v2265, 1
      %v2364 = vsel %vm1799, %v2362, %v2363
      %v2365 = vrot.slane %v2266, 1
      %v2366 = vsel %vm1799, %v2363, %v2365
      %v2367 = vrot.slane %v2267, 1
      %v2368 = vrot.slane %v2268, 1
      %v2369 = vsel %vm1799, %v2367, %v2368
      %v2370 = vrot.slane %v2269, 1
      %v2371 = vsel %vm1799, %v2368, %v2370
      %v2372 = vrot.slane %v2270, 1
      %v2373 = vrot.slane %v2271, 1
      %v2374 = vsel %vm1799, %v2372, %v2373
      %v2375 = vrot.slane %v2272, 1
      %v2376 = vsel %vm1799, %v2373, %v2375
      %v2377 = vrot.slane %v2273, 1
      %v2378 = vrot.slane %v2274, 1
      %v2379 = vsel %vm1799, %v2377, %v2378
      %v2380 = vrot.slane %v2275, 1
      %v2381 = vsel %vm1799, %v2378, %v2380
      %v2382 = vrot.slane %v2276, 1
      %v2383 = vrot.slane %v2277, 1
      %v2384 = vsel %vm1799, %v2382, %v2383
      %v2385 = vrot.slane %v2278, 1
      %v2386 = vsel %vm1799, %v2383, %v2385
      %v2387 = vrot.slane %v2279, 1
      %v2388 = vrot.slane %v2280, 1
      %v2389 = vsel %vm1799, %v2387, %v2388
      %v2390 = vrot.slane %v2281, 1
      %v2391 = vsel %vm1799, %v2388, %v2390
      %v2392 = vrot.slane %v2282, 1
      %v2393 = vrot.slane %v2283, 1
      %v2394 = vsel %vm1799, %v2392, %v2393
      %v2395 = vrot.slane %v2284, 1
      %v2396 = vsel %vm1799, %v2393, %v2395
      %v2397 = vrot.slane %v2285, 1
      %v2398 = vrot.slane %v2286, 1
      %v2399 = vsel %vm1799, %v2397, %v2398
      %v2400 = vrot.slane %v2287, 1
      %v2401 = vsel %vm1799, %v2398, %v2400
      %v2402 = vrot.slane %v2288, 1
      %v2403 = vrot.slane %v2289, 1
      %v2404 = vsel %vm1799, %v2402, %v2403
      %v2405 = vrot.slane %v2290, 1
      %v2406 = vsel %vm1799, %v2403, %v2405
      %v2407 = vrot.slane %v2291, 1
      %v2408 = vrot.slane %v2292, 1
      %v2409 = vsel %vm1799, %v2407, %v2408
      %v2410 = vrot.slane %v2293, 1
      %v2411 = vsel %vm1799, %v2408, %v2410
      %v2412 = vrot.slane %v2294, 1
      %v2413 = vrot.slane %v2295, 1
      %v2414 = vsel %vm1799, %v2412, %v2413
      %v2415 = vrot.slane %v2296, 1
      %v2416 = vsel %vm1799, %v2413, %v2415
      %v2417 = vrot.slane %v2297, 1
      %v2418 = vrot.slane %v2298, 1
      %v2419 = vsel %vm1799, %v2417, %v2418
      %v2420 = vrot.slane %v2299, 1
      %v2421 = vsel %vm1799, %v2418, %v2420
      %v2422 = vrot.slane %v2300, 1
      %v2423 = vrot.slane %v2301, 1
      %v2424 = vsel %vm1799, %v2422, %v2423
      %v2425 = vrot.slane %v2302, 1
      %v2426 = vsel %vm1799, %v2423, %v2425
      %v2427 = vrot.slane %v2303, 1
      %v2428 = vrot.slane %v2304, 1
      %v2429 = vsel %vm1799, %v2427, %v2428
      %v2430 = vrot.slane %v2305, 1
      %v2431 = vsel %vm1799, %v2428, %v2430
      %v2432 = vrot.slane %v2306, 1
      %v2433 = vrot.slane %v2307, 1
      %v2434 = vsel %vm1799, %v2432, %v2433
      %v2435 = vrot.slane %v2308, 1
      %v2436 = vsel %vm1799, %v2433, %v2435
      %v2469 = vadd.f32 %v2225, %v2359
      %v2470 = vadd.f32 %v2226, %v2361
      %v2471 = vadd.f32 %v2227, %v2364
      %v2472 = vadd.f32 %v2228, %v2366
      %v2473 = vadd.f32 %v2229, %v2369
      %v2474 = vadd.f32 %v2230, %v2371
      %v2475 = vadd.f32 %v2231, %v2374
      %v2476 = vadd.f32 %v2232, %v2376
      %v2477 = vadd.f32 %v2233, %v2379
      %v2478 = vadd.f32 %v2234, %v2381
      %v2479 = vadd.f32 %v2235, %v2384
      %v2480 = vadd.f32 %v2236, %v2386
      %v2481 = vadd.f32 %v2237, %v2389
      %v2482 = vadd.f32 %v2238, %v2391
      %v2483 = vadd.f32 %v2239, %v2394
      %v2484 = vadd.f32 %v2240, %v2396
      %v2485 = vadd.f32 %v2241, %v2399
      %v2486 = vadd.f32 %v2242, %v2401
      %v2487 = vadd.f32 %v2243, %v2404
      %v2488 = vadd.f32 %v2244, %v2406
      %v2489 = vadd.f32 %v2245, %v2409
      %v2490 = vadd.f32 %v2246, %v2411
      %v2491 = vadd.f32 %v2247, %v2414
      %v2492 = vadd.f32 %v2248, %v2416
      %v2493 = vadd.f32 %v2249, %v2419
      %v2494 = vadd.f32 %v2250, %v2421
      %v2495 = vadd.f32 %v2251, %v2424
      %v2496 = vadd.f32 %v2252, %v2426
      %v2497 = vadd.f32 %v2253, %v2429
      %v2498 = vadd.f32 %v2254, %v2431
      %v2499 = vadd.f32 %v2255, %v2434
      %v2500 = vadd.f32 %v2256, %v2436
      %v2501 = vlaneseq
      %v2502 = vshrl.u32 %v2501, 7
      %v2503 = vsub.s32 5, %v2502
      %v2504 = vrot.slane %v1661, %v2503
      %v2505 = vmul.f32 %v1610, %v2504
      %v2506 = vmul.f32 %v1611, %v2504
      %v2507 = vmul.f32 %v1612, %v2504
      %v2508 = vmul.f32 %v1613, %v2504
      %v2509 = vmul.f32 %v1614, %v2504
      %v2510 = vmul.f32 %v1615, %v2504
      %v2511 = vmul.f32 %v1616, %v2504
      %v2512 = vmul.f32 %v1617, %v2504
      %v2513 = vmul.f32 %v1618, %v2504
      %v2514 = vmul.f32 %v1619, %v2504
      %v2515 = vmul.f32 %v1620, %v2504
      %v2516 = vmul.f32 %v1621, %v2504
      %v2517 = vmul.f32 %v1622, %v2504
      %v2518 = vmul.f32 %v1623, %v2504
      %v2519 = vmul.f32 %v1624, %v2504
      %v2520 = vmul.f32 %v1625, %v2504
      %v2521 = vmul.f32 %v1626, %v2504
      %v2522 = vmul.f32 %v1627, %v2504
      %v2523 = vmul.f32 %v1628, %v2504
      %v2524 = vmul.f32 %v1629, %v2504
      %v2525 = vmul.f32 %v1630, %v2504
      %v2526 = vmul.f32 %v1631, %v2504
      %v2527 = vmul.f32 %v1632, %v2504
      %v2528 = vmul.f32 %v1633, %v2504
      %v2529 = vmul.f32 %v1634, %v2504
      %v2530 = vmul.f32 %v1635, %v2504
      %v2531 = vmul.f32 %v1636, %v2504
      %v2532 = vmul.f32 %v1637, %v2504
      %v2533 = vmul.f32 %v1638, %v2504
      %v2534 = vmul.f32 %v1639, %v2504
      %v2535 = vmul.f32 %v1640, %v2504
      %v2536 = vmul.f32 %v1641, %v2504
      %v2537 = vmul.f32 %v1642, %v2504
      %v2538 = vmul.f32 %v1643, %v2504
      %v2539 = vmul.f32 %v1644, %v2504
      %v2540 = vmul.f32 %v1645, %v2504
      %v2541 = vmul.f32 %v1646, %v2504
      %v2542 = vmul.f32 %v1647, %v2504
      %v2543 = vmul.f32 %v1648, %v2504
      %v2544 = vmul.f32 %v1649, %v2504
      %v2545 = vmul.f32 %v1650, %v2504
      %v2546 = vmul.f32 %v1651, %v2504
      %v2547 = vmul.f32 %v1652, %v2504
      %v2548 = vmul.f32 %v1653, %v2504
      %v2549 = vmul.f32 %v1654, %v2504
      %v2550 = vmul.f32 %v1655, %v2504
      %v2551 = vmul.f32 %v1656, %v2504
      %v2552 = vmul.f32 %v1657, %v2504
      %v2601 = vrot.slane %v2505, 2
      %v2602 = vrot.slane %v2506, 2
      %v2603 = vsel %vm2044, %v2601, %v2602
      %v2604 = vrot.slane %v2507, 2
      %v2605 = vsel %vm2044, %v2602, %v2604
      %v2606 = vrot.slane %v2508, 2
      %v2607 = vrot.slane %v2509, 2
      %v2608 = vsel %vm2044, %v2606, %v2607
      %v2609 = vrot.slane %v2510, 2
      %v2610 = vsel %vm2044, %v2607, %v2609
      %v2611 = vrot.slane %v2511, 2
      %v2612 = vrot.slane %v2512, 2
      %v2613 = vsel %vm2044, %v2611, %v2612
      %v2614 = vrot.slane %v2513, 2
      %v2615 = vsel %vm2044, %v2612, %v2614
      %v2616 = vrot.slane %v2514, 2
      %v2617 = vrot.slane %v2515, 2
      %v2618 = vsel %vm2044, %v2616, %v2617
      %v2619 = vrot.slane %v2516, 2
      %v2620 = vsel %vm2044, %v2617, %v2619
      %v2621 = vrot.slane %v2517, 2
      %v2622 = vrot.slane %v2518, 2
      %v2623 = vsel %vm2044, %v2621, %v2622
      %v2624 = vrot.slane %v2519, 2
      %v2625 = vsel %vm2044, %v2622, %v2624
      %v2626 = vrot.slane %v2520, 2
      %v2627 = vrot.slane %v2521, 2
      %v2628 = vsel %vm2044, %v2626, %v2627
      %v2629 = vrot.slane %v2522, 2
      %v2630 = vsel %vm2044, %v2627, %v2629
      %v2631 = vrot.slane %v2523, 2
      %v2632 = vrot.slane %v2524, 2
      %v2633 = vsel %vm2044, %v2631, %v2632
      %v2634 = vrot.slane %v2525, 2
      %v2635 = vsel %vm2044, %v2632, %v2634
      %v2636 = vrot.slane %v2526, 2
      %v2637 = vrot.slane %v2527, 2
      %v2638 = vsel %vm2044, %v2636, %v2637
      %v2639 = vrot.slane %v2528, 2
      %v2640 = vsel %vm2044, %v2637, %v2639
      %v2641 = vrot.slane %v2529, 2
      %v2642 = vrot.slane %v2530, 2
      %v2643 = vsel %vm2044, %v2641, %v2642
      %v2644 = vrot.slane %v2531, 2
      %v2645 = vsel %vm2044, %v2642, %v2644
      %v2646 = vrot.slane %v2532, 2
      %v2647 = vrot.slane %v2533, 2
      %v2648 = vsel %vm2044, %v2646, %v2647
      %v2649 = vrot.slane %v2534, 2
      %v2650 = vsel %vm2044, %v2647, %v2649
      %v2651 = vrot.slane %v2535, 2
      %v2652 = vrot.slane %v2536, 2
      %v2653 = vsel %vm2044, %v2651, %v2652
      %v2654 = vrot.slane %v2537, 2
      %v2655 = vsel %vm2044, %v2652, %v2654
      %v2656 = vrot.slane %v2538, 2
      %v2657 = vrot.slane %v2539, 2
      %v2658 = vsel %vm2044, %v2656, %v2657
      %v2659 = vrot.slane %v2540, 2
      %v2660 = vsel %vm2044, %v2657, %v2659
      %v2661 = vrot.slane %v2541, 2
      %v2662 = vrot.slane %v2542, 2
      %v2663 = vsel %vm2044, %v2661, %v2662
      %v2664 = vrot.slane %v2543, 2
      %v2665 = vsel %vm2044, %v2662, %v2664
      %v2666 = vrot.slane %v2544, 2
      %v2667 = vrot.slane %v2545, 2
      %v2668 = vsel %vm2044, %v2666, %v2667
      %v2669 = vrot.slane %v2546, 2
      %v2670 = vsel %vm2044, %v2667, %v2669
      %v2671 = vrot.slane %v2547, 2
      %v2672 = vrot.slane %v2548, 2
      %v2673 = vsel %vm2044, %v2671, %v2672
      %v2674 = vrot.slane %v2549, 2
      %v2675 = vsel %vm2044, %v2672, %v2674
      %v2676 = vrot.slane %v2550, 2
      %v2677 = vrot.slane %v2551, 2
      %v2678 = vsel %vm2044, %v2676, %v2677
      %v2679 = vrot.slane %v2552, 2
      %v2680 = vsel %vm2044, %v2677, %v2679
      %v2713 = vadd.f32 %v2469, %v2603
      %v2714 = vadd.f32 %v2470, %v2605
      %v2715 = vadd.f32 %v2471, %v2608
      %v2716 = vadd.f32 %v2472, %v2610
      %v2717 = vadd.f32 %v2473, %v2613
      %v2718 = vadd.f32 %v2474, %v2615
      %v2719 = vadd.f32 %v2475, %v2618
      %v2720 = vadd.f32 %v2476, %v2620
      %v2721 = vadd.f32 %v2477, %v2623
      %v2722 = vadd.f32 %v2478, %v2625
      %v2723 = vadd.f32 %v2479, %v2628
      %v2724 = vadd.f32 %v2480, %v2630
      %v2725 = vadd.f32 %v2481, %v2633
      %v2726 = vadd.f32 %v2482, %v2635
      %v2727 = vadd.f32 %v2483, %v2638
      %v2728 = vadd.f32 %v2484, %v2640
      %v2729 = vadd.f32 %v2485, %v2643
      %v2730 = vadd.f32 %v2486, %v2645
      %v2731 = vadd.f32 %v2487, %v2648
      %v2732 = vadd.f32 %v2488, %v2650
      %v2733 = vadd.f32 %v2489, %v2653
      %v2734 = vadd.f32 %v2490, %v2655
      %v2735 = vadd.f32 %v2491, %v2658
      %v2736 = vadd.f32 %v2492, %v2660
      %v2737 = vadd.f32 %v2493, %v2663
      %v2738 = vadd.f32 %v2494, %v2665
      %v2739 = vadd.f32 %v2495, %v2668
      %v2740 = vadd.f32 %v2496, %v2670
      %v2741 = vadd.f32 %v2497, %v2673
      %v2742 = vadd.f32 %v2498, %v2675
      %v2743 = vadd.f32 %v2499, %v2678
      %v2744 = vadd.f32 %v2500, %v2680
      %v2745 = vlaneseq
      %v2746 = vshrl.u32 %v2745, 7
      %v2747 = vsub.s32 6, %v2746
      %v2748 = vrot.slane %v1661, %v2747
      %v2749 = vmul.f32 %v1613, %v2748
      %v2750 = vmul.f32 %v1614, %v2748
      %v2751 = vmul.f32 %v1616, %v2748
      %v2752 = vmul.f32 %v1617, %v2748
      %v2753 = vmul.f32 %v1619, %v2748
      %v2754 = vmul.f32 %v1620, %v2748
      %v2755 = vmul.f32 %v1622, %v2748
      %v2756 = vmul.f32 %v1623, %v2748
      %v2757 = vmul.f32 %v1625, %v2748
      %v2758 = vmul.f32 %v1626, %v2748
      %v2759 = vmul.f32 %v1628, %v2748
      %v2760 = vmul.f32 %v1629, %v2748
      %v2761 = vmul.f32 %v1631, %v2748
      %v2762 = vmul.f32 %v1632, %v2748
      %v2763 = vmul.f32 %v1634, %v2748
      %v2764 = vmul.f32 %v1635, %v2748
      %v2765 = vmul.f32 %v1637, %v2748
      %v2766 = vmul.f32 %v1638, %v2748
      %v2767 = vmul.f32 %v1640, %v2748
      %v2768 = vmul.f32 %v1641, %v2748
      %v2769 = vmul.f32 %v1643, %v2748
      %v2770 = vmul.f32 %v1644, %v2748
      %v2771 = vmul.f32 %v1646, %v2748
      %v2772 = vmul.f32 %v1647, %v2748
      %v2773 = vmul.f32 %v1649, %v2748
      %v2774 = vmul.f32 %v1650, %v2748
      %v2775 = vmul.f32 %v1652, %v2748
      %v2776 = vmul.f32 %v1653, %v2748
      %v2777 = vmul.f32 %v1655, %v2748
      %v2778 = vmul.f32 %v1656, %v2748
      %v2779 = vmul.f32 %v1658, %v2748
      %v2780 = vmul.f32 %v1659, %v2748
      %v2781 = vadd.f32 %v2713, %v2749
      %v2782 = vadd.f32 %v2714, %v2750
      %v2783 = vadd.f32 %v2715, %v2751
      %v2784 = vadd.f32 %v2716, %v2752
      %v2785 = vadd.f32 %v2717, %v2753
      %v2786 = vadd.f32 %v2718, %v2754
      %v2787 = vadd.f32 %v2719, %v2755
      %v2788 = vadd.f32 %v2720, %v2756
      %v2789 = vadd.f32 %v2721, %v2757
      %v2790 = vadd.f32 %v2722, %v2758
      %v2791 = vadd.f32 %v2723, %v2759
      %v2792 = vadd.f32 %v2724, %v2760
      %v2793 = vadd.f32 %v2725, %v2761
      %v2794 = vadd.f32 %v2726, %v2762
      %v2795 = vadd.f32 %v2727, %v2763
      %v2796 = vadd.f32 %v2728, %v2764
      %v2797 = vadd.f32 %v2729, %v2765
      %v2798 = vadd.f32 %v2730, %v2766
      %v2799 = vadd.f32 %v2731, %v2767
      %v2800 = vadd.f32 %v2732, %v2768
      %v2801 = vadd.f32 %v2733, %v2769
      %v2802 = vadd.f32 %v2734, %v2770
      %v2803 = vadd.f32 %v2735, %v2771
      %v2804 = vadd.f32 %v2736, %v2772
      %v2805 = vadd.f32 %v2737, %v2773
      %v2806 = vadd.f32 %v2738, %v2774
      %v2807 = vadd.f32 %v2739, %v2775
      %v2808 = vadd.f32 %v2740, %v2776
      %v2809 = vadd.f32 %v2741, %v2777
      %v2810 = vadd.f32 %v2742, %v2778
      %v2811 = vadd.f32 %v2743, %v2779
      %v2812 = vadd.f32 %v2744, %v2780
      %v2813 = vlaneseq
      %v2814 = vshrl.u32 %v2813, 7
      %v2815 = vsub.s32 7, %v2814
      %v2816 = vrot.slane %v1661, %v2815
      %v2817 = vmul.f32 %v1613, %v2816
      %v2818 = vmul.f32 %v1614, %v2816
      %v2819 = vmul.f32 %v1615, %v2816
      %v2820 = vmul.f32 %v1616, %v2816
      %v2821 = vmul.f32 %v1617, %v2816
      %v2822 = vmul.f32 %v1618, %v2816
      %v2823 = vmul.f32 %v1619, %v2816
      %v2824 = vmul.f32 %v1620, %v2816
      %v2825 = vmul.f32 %v1621, %v2816
      %v2826 = vmul.f32 %v1622, %v2816
      %v2827 = vmul.f32 %v1623, %v2816
      %v2828 = vmul.f32 %v1624, %v2816
      %v2829 = vmul.f32 %v1625, %v2816
      %v2830 = vmul.f32 %v1626, %v2816
      %v2831 = vmul.f32 %v1627, %v2816
      %v2832 = vmul.f32 %v1628, %v2816
      %v2833 = vmul.f32 %v1629, %v2816
      %v2834 = vmul.f32 %v1630, %v2816
      %v2835 = vmul.f32 %v1631, %v2816
      %v2836 = vmul.f32 %v1632, %v2816
      %v2837 = vmul.f32 %v1633, %v2816
      %v2838 = vmul.f32 %v1634, %v2816
      %v2839 = vmul.f32 %v1635, %v2816
      %v2840 = vmul.f32 %v1636, %v2816
      %v2841 = vmul.f32 %v1637, %v2816
      %v2842 = vmul.f32 %v1638, %v2816
      %v2843 = vmul.f32 %v1639, %v2816
      %v2844 = vmul.f32 %v1640, %v2816
      %v2845 = vmul.f32 %v1641, %v2816
      %v2846 = vmul.f32 %v1642, %v2816
      %v2847 = vmul.f32 %v1643, %v2816
      %v2848 = vmul.f32 %v1644, %v2816
      %v2849 = vmul.f32 %v1645, %v2816
      %v2850 = vmul.f32 %v1646, %v2816
      %v2851 = vmul.f32 %v1647, %v2816
      %v2852 = vmul.f32 %v1648, %v2816
      %v2853 = vmul.f32 %v1649, %v2816
      %v2854 = vmul.f32 %v1650, %v2816
      %v2855 = vmul.f32 %v1651, %v2816
      %v2856 = vmul.f32 %v1652, %v2816
      %v2857 = vmul.f32 %v1653, %v2816
      %v2858 = vmul.f32 %v1654, %v2816
      %v2859 = vmul.f32 %v1655, %v2816
      %v2860 = vmul.f32 %v1656, %v2816
      %v2861 = vmul.f32 %v1657, %v2816
      %v2862 = vmul.f32 %v1658, %v2816
      %v2863 = vmul.f32 %v1659, %v2816
      %v2864 = vmul.f32 %v1660, %v2816
      %v2913 = vrot.slane %v2817, 1
      %v2914 = vrot.slane %v2818, 1
      %v2915 = vsel %vm1799, %v2913, %v2914
      %v2916 = vrot.slane %v2819, 1
      %v2917 = vsel %vm1799, %v2914, %v2916
      %v2918 = vrot.slane %v2820, 1
      %v2919 = vrot.slane %v2821, 1
      %v2920 = vsel %vm1799, %v2918, %v2919
      %v2921 = vrot.slane %v2822, 1
      %v2922 = vsel %vm1799, %v2919, %v2921
      %v2923 = vrot.slane %v2823, 1
      %v2924 = vrot.slane %v2824, 1
      %v2925 = vsel %vm1799, %v2923, %v2924
      %v2926 = vrot.slane %v2825, 1
      %v2927 = vsel %vm1799, %v2924, %v2926
      %v2928 = vrot.slane %v2826, 1
      %v2929 = vrot.slane %v2827, 1
      %v2930 = vsel %vm1799, %v2928, %v2929
      %v2931 = vrot.slane %v2828, 1
      %v2932 = vsel %vm1799, %v2929, %v2931
      %v2933 = vrot.slane %v2829, 1
      %v2934 = vrot.slane %v2830, 1
      %v2935 = vsel %vm1799, %v2933, %v2934
      %v2936 = vrot.slane %v2831, 1
      %v2937 = vsel %vm1799, %v2934, %v2936
      %v2938 = vrot.slane %v2832, 1
      %v2939 = vrot.slane %v2833, 1
      %v2940 = vsel %vm1799, %v2938, %v2939
      %v2941 = vrot.slane %v2834, 1
      %v2942 = vsel %vm1799, %v2939, %v2941
      %v2943 = vrot.slane %v2835, 1
      %v2944 = vrot.slane %v2836, 1
      %v2945 = vsel %vm1799, %v2943, %v2944
      %v2946 = vrot.slane %v2837, 1
      %v2947 = vsel %vm1799, %v2944, %v2946
      %v2948 = vrot.slane %v2838, 1
      %v2949 = vrot.slane %v2839, 1
      %v2950 = vsel %vm1799, %v2948, %v2949
      %v2951 = vrot.slane %v2840, 1
      %v2952 = vsel %vm1799, %v2949, %v2951
      %v2953 = vrot.slane %v2841, 1
      %v2954 = vrot.slane %v2842, 1
      %v2955 = vsel %vm1799, %v2953, %v2954
      %v2956 = vrot.slane %v2843, 1
      %v2957 = vsel %vm1799, %v2954, %v2956
      %v2958 = vrot.slane %v2844, 1
      %v2959 = vrot.slane %v2845, 1
      %v2960 = vsel %vm1799, %v2958, %v2959
      %v2961 = vrot.slane %v2846, 1
      %v2962 = vsel %vm1799, %v2959, %v2961
      %v2963 = vrot.slane %v2847, 1
      %v2964 = vrot.slane %v2848, 1
      %v2965 = vsel %vm1799, %v2963, %v2964
      %v2966 = vrot.slane %v2849, 1
      %v2967 = vsel %vm1799, %v2964, %v2966
      %v2968 = vrot.slane %v2850, 1
      %v2969 = vrot.slane %v2851, 1
      %v2970 = vsel %vm1799, %v2968, %v2969
      %v2971 = vrot.slane %v2852, 1
      %v2972 = vsel %vm1799, %v2969, %v2971
      %v2973 = vrot.slane %v2853, 1
      %v2974 = vrot.slane %v2854, 1
      %v2975 = vsel %vm1799, %v2973, %v2974
      %v2976 = vrot.slane %v2855, 1
      %v2977 = vsel %vm1799, %v2974, %v2976
      %v2978 = vrot.slane %v2856, 1
      %v2979 = vrot.slane %v2857, 1
      %v2980 = vsel %vm1799, %v2978, %v2979
      %v2981 = vrot.slane %v2858, 1
      %v2982 = vsel %vm1799, %v2979, %v2981
      %v2983 = vrot.slane %v2859, 1
      %v2984 = vrot.slane %v2860, 1
      %v2985 = vsel %vm1799, %v2983, %v2984
      %v2986 = vrot.slane %v2861, 1
      %v2987 = vsel %vm1799, %v2984, %v2986
      %v2988 = vrot.slane %v2862, 1
      %v2989 = vrot.slane %v2863, 1
      %v2990 = vsel %vm1799, %v2988, %v2989
      %v2991 = vrot.slane %v2864, 1
      %v2992 = vsel %vm1799, %v2989, %v2991
      %v3025 = vadd.f32 %v2781, %v2915
      %v3026 = vadd.f32 %v2782, %v2917
      %v3027 = vadd.f32 %v2783, %v2920
      %v3028 = vadd.f32 %v2784, %v2922
      %v3029 = vadd.f32 %v2785, %v2925
      %v3030 = vadd.f32 %v2786, %v2927
      %v3031 = vadd.f32 %v2787, %v2930
      %v3032 = vadd.f32 %v2788, %v2932
      %v3033 = vadd.f32 %v2789, %v2935
      %v3034 = vadd.f32 %v2790, %v2937
      %v3035 = vadd.f32 %v2791, %v2940
      %v3036 = vadd.f32 %v2792, %v2942
      %v3037 = vadd.f32 %v2793, %v2945
      %v3038 = vadd.f32 %v2794, %v2947
      %v3039 = vadd.f32 %v2795, %v2950
      %v3040 = vadd.f32 %v2796, %v2952
      %v3041 = vadd.f32 %v2797, %v2955
      %v3042 = vadd.f32 %v2798, %v2957
      %v3043 = vadd.f32 %v2799, %v2960
      %v3044 = vadd.f32 %v2800, %v2962
      %v3045 = vadd.f32 %v2801, %v2965
      %v3046 = vadd.f32 %v2802, %v2967
      %v3047 = vadd.f32 %v2803, %v2970
      %v3048 = vadd.f32 %v2804, %v2972
      %v3049 = vadd.f32 %v2805, %v2975
      %v3050 = vadd.f32 %v2806, %v2977
      %v3051 = vadd.f32 %v2807, %v2980
      %v3052 = vadd.f32 %v2808, %v2982
      %v3053 = vadd.f32 %v2809, %v2985
      %v3054 = vadd.f32 %v2810, %v2987
      %v3055 = vadd.f32 %v2811, %v2990
      %v3056 = vadd.f32 %v2812, %v2992
      %v3057 = vlaneseq
      %v3058 = vshrl.u32 %v3057, 7
      %v3059 = vsub.s32 0, %v3058
      %v3060 = vrot.slane %v1662, %v3059
      %v3061 = vmul.f32 %v1613, %v3060
      %v3062 = vmul.f32 %v1614, %v3060
      %v3063 = vmul.f32 %v1615, %v3060
      %v3064 = vmul.f32 %v1616, %v3060
      %v3065 = vmul.f32 %v1617, %v3060
      %v3066 = vmul.f32 %v1618, %v3060
      %v3067 = vmul.f32 %v1619, %v3060
      %v3068 = vmul.f32 %v1620, %v3060
      %v3069 = vmul.f32 %v1621, %v3060
      %v3070 = vmul.f32 %v1622, %v3060
      %v3071 = vmul.f32 %v1623, %v3060
      %v3072 = vmul.f32 %v1624, %v3060
      %v3073 = vmul.f32 %v1625, %v3060
      %v3074 = vmul.f32 %v1626, %v3060
      %v3075 = vmul.f32 %v1627, %v3060
      %v3076 = vmul.f32 %v1628, %v3060
      %v3077 = vmul.f32 %v1629, %v3060
      %v3078 = vmul.f32 %v1630, %v3060
      %v3079 = vmul.f32 %v1631, %v3060
      %v3080 = vmul.f32 %v1632, %v3060
      %v3081 = vmul.f32 %v1633, %v3060
      %v3082 = vmul.f32 %v1634, %v3060
      %v3083 = vmul.f32 %v1635, %v3060
      %v3084 = vmul.f32 %v1636, %v3060
      %v3085 = vmul.f32 %v1637, %v3060
      %v3086 = vmul.f32 %v1638, %v3060
      %v3087 = vmul.f32 %v1639, %v3060
      %v3088 = vmul.f32 %v1640, %v3060
      %v3089 = vmul.f32 %v1641, %v3060
      %v3090 = vmul.f32 %v1642, %v3060
      %v3091 = vmul.f32 %v1643, %v3060
      %v3092 = vmul.f32 %v1644, %v3060
      %v3093 = vmul.f32 %v1645, %v3060
      %v3094 = vmul.f32 %v1646, %v3060
      %v3095 = vmul.f32 %v1647, %v3060
      %v3096 = vmul.f32 %v1648, %v3060
      %v3097 = vmul.f32 %v1649, %v3060
      %v3098 = vmul.f32 %v1650, %v3060
      %v3099 = vmul.f32 %v1651, %v3060
      %v3100 = vmul.f32 %v1652, %v3060
      %v3101 = vmul.f32 %v1653, %v3060
      %v3102 = vmul.f32 %v1654, %v3060
      %v3103 = vmul.f32 %v1655, %v3060
      %v3104 = vmul.f32 %v1656, %v3060
      %v3105 = vmul.f32 %v1657, %v3060
      %v3106 = vmul.f32 %v1658, %v3060
      %v3107 = vmul.f32 %v1659, %v3060
      %v3108 = vmul.f32 %v1660, %v3060
      %v3157 = vrot.slane %v3061, 2
      %v3158 = vrot.slane %v3062, 2
      %v3159 = vsel %vm2044, %v3157, %v3158
      %v3160 = vrot.slane %v3063, 2
      %v3161 = vsel %vm2044, %v3158, %v3160
      %v3162 = vrot.slane %v3064, 2
      %v3163 = vrot.slane %v3065, 2
      %v3164 = vsel %vm2044, %v3162, %v3163
      %v3165 = vrot.slane %v3066, 2
      %v3166 = vsel %vm2044, %v3163, %v3165
      %v3167 = vrot.slane %v3067, 2
      %v3168 = vrot.slane %v3068, 2
      %v3169 = vsel %vm2044, %v3167, %v3168
      %v3170 = vrot.slane %v3069, 2
      %v3171 = vsel %vm2044, %v3168, %v3170
      %v3172 = vrot.slane %v3070, 2
      %v3173 = vrot.slane %v3071, 2
      %v3174 = vsel %vm2044, %v3172, %v3173
      %v3175 = vrot.slane %v3072, 2
      %v3176 = vsel %vm2044, %v3173, %v3175
      %v3177 = vrot.slane %v3073, 2
      %v3178 = vrot.slane %v3074, 2
      %v3179 = vsel %vm2044, %v3177, %v3178
      %v3180 = vrot.slane %v3075, 2
      %v3181 = vsel %vm2044, %v3178, %v3180
      %v3182 = vrot.slane %v3076, 2
      %v3183 = vrot.slane %v3077, 2
      %v3184 = vsel %vm2044, %v3182, %v3183
      %v3185 = vrot.slane %v3078, 2
      %v3186 = vsel %vm2044, %v3183, %v3185
      %v3187 = vrot.slane %v3079, 2
      %v3188 = vrot.slane %v3080, 2
      %v3189 = vsel %vm2044, %v3187, %v3188
      %v3190 = vrot.slane %v3081, 2
      %v3191 = vsel %vm2044, %v3188, %v3190
      %v3192 = vrot.slane %v3082, 2
      %v3193 = vrot.slane %v3083, 2
      %v3194 = vsel %vm2044, %v3192, %v3193
      %v3195 = vrot.slane %v3084, 2
      %v3196 = vsel %vm2044, %v3193, %v3195
      %v3197 = vrot.slane %v3085, 2
      %v3198 = vrot.slane %v3086, 2
      %v3199 = vsel %vm2044, %v3197, %v3198
      %v3200 = vrot.slane %v3087, 2
      %v3201 = vsel %vm2044, %v3198, %v3200
      %v3202 = vrot.slane %v3088, 2
      %v3203 = vrot.slane %v3089, 2
      %v3204 = vsel %vm2044, %v3202, %v3203
      %v3205 = vrot.slane %v3090, 2
      %v3206 = vsel %vm2044, %v3203, %v3205
      %v3207 = vrot.slane %v3091, 2
      %v3208 = vrot.slane %v3092, 2
      %v3209 = vsel %vm2044, %v3207, %v3208
      %v3210 = vrot.slane %v3093, 2
      %v3211 = vsel %vm2044, %v3208, %v3210
      %v3212 = vrot.slane %v3094, 2
      %v3213 = vrot.slane %v3095, 2
      %v3214 = vsel %vm2044, %v3212, %v3213
      %v3215 = vrot.slane %v3096, 2
      %v3216 = vsel %vm2044, %v3213, %v3215
      %v3217 = vrot.slane %v3097, 2
      %v3218 = vrot.slane %v3098, 2
      %v3219 = vsel %vm2044, %v3217, %v3218
      %v3220 = vrot.slane %v3099, 2
      %v3221 = vsel %vm2044, %v3218, %v3220
      %v3222 = vrot.slane %v3100, 2
      %v3223 = vrot.slane %v3101, 2
      %v3224 = vsel %vm2044, %v3222, %v3223
      %v3225 = vrot.slane %v3102, 2
      %v3226 = vsel %vm2044, %v3223, %v3225
      %v3227 = vrot.slane %v3103, 2
      %v3228 = vrot.slane %v3104, 2
      %v3229 = vsel %vm2044, %v3227, %v3228
      %v3230 = vrot.slane %v3105, 2
      %v3231 = vsel %vm2044, %v3228, %v3230
      %v3232 = vrot.slane %v3106, 2
      %v3233 = vrot.slane %v3107, 2
      %v3234 = vsel %vm2044, %v3232, %v3233
      %v3235 = vrot.slane %v3108, 2
      %v3236 = vsel %vm2044, %v3233, %v3235
      %v3269 = vadd.f32 %v3025, %v3159
      %v3270 = vadd.f32 %v3026, %v3161
      %v3271 = vadd.f32 %v3027, %v3164
      %v3272 = vadd.f32 %v3028, %v3166
      %v3273 = vadd.f32 %v3029, %v3169
      %v3274 = vadd.f32 %v3030, %v3171
      %v3275 = vadd.f32 %v3031, %v3174
      %v3276 = vadd.f32 %v3032, %v3176
      %v3277 = vadd.f32 %v3033, %v3179
      %v3278 = vadd.f32 %v3034, %v3181
      %v3279 = vadd.f32 %v3035, %v3184
      %v3280 = vadd.f32 %v3036, %v3186
      %v3281 = vadd.f32 %v3037, %v3189
      %v3282 = vadd.f32 %v3038, %v3191
      %v3283 = vadd.f32 %v3039, %v3194
      %v3284 = vadd.f32 %v3040, %v3196
      %v3285 = vadd.f32 %v3041, %v3199
      %v3286 = vadd.f32 %v3042, %v3201
      %v3287 = vadd.f32 %v3043, %v3204
      %v3288 = vadd.f32 %v3044, %v3206
      %v3289 = vadd.f32 %v3045, %v3209
      %v3290 = vadd.f32 %v3046, %v3211
      %v3291 = vadd.f32 %v3047, %v3214
      %v3292 = vadd.f32 %v3048, %v3216
      %v3293 = vadd.f32 %v3049, %v3219
      %v3294 = vadd.f32 %v3050, %v3221
      %v3295 = vadd.f32 %v3051, %v3224
      %v3296 = vadd.f32 %v3052, %v3226
      %v3297 = vadd.f32 %v3053, %v3229
      %v3298 = vadd.f32 %v3054, %v3231
      %v3299 = vadd.f32 %v3055, %v3234
      %v3300 = vadd.f32 %v3056, %v3236
      %v3301 = vld [vmem:[%s5] sm:$0x1]
      %v3303 = vlaneseq
      %v3304 = vshrl.u32 %v3303, 7
      %v3305 = vsub.s32 0, %v3304
      %v3306 = vrot.slane %v3301, %v3305
      %v3308 = vmul.f32 %v3269, %v3306
      %v3309 = vmul.f32 %v3270, %v3306
      %v3310 = vmul.f32 %v3271, %v3306
      %v3311 = vmul.f32 %v3272, %v3306
      %v3312 = vmul.f32 %v3273, %v3306
      %v3313 = vmul.f32 %v3274, %v3306
      %v3314 = vmul.f32 %v3275, %v3306
      %v3315 = vmul.f32 %v3276, %v3306
      %v3316 = vmul.f32 %v3277, %v3306
      %v3317 = vmul.f32 %v3278, %v3306
      %v3318 = vmul.f32 %v3279, %v3306
      %v3319 = vmul.f32 %v3280, %v3306
      %v3320 = vmul.f32 %v3281, %v3306
      %v3321 = vmul.f32 %v3282, %v3306
      %v3322 = vmul.f32 %v3283, %v3306
      %v3323 = vmul.f32 %v3284, %v3306
      %v3324 = vmul.f32 %v3285, %v3306
      %v3325 = vmul.f32 %v3286, %v3306
      %v3326 = vmul.f32 %v3287, %v3306
      %v3327 = vmul.f32 %v3288, %v3306
      %v3328 = vmul.f32 %v3289, %v3306
      %v3329 = vmul.f32 %v3290, %v3306
      %v3330 = vmul.f32 %v3291, %v3306
      %v3331 = vmul.f32 %v3292, %v3306
      %v3332 = vmul.f32 %v3293, %v3306
      %v3333 = vmul.f32 %v3294, %v3306
      %v3334 = vmul.f32 %v3295, %v3306
      %v3335 = vmul.f32 %v3296, %v3306
      %v3336 = vmul.f32 %v3297, %v3306
      %v3337 = vmul.f32 %v3298, %v3306
      %v3338 = vmul.f32 %v3299, %v3306
      %v3339 = vmul.f32 %v3300, %v3306
      %v3340 = vld [vmem:[%s6] sm:$0x1]
      %v3342 = vlaneseq
      %v3343 = vshrl.u32 %v3342, 7
      %v3344 = vsub.s32 0, %v3343
      %v3345 = vrot.slane %v3340, %v3344
      %v3347 = vadd.f32 %v3308, %v3345
      %v3348 = vadd.f32 %v3309, %v3345
      %v3349 = vadd.f32 %v3310, %v3345
      %v3350 = vadd.f32 %v3311, %v3345
      %v3351 = vadd.f32 %v3312, %v3345
      %v3352 = vadd.f32 %v3313, %v3345
      %v3353 = vadd.f32 %v3314, %v3345
      %v3354 = vadd.f32 %v3315, %v3345
      %v3355 = vadd.f32 %v3316, %v3345
      %v3356 = vadd.f32 %v3317, %v3345
      %v3357 = vadd.f32 %v3318, %v3345
      %v3358 = vadd.f32 %v3319, %v3345
      %v3359 = vadd.f32 %v3320, %v3345
      %v3360 = vadd.f32 %v3321, %v3345
      %v3361 = vadd.f32 %v3322, %v3345
      %v3362 = vadd.f32 %v3323, %v3345
      %v3363 = vadd.f32 %v3324, %v3345
      %v3364 = vadd.f32 %v3325, %v3345
      %v3365 = vadd.f32 %v3326, %v3345
      %v3366 = vadd.f32 %v3327, %v3345
      %v3367 = vadd.f32 %v3328, %v3345
      %v3368 = vadd.f32 %v3329, %v3345
      %v3369 = vadd.f32 %v3330, %v3345
      %v3370 = vadd.f32 %v3331, %v3345
      %v3371 = vadd.f32 %v3332, %v3345
      %v3372 = vadd.f32 %v3333, %v3345
      %v3373 = vadd.f32 %v3334, %v3345
      %v3374 = vadd.f32 %v3335, %v3345
      %v3375 = vadd.f32 %v3336, %v3345
      %v3376 = vadd.f32 %v3337, %v3345
      %v3377 = vadd.f32 %v3338, %v3345
      %v3378 = vadd.f32 %v3339, %v3345
      %v3379 = vxor.u32 %v3347, 2147483648
      %v3380 = vxor.u32 %v3348, 2147483648
      %v3381 = vxor.u32 %v3349, 2147483648
      %v3382 = vxor.u32 %v3350, 2147483648
      %v3383 = vxor.u32 %v3351, 2147483648
      %v3384 = vxor.u32 %v3352, 2147483648
      %v3385 = vxor.u32 %v3353, 2147483648
      %v3386 = vxor.u32 %v3354, 2147483648
      %v3387 = vxor.u32 %v3355, 2147483648
      %v3388 = vxor.u32 %v3356, 2147483648
      %v3389 = vxor.u32 %v3357, 2147483648
      %v3390 = vxor.u32 %v3358, 2147483648
      %v3391 = vxor.u32 %v3359, 2147483648
      %v3392 = vxor.u32 %v3360, 2147483648
      %v3393 = vxor.u32 %v3361, 2147483648
      %v3394 = vxor.u32 %v3362, 2147483648
      %v3395 = vxor.u32 %v3363, 2147483648
      %v3396 = vxor.u32 %v3364, 2147483648
      %v3397 = vxor.u32 %v3365, 2147483648
      %v3398 = vxor.u32 %v3366, 2147483648
      %v3399 = vxor.u32 %v3367, 2147483648
      %v3400 = vxor.u32 %v3368, 2147483648
      %v3401 = vxor.u32 %v3369, 2147483648
      %v3402 = vxor.u32 %v3370, 2147483648
      %v3403 = vxor.u32 %v3371, 2147483648
      %v3404 = vxor.u32 %v3372, 2147483648
      %v3405 = vxor.u32 %v3373, 2147483648
      %v3406 = vxor.u32 %v3374, 2147483648
      %v3407 = vxor.u32 %v3375, 2147483648
      %v3408 = vxor.u32 %v3376, 2147483648
      %v3409 = vxor.u32 %v3377, 2147483648
      %v3410 = vxor.u32 %v3378, 2147483648
      %v3411 = vmul.f32 %v3379, 1.442695
      %v3412 = vpow.pop %v3411
      %v3413 = vmul.f32 %v3380, 1.442695
      %v3414 = vpow.pop %v3413
      %v3415 = vmul.f32 %v3381, 1.442695
      %v3416 = vpow.pop %v3415
      %v3417 = vmul.f32 %v3382, 1.442695
      %v3418 = vpow.pop %v3417
      %v3419 = vmul.f32 %v3383, 1.442695
      %v3420 = vpow.pop %v3419
      %v3421 = vmul.f32 %v3384, 1.442695
      %v3422 = vpow.pop %v3421
      %v3423 = vmul.f32 %v3385, 1.442695
      %v3424 = vpow.pop %v3423
      %v3425 = vmul.f32 %v3386, 1.442695
      %v3426 = vpow.pop %v3425
      %v3427 = vmul.f32 %v3387, 1.442695
      %v3428 = vpow.pop %v3427
      %v3429 = vmul.f32 %v3388, 1.442695
      %v3430 = vpow.pop %v3429
      %v3431 = vmul.f32 %v3389, 1.442695
      %v3432 = vpow.pop %v3431
      %v3433 = vmul.f32 %v3390, 1.442695
      %v3434 = vpow.pop %v3433
      %v3435 = vmul.f32 %v3391, 1.442695
      %v3436 = vpow.pop %v3435
      %v3437 = vmul.f32 %v3392, 1.442695
      %v3438 = vpow.pop %v3437
      %v3439 = vmul.f32 %v3393, 1.442695
      %v3440 = vpow.pop %v3439
      %v3441 = vmul.f32 %v3394, 1.442695
      %v3442 = vpow.pop %v3441
      %v3443 = vmul.f32 %v3395, 1.442695
      %v3444 = vpow.pop %v3443
      %v3445 = vmul.f32 %v3396, 1.442695
      %v3446 = vpow.pop %v3445
      %v3447 = vmul.f32 %v3397, 1.442695
      %v3448 = vpow.pop %v3447
      %v3449 = vmul.f32 %v3398, 1.442695
      %v3450 = vpow.pop %v3449
      %v3451 = vmul.f32 %v3399, 1.442695
      %v3452 = vpow.pop %v3451
      %v3453 = vmul.f32 %v3400, 1.442695
      %v3454 = vpow.pop %v3453
      %v3455 = vmul.f32 %v3401, 1.442695
      %v3456 = vpow.pop %v3455
      %v3457 = vmul.f32 %v3402, 1.442695
      %v3458 = vpow.pop %v3457
      %v3459 = vmul.f32 %v3403, 1.442695
      %v3460 = vpow.pop %v3459
      %v3461 = vmul.f32 %v3404, 1.442695
      %v3462 = vpow.pop %v3461
      %v3463 = vmul.f32 %v3405, 1.442695
      %v3464 = vpow.pop %v3463
      %v3465 = vmul.f32 %v3406, 1.442695
      %v3466 = vpow.pop %v3465
      %v3467 = vmul.f32 %v3407, 1.442695
      %v3468 = vpow.pop %v3467
      %v3469 = vmul.f32 %v3408, 1.442695
      %v3470 = vpow.pop %v3469
      %v3471 = vmul.f32 %v3409, 1.442695
      %v3472 = vpow.pop %v3471
      %v3473 = vmul.f32 %v3410, 1.442695
      %v3474 = vpow.pop %v3473
      %v3475 = vadd.f32 %v3412, 1.0
      %v3476 = vadd.f32 %v3414, 1.0
      %v3477 = vadd.f32 %v3416, 1.0
      %v3478 = vadd.f32 %v3418, 1.0
      %v3479 = vadd.f32 %v3420, 1.0
      %v3480 = vadd.f32 %v3422, 1.0
      %v3481 = vadd.f32 %v3424, 1.0
      %v3482 = vadd.f32 %v3426, 1.0
      %v3483 = vadd.f32 %v3428, 1.0
      %v3484 = vadd.f32 %v3430, 1.0
      %v3485 = vadd.f32 %v3432, 1.0
      %v3486 = vadd.f32 %v3434, 1.0
      %v3487 = vadd.f32 %v3436, 1.0
      %v3488 = vadd.f32 %v3438, 1.0
      %v3489 = vadd.f32 %v3440, 1.0
      %v3490 = vadd.f32 %v3442, 1.0
      %v3491 = vadd.f32 %v3444, 1.0
      %v3492 = vadd.f32 %v3446, 1.0
      %v3493 = vadd.f32 %v3448, 1.0
      %v3494 = vadd.f32 %v3450, 1.0
      %v3495 = vadd.f32 %v3452, 1.0
      %v3496 = vadd.f32 %v3454, 1.0
      %v3497 = vadd.f32 %v3456, 1.0
      %v3498 = vadd.f32 %v3458, 1.0
      %v3499 = vadd.f32 %v3460, 1.0
      %v3500 = vadd.f32 %v3462, 1.0
      %v3501 = vadd.f32 %v3464, 1.0
      %v3502 = vadd.f32 %v3466, 1.0
      %v3503 = vadd.f32 %v3468, 1.0
      %v3504 = vadd.f32 %v3470, 1.0
      %v3505 = vadd.f32 %v3472, 1.0
      %v3506 = vadd.f32 %v3474, 1.0
      %v3507 = vrcp.pop %v3475
      %v3508 = vmul.f32 1.0, %v3507
      %v3509 = vrcp.pop %v3476
      %v3510 = vmul.f32 1.0, %v3509
      %v3511 = vrcp.pop %v3477
      %v3512 = vmul.f32 1.0, %v3511
      %v3513 = vrcp.pop %v3478
      %v3514 = vmul.f32 1.0, %v3513
      %v3515 = vrcp.pop %v3479
      %v3516 = vmul.f32 1.0, %v3515
      %v3517 = vrcp.pop %v3480
      %v3518 = vmul.f32 1.0, %v3517
      %v3519 = vrcp.pop %v3481
      %v3520 = vmul.f32 1.0, %v3519
      %v3521 = vrcp.pop %v3482
      %v3522 = vmul.f32 1.0, %v3521
      %v3523 = vrcp.pop %v3483
      %v3524 = vmul.f32 1.0, %v3523
      %v3525 = vrcp.pop %v3484
      %v3526 = vmul.f32 1.0, %v3525
      %v3527 = vrcp.pop %v3485
      %v3528 = vmul.f32 1.0, %v3527
      %v3529 = vrcp.pop %v3486
      %v3530 = vmul.f32 1.0, %v3529
      %v3531 = vrcp.pop %v3487
      %v3532 = vmul.f32 1.0, %v3531
      %v3533 = vrcp.pop %v3488
      %v3534 = vmul.f32 1.0, %v3533
      %v3535 = vrcp.pop %v3489
      %v3536 = vmul.f32 1.0, %v3535
      %v3537 = vrcp.pop %v3490
      %v3538 = vmul.f32 1.0, %v3537
      %v3539 = vrcp.pop %v3491
      %v3540 = vmul.f32 1.0, %v3539
      %v3541 = vrcp.pop %v3492
      %v3542 = vmul.f32 1.0, %v3541
      %v3543 = vrcp.pop %v3493
      %v3544 = vmul.f32 1.0, %v3543
      %v3545 = vrcp.pop %v3494
      %v3546 = vmul.f32 1.0, %v3545
      %v3547 = vrcp.pop %v3495
      %v3548 = vmul.f32 1.0, %v3547
      %v3549 = vrcp.pop %v3496
      %v3550 = vmul.f32 1.0, %v3549
      %v3551 = vrcp.pop %v3497
      %v3552 = vmul.f32 1.0, %v3551
      %v3553 = vrcp.pop %v3498
      %v3554 = vmul.f32 1.0, %v3553
      %v3555 = vrcp.pop %v3499
      %v3556 = vmul.f32 1.0, %v3555
      %v3557 = vrcp.pop %v3500
      %v3558 = vmul.f32 1.0, %v3557
      %v3559 = vrcp.pop %v3501
      %v3560 = vmul.f32 1.0, %v3559
      %v3561 = vrcp.pop %v3502
      %v3562 = vmul.f32 1.0, %v3561
      %v3563 = vrcp.pop %v3503
      %v3564 = vmul.f32 1.0, %v3563
      %v3565 = vrcp.pop %v3504
      %v3566 = vmul.f32 1.0, %v3565
      %v3567 = vrcp.pop %v3505
      %v3568 = vmul.f32 1.0, %v3567
      %v3569 = vrcp.pop %v3506
      %v3570 = vmul.f32 1.0, %v3569
      %v3571 = vmul.f32 %v3347, %v3508
      %v3572 = vmul.f32 %v3348, %v3510
      %v3573 = vmul.f32 %v3349, %v3512
      %v3574 = vmul.f32 %v3350, %v3514
      %v3575 = vmul.f32 %v3351, %v3516
      %v3576 = vmul.f32 %v3352, %v3518
      %v3577 = vmul.f32 %v3353, %v3520
      %v3578 = vmul.f32 %v3354, %v3522
      %v3579 = vmul.f32 %v3355, %v3524
      %v3580 = vmul.f32 %v3356, %v3526
      %v3581 = vmul.f32 %v3357, %v3528
      %v3582 = vmul.f32 %v3358, %v3530
      %v3583 = vmul.f32 %v3359, %v3532
      %v3584 = vmul.f32 %v3360, %v3534
      %v3585 = vmul.f32 %v3361, %v3536
      %v3586 = vmul.f32 %v3362, %v3538
      %v3587 = vmul.f32 %v3363, %v3540
      %v3588 = vmul.f32 %v3364, %v3542
      %v3589 = vmul.f32 %v3365, %v3544
      %v3590 = vmul.f32 %v3366, %v3546
      %v3591 = vmul.f32 %v3367, %v3548
      %v3592 = vmul.f32 %v3368, %v3550
      %v3593 = vmul.f32 %v3369, %v3552
      %v3594 = vmul.f32 %v3370, %v3554
      %v3595 = vmul.f32 %v3371, %v3556
      %v3596 = vmul.f32 %v3372, %v3558
      %v3597 = vmul.f32 %v3373, %v3560
      %v3598 = vmul.f32 %v3374, %v3562
      %v3599 = vmul.f32 %v3375, %v3564
      %v3600 = vmul.f32 %v3376, %v3566
      %v3601 = vmul.f32 %v3377, %v3568
      %v3602 = vmul.f32 %v3378, %v3570
      %v3603 = vpack.c.bf16 %v3572, %v3571
      %v3604 = vpack.c.bf16 %v3574, %v3573
      %v3605 = vpack.c.bf16 %v3576, %v3575
      %v3606 = vpack.c.bf16 %v3578, %v3577
      %v3607 = vpack.c.bf16 %v3580, %v3579
      %v3608 = vpack.c.bf16 %v3582, %v3581
      %v3609 = vpack.c.bf16 %v3584, %v3583
      %v3610 = vpack.c.bf16 %v3586, %v3585
      %v3611 = vpack.c.bf16 %v3588, %v3587
      %v3612 = vpack.c.bf16 %v3590, %v3589
      %v3613 = vpack.c.bf16 %v3592, %v3591
      %v3614 = vpack.c.bf16 %v3594, %v3593
      %v3615 = vpack.c.bf16 %v3596, %v3595
      %v3616 = vpack.c.bf16 %v3598, %v3597
      %v3617 = vpack.c.bf16 %v3600, %v3599
      %v3618 = vpack.c.bf16 %v3602, %v3601
      %v3619 = vld [vmem:[%s7] sm:$0xf]
      %v3620 = vld [vmem:[%s7 + $0x4] sm:$0xf]
      %v3623 = vunpack.c.l.b16 %v3619
      %v3624 = vunpack.c.l.b16 %v3620
      %v3625 = vpack.c.b16 %v3624, %v3623
      %v3628 = vsel %vm478, %v3603, 0
      %v3631 = vsel %vm478, %v3604, 0
      %v3634 = vsel %vm478, %v3605, 0
      %v3637 = vsel %vm478, %v3606, 0
      %v3640 = vsel %vm478, %v3607, 0
      %v3643 = vsel %vm478, %v3608, 0
      %v3646 = vsel %vm478, %v3609, 0
      %v3649 = vsel %vm478, %v3610, 0
      %v3652 = vsel %vm478, %v3611, 0
      %v3655 = vsel %vm478, %v3612, 0
      %v3658 = vsel %vm478, %v3613, 0
      %v3661 = vsel %vm478, %v3614, 0
      %v3664 = vsel %vm478, %v3615, 0
      %v3667 = vsel %vm478, %v3616, 0
      %v3670 = vsel %vm478, %v3617, 0
      %v3673 = vsel %vm478, %v3618, 0
      %3675 = vmatprep.subr.bf16.mxu0 0
      %3676 = vmatpush1.bf16.msra.mxu0 0
      %3677 = vmatprep.subr.bf16.mxu0 0
      %3678 = vmatpush1.bf16.msra.mxu0 0
      %3679 = vmatprep.subr.bf16.mxu0 0
      %3680 = vmatpush1.bf16.msra.mxu0 0
      %3681 = vmatprep.subr.bf16.mxu0 0
      %3682 = vmatpush1.bf16.msra.mxu0 0
      %3683 = vmatprep.subr.bf16.mxu0 0
      %3684 = vmatpush1.bf16.msra.mxu0 0
      %3685 = vmatprep.subr.bf16.mxu0 0
      %3686 = vmatpush1.bf16.msra.mxu0 0
      %3687 = vmatprep.subr.bf16.mxu0 0
      %3688 = vmatpush1.bf16.msra.mxu0 0
      %3689 = vmatprep.subr.bf16.mxu0 0
      %3690 = vmatpush1.bf16.msra.mxu0 %v3625
      %3691 = vmatprep.subr.bf16.mxu0 0
      %3692 = vmatpush2.bf16.msra.mxu0 0
      %3693 = vmatprep.subr.bf16.mxu0 0
      %3694 = vmatpush2.bf16.msra.mxu0 0
      %3695 = vmatprep.subr.bf16.mxu0 0
      %3696 = vmatpush2.bf16.msra.mxu0 0
      %3697 = vmatprep.subr.bf16.mxu0 0
      %3698 = vmatpush2.bf16.msra.mxu0 0
      %3699 = vmatprep.subr.bf16.mxu0 0
      %3700 = vmatpush2.bf16.msra.mxu0 0
      %3701 = vmatprep.subr.bf16.mxu0 0
      %3702 = vmatpush2.bf16.msra.mxu0 0
      %3703 = vmatprep.subr.bf16.mxu0 0
      %3704 = vmatpush2.bf16.msra.mxu0 0
      %3705 = vmatprep.subr.bf16.mxu0 0
      %3706 = vmatpush2.bf16.msra.mxu0 0
      %3707 = vmatprep.mubr.bf16.mxu0 0
      %3708 = vmatmul.mubr.bf16.gmra.mxu0 %v3628
      %v3709 = vpop.f32.mrf.mxu0
      %v3710 = vadd.f32 0.0, %v3709
      %v3711 = vpop.f32.mrf.mxu0
      %v3712 = vpop.f32.mrf.mxu0
      %v3713 = vadd.f32 0.0, %v3712
      %v3714 = vpop.f32.mrf.mxu0
      %3715 = vmatprep.mubr.bf16.mxu0 0
      %3716 = vmatmul.mubr.bf16.gmra.mxu0 %v3631
      %v3717 = vpop.f32.mrf.mxu0
      %v3718 = vadd.f32 0.0, %v3717
      %v3719 = vpop.f32.mrf.mxu0
      %v3720 = vpop.f32.mrf.mxu0
      %v3721 = vadd.f32 0.0, %v3720
      %v3722 = vpop.f32.mrf.mxu0
      %3723 = vmatprep.mubr.bf16.mxu0 0
      %3724 = vmatmul.mubr.bf16.gmra.mxu0 %v3634
      %v3725 = vpop.f32.mrf.mxu0
      %v3726 = vadd.f32 0.0, %v3725
      %v3727 = vpop.f32.mrf.mxu0
      %v3728 = vpop.f32.mrf.mxu0
      %v3729 = vadd.f32 0.0, %v3728
      %v3730 = vpop.f32.mrf.mxu0
      %3731 = vmatprep.mubr.bf16.mxu0 0
      %3732 = vmatmul.mubr.bf16.gmra.mxu0 %v3637
      %v3733 = vpop.f32.mrf.mxu0
      %v3734 = vadd.f32 0.0, %v3733
      %v3735 = vpop.f32.mrf.mxu0
      %v3736 = vpop.f32.mrf.mxu0
      %v3737 = vadd.f32 0.0, %v3736
      %v3738 = vpop.f32.mrf.mxu0
      %3739 = vmatprep.mubr.bf16.mxu0 0
      %3740 = vmatmul.mubr.bf16.gmra.mxu0 %v3640
      %v3741 = vpop.f32.mrf.mxu0
      %v3742 = vadd.f32 0.0, %v3741
      %v3743 = vpop.f32.mrf.mxu0
      %v3744 = vpop.f32.mrf.mxu0
      %v3745 = vadd.f32 0.0, %v3744
      %v3746 = vpop.f32.mrf.mxu0
      %3747 = vmatprep.mubr.bf16.mxu0 0
      %3748 = vmatmul.mubr.bf16.gmra.mxu0 %v3643
      %v3749 = vpop.f32.mrf.mxu0
      %v3750 = vadd.f32 0.0, %v3749
      %v3751 = vpop.f32.mrf.mxu0
      %v3752 = vpop.f32.mrf.mxu0
      %v3753 = vadd.f32 0.0, %v3752
      %v3754 = vpop.f32.mrf.mxu0
      %3755 = vmatprep.mubr.bf16.mxu0 0
      %3756 = vmatmul.mubr.bf16.gmra.mxu0 %v3646
      %v3757 = vpop.f32.mrf.mxu0
      %v3758 = vadd.f32 0.0, %v3757
      %v3759 = vpop.f32.mrf.mxu0
      %v3760 = vpop.f32.mrf.mxu0
      %v3761 = vadd.f32 0.0, %v3760
      %v3762 = vpop.f32.mrf.mxu0
      %3763 = vmatprep.mubr.bf16.mxu0 0
      %3764 = vmatmul.mubr.bf16.gmra.mxu0 %v3649
      %v3765 = vpop.f32.mrf.mxu0
      %v3766 = vadd.f32 0.0, %v3765
      %v3767 = vpop.f32.mrf.mxu0
      %v3768 = vpop.f32.mrf.mxu0
      %v3769 = vadd.f32 0.0, %v3768
      %v3770 = vpop.f32.mrf.mxu0
      %3771 = vmatprep.mubr.bf16.mxu0 0
      %3772 = vmatmul.mubr.bf16.gmra.mxu0 %v3652
      %v3773 = vpop.f32.mrf.mxu0
      %v3774 = vadd.f32 0.0, %v3773
      %v3775 = vpop.f32.mrf.mxu0
      %v3776 = vpop.f32.mrf.mxu0
      %v3777 = vadd.f32 0.0, %v3776
      %v3778 = vpop.f32.mrf.mxu0
      %3779 = vmatprep.mubr.bf16.mxu0 0
      %3780 = vmatmul.mubr.bf16.gmra.mxu0 %v3655
      %v3781 = vpop.f32.mrf.mxu0
      %v3782 = vadd.f32 0.0, %v3781
      %v3783 = vpop.f32.mrf.mxu0
      %v3784 = vpop.f32.mrf.mxu0
      %v3785 = vadd.f32 0.0, %v3784
      %v3786 = vpop.f32.mrf.mxu0
      %3787 = vmatprep.mubr.bf16.mxu0 0
      %3788 = vmatmul.mubr.bf16.gmra.mxu0 %v3658
      %v3789 = vpop.f32.mrf.mxu0
      %v3790 = vadd.f32 0.0, %v3789
      %v3791 = vpop.f32.mrf.mxu0
      %v3792 = vpop.f32.mrf.mxu0
      %v3793 = vadd.f32 0.0, %v3792
      %v3794 = vpop.f32.mrf.mxu0
      %3795 = vmatprep.mubr.bf16.mxu0 0
      %3796 = vmatmul.mubr.bf16.gmra.mxu0 %v3661
      %v3797 = vpop.f32.mrf.mxu0
      %v3798 = vadd.f32 0.0, %v3797
      %v3799 = vpop.f32.mrf.mxu0
      %v3800 = vpop.f32.mrf.mxu0
      %v3801 = vadd.f32 0.0, %v3800
      %v3802 = vpop.f32.mrf.mxu0
      %3803 = vmatprep.mubr.bf16.mxu0 0
      %3804 = vmatmul.mubr.bf16.gmra.mxu0 %v3664
      %v3805 = vpop.f32.mrf.mxu0
      %v3806 = vadd.f32 0.0, %v3805
      %v3807 = vpop.f32.mrf.mxu0
      %v3808 = vpop.f32.mrf.mxu0
      %v3809 = vadd.f32 0.0, %v3808
      %v3810 = vpop.f32.mrf.mxu0
      %3811 = vmatprep.mubr.bf16.mxu0 0
      %3812 = vmatmul.mubr.bf16.gmra.mxu0 %v3667
      %v3813 = vpop.f32.mrf.mxu0
      %v3814 = vadd.f32 0.0, %v3813
      %v3815 = vpop.f32.mrf.mxu0
      %v3816 = vpop.f32.mrf.mxu0
      %v3817 = vadd.f32 0.0, %v3816
      %v3818 = vpop.f32.mrf.mxu0
      %3819 = vmatprep.mubr.bf16.mxu0 0
      %3820 = vmatmul.mubr.bf16.gmra.mxu0 %v3670
      %v3821 = vpop.f32.mrf.mxu0
      %v3822 = vadd.f32 0.0, %v3821
      %v3823 = vpop.f32.mrf.mxu0
      %v3824 = vpop.f32.mrf.mxu0
      %v3825 = vadd.f32 0.0, %v3824
      %v3826 = vpop.f32.mrf.mxu0
      %3827 = vmatprep.mubr.bf16.mxu0 0
      %3828 = vmatmul.mubr.bf16.gmra.mxu0 %v3673
      %v3829 = vpop.f32.mrf.mxu0
      %v3830 = vadd.f32 0.0, %v3829
      %v3831 = vpop.f32.mrf.mxu0
      %v3832 = vpop.f32.mrf.mxu0
      %v3833 = vadd.f32 0.0, %v3832
      %v3834 = vpop.f32.mrf.mxu0
      %3835 = vdwg.mxu0
      %v3836 = vld [vmem:[%s8] sm:$0x1]
      %v3838 = vlaneseq
      %v3839 = vshrl.u32 %v3838, 7
      %v3840 = vsub.s32 0, %v3839
      %v3841 = vrot.slane %v3836, %v3840
      %v3843 = vmul.f32 %v3710, %v3841
      %v3844 = vmul.f32 %v3713, %v3841
      %v3845 = vmul.f32 %v3718, %v3841
      %v3846 = vmul.f32 %v3721, %v3841
      %v3847 = vmul.f32 %v3726, %v3841
      %v3848 = vmul.f32 %v3729, %v3841
      %v3849 = vmul.f32 %v3734, %v3841
      %v3850 = vmul.f32 %v3737, %v3841
      %v3851 = vmul.f32 %v3742, %v3841
      %v3852 = vmul.f32 %v3745, %v3841
      %v3853 = vmul.f32 %v3750, %v3841
      %v3854 = vmul.f32 %v3753, %v3841
      %v3855 = vmul.f32 %v3758, %v3841
      %v3856 = vmul.f32 %v3761, %v3841
      %v3857 = vmul.f32 %v3766, %v3841
      %v3858 = vmul.f32 %v3769, %v3841
      %v3859 = vmul.f32 %v3774, %v3841
      %v3860 = vmul.f32 %v3777, %v3841
      %v3861 = vmul.f32 %v3782, %v3841
      %v3862 = vmul.f32 %v3785, %v3841
      %v3863 = vmul.f32 %v3790, %v3841
      %v3864 = vmul.f32 %v3793, %v3841
      %v3865 = vmul.f32 %v3798, %v3841
      %v3866 = vmul.f32 %v3801, %v3841
      %v3867 = vmul.f32 %v3806, %v3841
      %v3868 = vmul.f32 %v3809, %v3841
      %v3869 = vmul.f32 %v3814, %v3841
      %v3870 = vmul.f32 %v3817, %v3841
      %v3871 = vmul.f32 %v3822, %v3841
      %v3872 = vmul.f32 %v3825, %v3841
      %v3873 = vmul.f32 %v3830, %v3841
      %v3874 = vmul.f32 %v3833, %v3841
      %v3875 = vld [vmem:[%s9] sm:$0x1]
      %v3877 = vlaneseq
      %v3878 = vshrl.u32 %v3877, 7
      %v3879 = vsub.s32 0, %v3878
      %v3880 = vrot.slane %v3875, %v3879
      %v3882 = vadd.f32 %v3843, %v3880
      %v3883 = vadd.f32 %v3844, %v3880
      %v3884 = vadd.f32 %v3845, %v3880
      %v3885 = vadd.f32 %v3846, %v3880
      %v3886 = vadd.f32 %v3847, %v3880
      %v3887 = vadd.f32 %v3848, %v3880
      %v3888 = vadd.f32 %v3849, %v3880
      %v3889 = vadd.f32 %v3850, %v3880
      %v3890 = vadd.f32 %v3851, %v3880
      %v3891 = vadd.f32 %v3852, %v3880
      %v3892 = vadd.f32 %v3853, %v3880
      %v3893 = vadd.f32 %v3854, %v3880
      %v3894 = vadd.f32 %v3855, %v3880
      %v3895 = vadd.f32 %v3856, %v3880
      %v3896 = vadd.f32 %v3857, %v3880
      %v3897 = vadd.f32 %v3858, %v3880
      %v3898 = vadd.f32 %v3859, %v3880
      %v3899 = vadd.f32 %v3860, %v3880
      %v3900 = vadd.f32 %v3861, %v3880
      %v3901 = vadd.f32 %v3862, %v3880
      %v3902 = vadd.f32 %v3863, %v3880
      %v3903 = vadd.f32 %v3864, %v3880
      %v3904 = vadd.f32 %v3865, %v3880
      %v3905 = vadd.f32 %v3866, %v3880
      %v3906 = vadd.f32 %v3867, %v3880
      %v3907 = vadd.f32 %v3868, %v3880
      %v3908 = vadd.f32 %v3869, %v3880
      %v3909 = vadd.f32 %v3870, %v3880
      %v3910 = vadd.f32 %v3871, %v3880
      %v3911 = vadd.f32 %v3872, %v3880
      %v3912 = vadd.f32 %v3873, %v3880
      %v3913 = vadd.f32 %v3874, %v3880
      %s3914 = sadd.s32 %s386, 1
      %s3915 = smul.u32 %s3914, 24
      %s3916 = scalar_lea.vmem %s373, %s3915
      %v3917 = vld [vmem:[%s3916] sm:$0xff]
      %v3918 = vld [vmem:[%s3916 + $0x8] sm:$0xff]
      %v3919 = vld [vmem:[%s3916 + $0x10] sm:$0xff]
      %v3920 = vld [vmem:[%s3916 + $0x18] sm:$0xff]
      %v3921 = vld [vmem:[%s3916 + $0x20] sm:$0xff]
      %v3922 = vld [vmem:[%s3916 + $0x28] sm:$0xff]
      %v3923 = vld [vmem:[%s3916 + $0x30] sm:$0xff]
      %v3924 = vld [vmem:[%s3916 + $0x38] sm:$0xff]
      %v3925 = vld [vmem:[%s3916 + $0x40] sm:$0xff]
      %v3926 = vld [vmem:[%s3916 + $0x48] sm:$0xff]
      %v3927 = vld [vmem:[%s3916 + $0x50] sm:$0xff]
      %v3928 = vld [vmem:[%s3916 + $0x58] sm:$0xff]
      %v3929 = vld [vmem:[%s3916 + $0x60] sm:$0xff]
      %v3930 = vld [vmem:[%s3916 + $0x68] sm:$0xff]
      %v3931 = vld [vmem:[%s3916 + $0x70] sm:$0xff]
      %v3932 = vld [vmem:[%s3916 + $0x78] sm:$0xff]
      %v3933 = vld [vmem:[%s3916 + $0x80] sm:$0xff]
      %v3934 = vld [vmem:[%s3916 + $0x88] sm:$0xff]
      %v3935 = vld [vmem:[%s3916 + $0x90] sm:$0xff]
      %v3936 = vld [vmem:[%s3916 + $0x98] sm:$0xff]
      %v3937 = vld [vmem:[%s3916 + $0xa0] sm:$0xff]
      %v3938 = vld [vmem:[%s3916 + $0xa8] sm:$0xff]
      %v3939 = vld [vmem:[%s3916 + $0xb0] sm:$0xff]
      %v3940 = vld [vmem:[%s3916 + $0xb8] sm:$0xff]
      %v3941 = vld [vmem:[%s3916 + $0xc0] sm:$0xff]
      %v3942 = vld [vmem:[%s3916 + $0xc8] sm:$0xff]
      %v3943 = vld [vmem:[%s3916 + $0xd0] sm:$0xff]
      %v3944 = vld [vmem:[%s3916 + $0xd8] sm:$0xff]
      %v3945 = vld [vmem:[%s3916 + $0xe0] sm:$0xff]
      %v3946 = vld [vmem:[%s3916 + $0xe8] sm:$0xff]
      %v3947 = vld [vmem:[%s3916 + $0xf0] sm:$0xff]
      %v3948 = vld [vmem:[%s3916 + $0xf8] sm:$0xff]
      %v3949 = vld [vmem:[%s3916 + $0x100] sm:$0xff]
      %v3950 = vld [vmem:[%s3916 + $0x108] sm:$0xff]
      %v3951 = vld [vmem:[%s3916 + $0x110] sm:$0xff]
      %v3952 = vld [vmem:[%s3916 + $0x118] sm:$0xff]
      %v3953 = vld [vmem:[%s3916 + $0x120] sm:$0xff]
      %v3954 = vld [vmem:[%s3916 + $0x128] sm:$0xff]
      %v3955 = vld [vmem:[%s3916 + $0x130] sm:$0xff]
      %v3956 = vld [vmem:[%s3916 + $0x138] sm:$0xff]
      %v3957 = vld [vmem:[%s3916 + $0x140] sm:$0xff]
      %v3958 = vld [vmem:[%s3916 + $0x148] sm:$0xff]
      %v3959 = vld [vmem:[%s3916 + $0x150] sm:$0xff]
      %v3960 = vld [vmem:[%s3916 + $0x158] sm:$0xff]
      %v3961 = vld [vmem:[%s3916 + $0x160] sm:$0xff]
      %v3962 = vld [vmem:[%s3916 + $0x168] sm:$0xff]
      %v3963 = vld [vmem:[%s3916 + $0x170] sm:$0xff]
      %v3964 = vld [vmem:[%s3916 + $0x178] sm:$0xff]
      %v4013 = vrot.slane %v3917, 1
      %v4014 = vrot.slane %v3918, 1
      %v4015 = vsel %vm1799, %v4013, %v4014
      %v4016 = vrot.slane %v3919, 1
      %v4017 = vsel %vm1799, %v4014, %v4016
      %v4018 = vrot.slane %v3920, 1
      %v4019 = vrot.slane %v3921, 1
      %v4020 = vsel %vm1799, %v4018, %v4019
      %v4021 = vrot.slane %v3922, 1
      %v4022 = vsel %vm1799, %v4019, %v4021
      %v4023 = vrot.slane %v3923, 1
      %v4024 = vrot.slane %v3924, 1
      %v4025 = vsel %vm1799, %v4023, %v4024
      %v4026 = vrot.slane %v3925, 1
      %v4027 = vsel %vm1799, %v4024, %v4026
      %v4028 = vrot.slane %v3926, 1
      %v4029 = vrot.slane %v3927, 1
      %v4030 = vsel %vm1799, %v4028, %v4029
      %v4031 = vrot.slane %v3928, 1
      %v4032 = vsel %vm1799, %v4029, %v4031
      %v4033 = vrot.slane %v3929, 1
      %v4034 = vrot.slane %v3930, 1
      %v4035 = vsel %vm1799, %v4033, %v4034
      %v4036 = vrot.slane %v3931, 1
      %v4037 = vsel %vm1799, %v4034, %v4036
      %v4038 = vrot.slane %v3932, 1
      %v4039 = vrot.slane %v3933, 1
      %v4040 = vsel %vm1799, %v4038, %v4039
      %v4041 = vrot.slane %v3934, 1
      %v4042 = vsel %vm1799, %v4039, %v4041
      %v4043 = vrot.slane %v3935, 1
      %v4044 = vrot.slane %v3936, 1
      %v4045 = vsel %vm1799, %v4043, %v4044
      %v4046 = vrot.slane %v3937, 1
      %v4047 = vsel %vm1799, %v4044, %v4046
      %v4048 = vrot.slane %v3938, 1
      %v4049 = vrot.slane %v3939, 1
      %v4050 = vsel %vm1799, %v4048, %v4049
      %v4051 = vrot.slane %v3940, 1
      %v4052 = vsel %vm1799, %v4049, %v4051
      %v4053 = vrot.slane %v3941, 1
      %v4054 = vrot.slane %v3942, 1
      %v4055 = vsel %vm1799, %v4053, %v4054
      %v4056 = vrot.slane %v3943, 1
      %v4057 = vsel %vm1799, %v4054, %v4056
      %v4058 = vrot.slane %v3944, 1
      %v4059 = vrot.slane %v3945, 1
      %v4060 = vsel %vm1799, %v4058, %v4059
      %v4061 = vrot.slane %v3946, 1
      %v4062 = vsel %vm1799, %v4059, %v4061
      %v4063 = vrot.slane %v3947, 1
      %v4064 = vrot.slane %v3948, 1
      %v4065 = vsel %vm1799, %v4063, %v4064
      %v4066 = vrot.slane %v3949, 1
      %v4067 = vsel %vm1799, %v4064, %v4066
      %v4068 = vrot.slane %v3950, 1
      %v4069 = vrot.slane %v3951, 1
      %v4070 = vsel %vm1799, %v4068, %v4069
      %v4071 = vrot.slane %v3952, 1
      %v4072 = vsel %vm1799, %v4069, %v4071
      %v4073 = vrot.slane %v3953, 1
      %v4074 = vrot.slane %v3954, 1
      %v4075 = vsel %vm1799, %v4073, %v4074
      %v4076 = vrot.slane %v3955, 1
      %v4077 = vsel %vm1799, %v4074, %v4076
      %v4078 = vrot.slane %v3956, 1
      %v4079 = vrot.slane %v3957, 1
      %v4080 = vsel %vm1799, %v4078, %v4079
      %v4081 = vrot.slane %v3958, 1
      %v4082 = vsel %vm1799, %v4079, %v4081
      %v4083 = vrot.slane %v3959, 1
      %v4084 = vrot.slane %v3960, 1
      %v4085 = vsel %vm1799, %v4083, %v4084
      %v4086 = vrot.slane %v3961, 1
      %v4087 = vsel %vm1799, %v4084, %v4086
      %v4088 = vrot.slane %v3962, 1
      %v4089 = vrot.slane %v3963, 1
      %v4090 = vsel %vm1799, %v4088, %v4089
      %v4091 = vrot.slane %v3964, 1
      %v4092 = vsel %vm1799, %v4089, %v4091
      %v4125 = vadd.f32 %v3882, %v4015
      %v4126 = vadd.f32 %v3883, %v4017
      %v4127 = vadd.f32 %v3884, %v4020
      %v4128 = vadd.f32 %v3885, %v4022
      %v4129 = vadd.f32 %v3886, %v4025
      %v4130 = vadd.f32 %v3887, %v4027
      %v4131 = vadd.f32 %v3888, %v4030
      %v4132 = vadd.f32 %v3889, %v4032
      %v4133 = vadd.f32 %v3890, %v4035
      %v4134 = vadd.f32 %v3891, %v4037
      %v4135 = vadd.f32 %v3892, %v4040
      %v4136 = vadd.f32 %v3893, %v4042
      %v4137 = vadd.f32 %v3894, %v4045
      %v4138 = vadd.f32 %v3895, %v4047
      %v4139 = vadd.f32 %v3896, %v4050
      %v4140 = vadd.f32 %v3897, %v4052
      %v4141 = vadd.f32 %v3898, %v4055
      %v4142 = vadd.f32 %v3899, %v4057
      %v4143 = vadd.f32 %v3900, %v4060
      %v4144 = vadd.f32 %v3901, %v4062
      %v4145 = vadd.f32 %v3902, %v4065
      %v4146 = vadd.f32 %v3903, %v4067
      %v4147 = vadd.f32 %v3904, %v4070
      %v4148 = vadd.f32 %v3905, %v4072
      %v4149 = vadd.f32 %v3906, %v4075
      %v4150 = vadd.f32 %v3907, %v4077
      %v4151 = vadd.f32 %v3908, %v4080
      %v4152 = vadd.f32 %v3909, %v4082
      %v4153 = vadd.f32 %v3910, %v4085
      %v4154 = vadd.f32 %v3911, %v4087
      %v4155 = vadd.f32 %v3912, %v4090
      %v4156 = vadd.f32 %v3913, %v4092
      %vm4157 = vcmask 31744
      %4158 = vst.msk [vmem:[%s383] sm:$0xff] %vm4157, %v4125
      %4159 = vst.msk [vmem:[%s383 + $0x8] sm:$0xff] %vm4157, %v4126
      %4160 = vst.msk [vmem:[%s383 + $0x10] sm:$0xff] %vm4157, %v4127
      %4161 = vst.msk [vmem:[%s383 + $0x18] sm:$0xff] %vm4157, %v4128
      %4162 = vst.msk [vmem:[%s383 + $0x20] sm:$0xff] %vm4157, %v4129
      %4163 = vst.msk [vmem:[%s383 + $0x28] sm:$0xff] %vm4157, %v4130
      %4164 = vst.msk [vmem:[%s383 + $0x30] sm:$0xff] %vm4157, %v4131
      %4165 = vst.msk [vmem:[%s383 + $0x38] sm:$0xff] %vm4157, %v4132
      %4166 = vst.msk [vmem:[%s383 + $0x40] sm:$0xff] %vm4157, %v4133
      %4167 = vst.msk [vmem:[%s383 + $0x48] sm:$0xff] %vm4157, %v4134
      %4168 = vst.msk [vmem:[%s383 + $0x50] sm:$0xff] %vm4157, %v4135
      %4169 = vst.msk [vmem:[%s383 + $0x58] sm:$0xff] %vm4157, %v4136
      %4170 = vst.msk [vmem:[%s383 + $0x60] sm:$0xff] %vm4157, %v4137
      %4171 = vst.msk [vmem:[%s383 + $0x68] sm:$0xff] %vm4157, %v4138
      %4172 = vst.msk [vmem:[%s383 + $0x70] sm:$0xff] %vm4157, %v4139
      %4173 = vst.msk [vmem:[%s383 + $0x78] sm:$0xff] %vm4157, %v4140
      %4174 = vst.msk [vmem:[%s383 + $0x80] sm:$0xff] %vm4157, %v4141
      %4175 = vst.msk [vmem:[%s383 + $0x88] sm:$0xff] %vm4157, %v4142
      %4176 = vst.msk [vmem:[%s383 + $0x90] sm:$0xff] %vm4157, %v4143
      %4177 = vst.msk [vmem:[%s383 + $0x98] sm:$0xff] %vm4157, %v4144
      %4178 = vst.msk [vmem:[%s383 + $0xa0] sm:$0xff] %vm4157, %v4145
      %4179 = vst.msk [vmem:[%s383 + $0xa8] sm:$0xff] %vm4157, %v4146
      %4180 = vst.msk [vmem:[%s383 + $0xb0] sm:$0xff] %vm4157, %v4147
      %4181 = vst.msk [vmem:[%s383 + $0xb8] sm:$0xff] %vm4157, %v4148
      %4182 = vst.msk [vmem:[%s383 + $0xc0] sm:$0xff] %vm4157, %v4149
      %4183 = vst.msk [vmem:[%s383 + $0xc8] sm:$0xff] %vm4157, %v4150
      %4184 = vst.msk [vmem:[%s383 + $0xd0] sm:$0xff] %vm4157, %v4151
      %4185 = vst.msk [vmem:[%s383 + $0xd8] sm:$0xff] %vm4157, %v4152
      %4186 = vst.msk [vmem:[%s383 + $0xe0] sm:$0xff] %vm4157, %v4153
      %4187 = vst.msk [vmem:[%s383 + $0xe8] sm:$0xff] %vm4157, %v4154
      %4188 = vst.msk [vmem:[%s383 + $0xf0] sm:$0xff] %vm4157, %v4155
      %4189 = vst.msk [vmem:[%s383 + $0xf8] sm:$0xff] %vm4157, %v4156
      %s4190 = smul.u32 16, %s26
      %p4191 = scmp.lt.s32.totalorder %s25, 1
      %s4192 = scalar_select %p4191, %s25, 1
      %p4193 = scmp.lt.s32.totalorder %s4190, 15
      %s4194 = scalar_select %p4193, %s4190, 15
      %s4195 = smul.addr %s4194, 2
      %s4196 = smul.addr %s4192, 32
      %s4197 = sadd.s32 %s4195, %s4196
      %s4198 = smul.addr %s4197, 8
      %s4199 = scalar_lea.vmem %s10, %s4198
      // Predicated region
      $region61: #{mv2_block.1} parent=59 // pred_check
        %p4200 = pneg %p268
      $region62: #{mv2_block.1} parent=59 // pred_check_branch
        %4202 = sbr.rel (%p4200) target = $region64
      $region63: #{mv2_block.1} parent=59 // pred_region
        %s4203 = smul.u32 16, %s26
      $region64: #{mv2_block.1} parent=59 // pred_fallthru
        _
    $region60: #{mv2_block.1} parent=5 // pred_fallthru
      _
    %p4204 = scmp.le.s32.totalorder 2, %s16
    // Predicated region
    $region65: #{mv2_block.1} parent=5 // pred_check
      %p4205 = pneg %p4204
    $region66: #{mv2_block.1} parent=5 // pred_check_branch
      %4207 = sbr.rel (%p4205) target = $region68
    $region67: #{mv2_block.1} parent=5 // pred_region
      %s4208 = ssub.s32 %s16, 2
      // Predicated region
      $region69: #{mv2_block.1} parent=67 // pred_check
        %p4209 = pneg %p274
      $region70: #{mv2_block.1} parent=67 // pred_check_branch
        %4211 = sbr.rel (%p4209) target = $region72
      $region71: #{mv2_block.1} parent=67 // pred_region
        %s4212 = smul.u32 16, %s28
        %p4213 = scmp.lt.s32.totalorder %s27, 1
        %s4214 = scalar_select %p4213, %s27, 1
        %p4215 = scmp.lt.s32.totalorder %s4212, 15
        %s4216 = scalar_select %p4215, %s4212, 15
        %s4217 = smul.addr %s4216, 2
        %s4218 = smul.addr %s4214, 32
        %s4219 = sadd.s32 %s4217, %s4218
        %s4220 = smul.addr %s4219, 8
        %s4221 = scalar_lea.vmem %s10, %s4220
      $region72: #{mv2_block.1} parent=67 // pred_fallthru
        _
    $region68: #{mv2_block.1} parent=5 // pred_fallthru
      _
  $region6: #{mv2_block.1} parent=0 // loop_footer
    %s20 = sadd.s32 1, %s16
  $region7: #{mv2_block.1} parent=0 // loop_footer_branch
    %15 = sbr.rel target = $region3
  $region8: #{mv2_block.1} parent=0 // loop_exit
    _

</llo_original>
